<compile_context>
chip_gen: v5e
topology: v5e:2x2
jax: 0.10.0
libtpu: 0.0.40
codegen_flags: <defaults>
</compile_context>

<pallas_src>
import jax
import jax.numpy as jnp
from jax import lax
from jax.experimental import pallas as pl
from jax.experimental.pallas import tpu as pltpu

EPS = 1e-5  # PyTorch InstanceNorm2d default eps (affine=False, no running stats)


def _build_shift(shift_ref, img, H, W, C):
    """Write the 3 column-shifts of ReflectionPad2d(1)(img) into shift_ref.

    shift_ref: (H+2, W, 3C) VMEM scratch.  For padded row r and output col x:
      lanes [0 :  C) = padded[r, x+0]   (dw=0, left tap)
      lanes [C : 2C) = padded[r, x+1]   (dw=1, center tap)
      lanes [2C: 3C) = padded[r, x+2]   (dw=2, right tap)
    so the 3x3 conv becomes 3 matmuls of (H*W, 3C) @ (3C, C), one per dh.
    All boundary values are sourced from `img` (no RAW dependency on scratch).
    """
    def write_rows(rs, re, rows):
        # rows: (re-rs, W, C) slab of the (un-padded) image.
        shift_ref[rs:re, :, C:2 * C] = rows                               # center
        shift_ref[rs:re, 1:W, 0:C] = rows[:, 0:W - 1, :]                  # left
        shift_ref[rs:re, 0:1, 0:C] = rows[:, 1:2, :]                      #   col 0 reflects col 1
        shift_ref[rs:re, 0:W - 1, 2 * C:3 * C] = rows[:, 1:W, :]          # right
        shift_ref[rs:re, W - 1:W, 2 * C:3 * C] = rows[:, W - 2:W - 1, :]  #   col W-1 reflects W-2

    write_rows(1, H + 1, img)                      # interior rows
    write_rows(0, 1, img[1:2])                     # top reflected row    <- img row 1
    write_rows(H + 1, H + 2, img[H - 2:H - 1])     # bottom reflected row <- img row H-2


def _conv3x3(shift_ref, w_ref, H, W, C):
    """3 row-offset MXU matmuls against the shift scratch.

    w_ref: (3, 3C, Cout) Ref (pre-reshaped HWIO weights), sliced per tap so no
    full weight value stays live.  Returns (H*W, Cout) float32.
    No bias: InstanceNorm(affine=False) cancels it exactly.
    """
    def tap(dh):
        # leading-dim slice (free) + layout-preserving fold (requires W % 8 == 0)
        patch = shift_ref[dh:dh + H].reshape(H * W, 3 * C)
        return jnp.dot(patch, w_ref[dh], preferred_element_type=jnp.float32)

    return tap(0) + tap(1) + tap(2)


def _instance_norm(y, inv_hw):
    """One-pass instance norm over the flat spatial axis.  y: (H*W, C) f32.

    Bias-free conv keeps the per-channel mean small, so E[x^2]-mean^2
    cancellation is benign; the clamp guards against tiny negatives.
    """
    s = jnp.sum(y, axis=0, keepdims=True)            # (1, C)
    ss = jnp.sum(y * y, axis=0, keepdims=True)       # (1, C)
    mean = s * inv_hw
    var = jnp.maximum(ss * inv_hw - mean * mean, 0.0)
    return (y - mean) * lax.rsqrt(var + EPS)


def resblock_kernel(x_ref, w1_ref, w2_ref, o_ref, shift_ref):
    H, W, C = x_ref.shape[1], x_ref.shape[2], x_ref.shape[3]
    cdt = shift_ref.dtype                            # MXU compute dtype
    inv_hw = 1.0 / float(H * W)

    # ---- stage 1: reflect-pad -> conv3x3 -> instance norm -> relu ----
    _build_shift(shift_ref, x_ref[0].astype(cdt), H, W, C)
    y = _conv3x3(shift_ref, w1_ref, H, W, C)         # (H*W, C) f32
    y = jnp.maximum(_instance_norm(y, inv_hw), 0.0)

    # ---- stage 2: reflect-pad -> conv3x3 -> instance norm ----
    _build_shift(shift_ref, y.reshape(H, W, C).astype(cdt), H, W, C)   # reuse scratch
    y = _conv3x3(shift_ref, w2_ref, H, W, C)
    y = _instance_norm(y, inv_hw)

    # residual add + store
    o_ref[0] = (y.reshape(H, W, C)
                + x_ref[0].astype(jnp.float32)).astype(o_ref.dtype)


def _vmem_limit_bytes():
    """~3/4 of physical VMEM: ~48 MiB on v7x (64 MiB), ~96 MiB on v5e/v6e (128 MiB)."""
    cap = 64 * 1024 * 1024
    try:
        cap = int(getattr(pltpu.get_tpu_info(), "vmem_capacity_bytes", cap) or cap)
    except Exception:
        pass
    return int(min(cap * 3 // 4, 112 * 1024 * 1024))


def resblock_pallas_nhwc(x, w1_hwio, b1, w2_hwio, b2, *, compute_dtype=None):
    """Recommended entry point (NHWC end-to-end, no HBM transposes here).

    x: (N, H, W, C); w*_hwio: (3, 3, Cin, Cout); b*: accepted for API parity
    but unused -- InstanceNorm2d(affine=False) cancels a conv bias exactly.
    Pass bf16 x / weights (or compute_dtype=jnp.bfloat16) to run the MXU in
    bf16; instance-norm math is always f32.
    """
    del b1, b2
    N, H, W, C = x.shape
    assert H >= 2 and W >= 2, "ReflectionPad2d(1) needs H, W >= 2"
    assert W % 8 == 0, "W must be a multiple of 8 (sublane tile) for the fused layout"

    if compute_dtype is None:
        compute_dtype = jnp.bfloat16 if x.dtype == jnp.bfloat16 else jnp.float32
    compute_dtype = jnp.dtype(compute_dtype)

    # Lane-dense channel padding (unmasked stores, sane MXU fill at small C).
    # Zero-padded channels stay exactly zero through conv, norm and residual.
    Cp = ((C + 127) // 128) * 128

    def pad_c(a, axes):
        if Cp == C:
            return a
        pads = [(0, 0)] * a.ndim
        for ax in axes:
            pads[ax] = (0, Cp - C)
        return jnp.pad(a, pads)

    xp = pad_c(x, (3,)).astype(compute_dtype)
    # (3,3,Cp,Cp) -> (3, 3*Cp, Cp): dw stacked onto input channels, matching
    # the lane-concatenation order of the shift scratch.
    w1r = pad_c(w1_hwio, (2, 3)).reshape(3, 3 * Cp, Cp).astype(compute_dtype)
    w2r = pad_c(w2_hwio, (2, 3)).reshape(3, 3 * Cp, Cp).astype(compute_dtype)

    cbytes = compute_dtype.itemsize
    flops = N * 2 * 2 * (H * W) * (9 * Cp * Cp)                # two 3x3 convs
    bytes_accessed = (N * H * W * Cp * (cbytes + x.dtype.itemsize)
                      + 2 * 9 * Cp * Cp * cbytes)

    out = pl.pallas_call(
        resblock_kernel,
        out_shape=jax.ShapeDtypeStruct((N, H, W, Cp), x.dtype),
        grid_spec=pltpu.PrefetchScalarGridSpec(
            num_scalar_prefetch=0,
            grid=(N,),
            in_specs=[
                pl.BlockSpec((1, H, W, Cp), lambda n: (n, 0, 0, 0)),
                # constant index_maps: weights are DMA'd once and stay
                # VMEM-resident across the whole grid.
                pl.BlockSpec((3, 3 * Cp, Cp), lambda n: (0, 0, 0)),
                pl.BlockSpec((3, 3 * Cp, Cp), lambda n: (0, 0, 0)),
            ],
            out_specs=pl.BlockSpec((1, H, W, Cp), lambda n: (n, 0, 0, 0)),
            scratch_shapes=[pltpu.VMEM((H + 2, W, 3 * Cp), compute_dtype)],
        ),
        compiler_params=pltpu.CompilerParams(
            dimension_semantics=("parallel",),
            vmem_limit_bytes=_vmem_limit_bytes(),
        ),
        cost_estimate=pl.CostEstimate(
            flops=flops, transcendentals=2 * N * Cp,
            bytes_accessed=bytes_accessed),
    )(xp, w1r, w2r)

    return out if Cp == C else out[..., :C]


def resblock_pallas_nchw(x_nchw, w1_oihw, b1, w2_oihw, b2, **kw):
    """PyTorch-layout convenience wrapper (pays two HBM transposes)."""
    x_nhwc = jnp.transpose(x_nchw, (0, 2, 3, 1))
    w1 = jnp.transpose(w1_oihw, (2, 3, 1, 0))        # OIHW -> HWIO
    w2 = jnp.transpose(w2_oihw, (2, 3, 1, 0))
    out = resblock_pallas_nhwc(x_nhwc, w1, b1, w2, b2, **kw)
    return jnp.transpose(out, (0, 3, 1, 2))


def resblock_ref(x, w1, b1, w2, b2):
    """Pure-JAX reference mirroring the PyTorch module (NCHW)."""
    def pad(z):
        return jnp.pad(z, ((0, 0), (0, 0), (1, 1), (1, 1)), mode="reflect")

    def conv(z, w, b):
        y = lax.conv_general_dilated(z, w, (1, 1), "VALID",
                                     dimension_numbers=("NCHW", "OIHW", "NCHW"))
        return y + b[None, :, None, None]

    def inorm(z):
        m = z.mean(axis=(2, 3), keepdims=True)
        v = ((z - m) ** 2).mean(axis=(2, 3), keepdims=True)
        return (z - m) / jnp.sqrt(v + EPS)

    y = inorm(conv(pad(x), w1, b1))
    y = jnp.maximum(y, 0.0)
    y = inorm(conv(pad(y), w2, b2))
    return y + x


if __name__ == "__main__":
    N, C, H, W = 2, 4, 16, 16
    key = jax.random.PRNGKey(0)
    kx, kw1, kb1, kw2, kb2 = jax.random.split(key, 5)

    # PyTorch-convention tensors (NCHW / OIHW), deterministic init.
    x = jax.random.normal(kx, (N, C, H, W), dtype=jnp.float32)
    w1 = jax.random.normal(kw1, (C, C, 3, 3), dtype=jnp.float32) * 0.1
    b1 = jax.random.normal(kb1, (C,), dtype=jnp.float32) * 0.1
    w2 = jax.random.normal(kw2, (C, C, 3, 3), dtype=jnp.float32) * 0.1
    b2 = jax.random.normal(kb2, (C,), dtype=jnp.float32) * 0.1

    ref = jax.block_until_ready(resblock_ref(x, w1, b1, w2, b2))

    # Recommended data path: stay in NHWC around the kernel (f32 MXU here).
    x_nhwc = jnp.transpose(x, (0, 2, 3, 1))
    w1_hwio = jnp.transpose(w1, (2, 3, 1, 0))
    w2_hwio = jnp.transpose(w2, (2, 3, 1, 0))
    out_nhwc = jax.block_until_ready(
        resblock_pallas_nhwc(x_nhwc, w1_hwio, b1, w2_hwio, b2))
    out = jnp.transpose(out_nhwc, (0, 3, 1, 2))
    assert out.shape == (N, C, H, W)
    assert jnp.allclose(out, ref, atol=2e-4, rtol=2e-4), "f32 mismatch vs reference"

    # bf16 MXU fast path (half the DMA bytes, ~2x MXU rate); norm stays f32.
    out_bf16 = jax.block_until_ready(
        resblock_pallas_nhwc(x_nhwc.astype(jnp.bfloat16),
                             w1_hwio.astype(jnp.bfloat16), b1,
                             w2_hwio.astype(jnp.bfloat16), b2))
    ref_nhwc = jnp.transpose(ref, (0, 2, 3, 1))
    assert jnp.allclose(out_bf16.astype(jnp.float32), ref_nhwc,
                        atol=1e-1, rtol=1e-1), "bf16 mismatch vs reference"

    print("KERNEL_OK")
</pallas_src>

<mosaic_0001>
module attributes {stable_mosaic.version = 11 : i64} {
  func.func @resblock_kernel(%arg0: i32, %arg1: memref<1x16x16x128xf32, #tpu.memory_space<vmem>>, %arg2: memref<3x384x128xf32, #tpu.memory_space<vmem>>, %arg3: memref<3x384x128xf32, #tpu.memory_space<vmem>>, %arg4: memref<1x16x16x128xf32, #tpu.memory_space<vmem>>, %arg5: memref<18x16x384xf32, #tpu.memory_space<vmem>>) attributes {dimension_semantics = [#tpu.dimension_semantics<parallel>], iteration_bounds = array<i64: 2>, scalar_prefetch = 0 : i64, scratch_operands = 1 : i64, tpu.core_type = #tpu.core_type<tc>, window_params = [{transform_indices = @transform_0, window_bounds = array<i64: 1, 16, 16, 128>}, {pipeline_mode = #tpu.pipeline_mode<synchronous>, transform_indices = @transform_1, window_bounds = array<i64: 3, 384, 128>}, {pipeline_mode = #tpu.pipeline_mode<synchronous>, transform_indices = @transform_2, window_bounds = array<i64: 3, 384, 128>}, {transform_indices = @transform_3, window_bounds = array<i64: 1, 16, 16, 128>}]} {
    %c0 = arith.constant 0 : index
    %c0_0 = arith.constant 0 : index
    %c0_1 = arith.constant 0 : index
    %c0_2 = arith.constant 0 : index
    %0 = vector.load %arg1[%c0, %c0_0, %c0_1, %c0_2] : memref<1x16x16x128xf32, #tpu.memory_space<vmem>>, vector<1x16x16x128xf32>
    %1 = vector.shape_cast %0 : vector<1x16x16x128xf32> to vector<16x16x128xf32>
    %c1 = arith.constant 1 : index
    %c0_3 = arith.constant 0 : index
    %c128 = arith.constant 128 : index
    %2 = vector.load %arg5[%c1, %c0_3, %c128] : memref<18x16x384xf32, #tpu.memory_space<vmem>>, vector<16x16x128xf32>
    tpu.vector_store %arg5[%c1, %c0_3, %c128], %1 {strides = array<i32>} : memref<18x16x384xf32, #tpu.memory_space<vmem>>, vector<16x16x128xf32>,
    %3 = vector.extract_strided_slice %1 {offsets = [0, 0, 0], sizes = [16, 15, 128], strides = [1, 1, 1]} : vector<16x16x128xf32> to vector<16x15x128xf32>
    %c1_4 = arith.constant 1 : index
    %c1_5 = arith.constant 1 : index
    %c0_6 = arith.constant 0 : index
    %4 = vector.load %arg5[%c1_4, %c1_5, %c0_6] : memref<18x16x384xf32, #tpu.memory_space<vmem>>, vector<16x15x128xf32>
    tpu.vector_store %arg5[%c1_4, %c1_5, %c0_6], %3 {strides = array<i32>} : memref<18x16x384xf32, #tpu.memory_space<vmem>>, vector<16x15x128xf32>,
    %5 = vector.extract_strided_slice %1 {offsets = [0, 1, 0], sizes = [16, 1, 128], strides = [1, 1, 1]} : vector<16x16x128xf32> to vector<16x1x128xf32>
    %c1_7 = arith.constant 1 : index
    %c0_8 = arith.constant 0 : index
    %c0_9 = arith.constant 0 : index
    %6 = vector.load %arg5[%c1_7, %c0_8, %c0_9] : memref<18x16x384xf32, #tpu.memory_space<vmem>>, vector<16x1x128xf32>
    tpu.vector_store %arg5[%c1_7, %c0_8, %c0_9], %5 {strides = array<i32>} : memref<18x16x384xf32, #tpu.memory_space<vmem>>, vector<16x1x128xf32>,
    %7 = vector.extract_strided_slice %1 {offsets = [0, 1, 0], sizes = [16, 15, 128], strides = [1, 1, 1]} : vector<16x16x128xf32> to vector<16x15x128xf32>
    %c1_10 = arith.constant 1 : index
    %c0_11 = arith.constant 0 : index
    %c256 = arith.constant 256 : index
    %8 = vector.load %arg5[%c1_10, %c0_11, %c256] : memref<18x16x384xf32, #tpu.memory_space<vmem>>, vector<16x15x128xf32>
    tpu.vector_store %arg5[%c1_10, %c0_11, %c256], %7 {strides = array<i32>} : memref<18x16x384xf32, #tpu.memory_space<vmem>>, vector<16x15x128xf32>,
    %9 = vector.extract_strided_slice %1 {offsets = [0, 14, 0], sizes = [16, 1, 128], strides = [1, 1, 1]} : vector<16x16x128xf32> to vector<16x1x128xf32>
    %c1_12 = arith.constant 1 : index
    %c15 = arith.constant 15 : index
    %c256_13 = arith.constant 256 : index
    %10 = vector.load %arg5[%c1_12, %c15, %c256_13] : memref<18x16x384xf32, #tpu.memory_space<vmem>>, vector<16x1x128xf32>
    tpu.vector_store %arg5[%c1_12, %c15, %c256_13], %9 {strides = array<i32>} : memref<18x16x384xf32, #tpu.memory_space<vmem>>, vector<16x1x128xf32>,
    %11 = vector.extract_strided_slice %1 {offsets = [1, 0, 0], sizes = [1, 16, 128], strides = [1, 1, 1]} : vector<16x16x128xf32> to vector<1x16x128xf32>
    %c0_14 = arith.constant 0 : index
    %c0_15 = arith.constant 0 : index
    %c128_16 = arith.constant 128 : index
    %12 = vector.load %arg5[%c0_14, %c0_15, %c128_16] : memref<18x16x384xf32, #tpu.memory_space<vmem>>, vector<1x16x128xf32>
    tpu.vector_store %arg5[%c0_14, %c0_15, %c128_16], %11 {strides = array<i32>} : memref<18x16x384xf32, #tpu.memory_space<vmem>>, vector<1x16x128xf32>,
    %13 = vector.extract_strided_slice %11 {offsets = [0, 0, 0], sizes = [1, 15, 128], strides = [1, 1, 1]} : vector<1x16x128xf32> to vector<1x15x128xf32>
    %c0_17 = arith.constant 0 : index
    %c1_18 = arith.constant 1 : index
    %c0_19 = arith.constant 0 : index
    %14 = vector.load %arg5[%c0_17, %c1_18, %c0_19] : memref<18x16x384xf32, #tpu.memory_space<vmem>>, vector<1x15x128xf32>
    tpu.vector_store %arg5[%c0_17, %c1_18, %c0_19], %13 {strides = array<i32>} : memref<18x16x384xf32, #tpu.memory_space<vmem>>, vector<1x15x128xf32>,
    %15 = vector.extract_strided_slice %11 {offsets = [0, 1, 0], sizes = [1, 1, 128], strides = [1, 1, 1]} : vector<1x16x128xf32> to vector<1x1x128xf32>
    %c0_20 = arith.constant 0 : index
    %c0_21 = arith.constant 0 : index
    %c0_22 = arith.constant 0 : index
    %16 = vector.load %arg5[%c0_20, %c0_21, %c0_22] : memref<18x16x384xf32, #tpu.memory_space<vmem>>, vector<1x1x128xf32>
    tpu.vector_store %arg5[%c0_20, %c0_21, %c0_22], %15 {strides = array<i32>} : memref<18x16x384xf32, #tpu.memory_space<vmem>>, vector<1x1x128xf32>,
    %17 = vector.extract_strided_slice %11 {offsets = [0, 1, 0], sizes = [1, 15, 128], strides = [1, 1, 1]} : vector<1x16x128xf32> to vector<1x15x128xf32>
    %c0_23 = arith.constant 0 : index
    %c0_24 = arith.constant 0 : index
    %c256_25 = arith.constant 256 : index
    %18 = vector.load %arg5[%c0_23, %c0_24, %c256_25] : memref<18x16x384xf32, #tpu.memory_space<vmem>>, vector<1x15x128xf32>
    tpu.vector_store %arg5[%c0_23, %c0_24, %c256_25], %17 {strides = array<i32>} : memref<18x16x384xf32, #tpu.memory_space<vmem>>, vector<1x15x128xf32>,
    %19 = vector.extract_strided_slice %11 {offsets = [0, 14, 0], sizes = [1, 1, 128], strides = [1, 1, 1]} : vector<1x16x128xf32> to vector<1x1x128xf32>
    %c0_26 = arith.constant 0 : index
    %c15_27 = arith.constant 15 : index
    %c256_28 = arith.constant 256 : index
    %20 = vector.load %arg5[%c0_26, %c15_27, %c256_28] : memref<18x16x384xf32, #tpu.memory_space<vmem>>, vector<1x1x128xf32>
    tpu.vector_store %arg5[%c0_26, %c15_27, %c256_28], %19 {strides = array<i32>} : memref<18x16x384xf32, #tpu.memory_space<vmem>>, vector<1x1x128xf32>,
    %21 = vector.extract_strided_slice %1 {offsets = [14, 0, 0], sizes = [1, 16, 128], strides = [1, 1, 1]} : vector<16x16x128xf32> to vector<1x16x128xf32>
    %c17 = arith.constant 17 : index
    %c0_29 = arith.constant 0 : index
    %c128_30 = arith.constant 128 : index
    %22 = vector.load %arg5[%c17, %c0_29, %c128_30] : memref<18x16x384xf32, #tpu.memory_space<vmem>>, vector<1x16x128xf32>
    tpu.vector_store %arg5[%c17, %c0_29, %c128_30], %21 {strides = array<i32>} : memref<18x16x384xf32, #tpu.memory_space<vmem>>, vector<1x16x128xf32>,
    %23 = vector.extract_strided_slice %21 {offsets = [0, 0, 0], sizes = [1, 15, 128], strides = [1, 1, 1]} : vector<1x16x128xf32> to vector<1x15x128xf32>
    %c17_31 = arith.constant 17 : index
    %c1_32 = arith.constant 1 : index
    %c0_33 = arith.constant 0 : index
    %24 = vector.load %arg5[%c17_31, %c1_32, %c0_33] : memref<18x16x384xf32, #tpu.memory_space<vmem>>, vector<1x15x128xf32>
    tpu.vector_store %arg5[%c17_31, %c1_32, %c0_33], %23 {strides = array<i32>} : memref<18x16x384xf32, #tpu.memory_space<vmem>>, vector<1x15x128xf32>,
    %25 = vector.extract_strided_slice %21 {offsets = [0, 1, 0], sizes = [1, 1, 128], strides = [1, 1, 1]} : vector<1x16x128xf32> to vector<1x1x128xf32>
    %c17_34 = arith.constant 17 : index
    %c0_35 = arith.constant 0 : index
    %c0_36 = arith.constant 0 : index
    %26 = vector.load %arg5[%c17_34, %c0_35, %c0_36] : memref<18x16x384xf32, #tpu.memory_space<vmem>>, vector<1x1x128xf32>
    tpu.vector_store %arg5[%c17_34, %c0_35, %c0_36], %25 {strides = array<i32>} : memref<18x16x384xf32, #tpu.memory_space<vmem>>, vector<1x1x128xf32>,
    %27 = vector.extract_strided_slice %21 {offsets = [0, 1, 0], sizes = [1, 15, 128], strides = [1, 1, 1]} : vector<1x16x128xf32> to vector<1x15x128xf32>
    %c17_37 = arith.constant 17 : index
    %c0_38 = arith.constant 0 : index
    %c256_39 = arith.constant 256 : index
    %28 = vector.load %arg5[%c17_37, %c0_38, %c256_39] : memref<18x16x384xf32, #tpu.memory_space<vmem>>, vector<1x15x128xf32>
    tpu.vector_store %arg5[%c17_37, %c0_38, %c256_39], %27 {strides = array<i32>} : memref<18x16x384xf32, #tpu.memory_space<vmem>>, vector<1x15x128xf32>,
    %29 = vector.extract_strided_slice %21 {offsets = [0, 14, 0], sizes = [1, 1, 128], strides = [1, 1, 1]} : vector<1x16x128xf32> to vector<1x1x128xf32>
    %c17_40 = arith.constant 17 : index
    %c15_41 = arith.constant 15 : index
    %c256_42 = arith.constant 256 : index
    %30 = vector.load %arg5[%c17_40, %c15_41, %c256_42] : memref<18x16x384xf32, #tpu.memory_space<vmem>>, vector<1x1x128xf32>
    tpu.vector_store %arg5[%c17_40, %c15_41, %c256_42], %29 {strides = array<i32>} : memref<18x16x384xf32, #tpu.memory_space<vmem>>, vector<1x1x128xf32>,
    %c0_43 = arith.constant 0 : index
    %c0_44 = arith.constant 0 : index
    %c0_45 = arith.constant 0 : index
    %31 = vector.load %arg5[%c0_43, %c0_44, %c0_45] : memref<18x16x384xf32, #tpu.memory_space<vmem>>, vector<16x16x384xf32>
    %32 = vector.shape_cast %31 : vector<16x16x384xf32> to vector<256x384xf32>
    %c0_46 = arith.constant 0 : index
    %c0_47 = arith.constant 0 : index
    %c0_48 = arith.constant 0 : index
    %33 = vector.load %arg2[%c0_46, %c0_47, %c0_48] : memref<3x384x128xf32, #tpu.memory_space<vmem>>, vector<1x384x128xf32>
    %34 = vector.shape_cast %33 : vector<1x384x128xf32> to vector<384x128xf32>
    %cst = arith.constant dense<0.000000e+00> : vector<256x128xf32>
    %35 = tpu.matmul %32, %34, %cst {dimension_numbers = #tpu.dot_dimension_numbers<[1], [0], [0], [1], [0, 0, 1, 1], [], []>} : vector<256x384xf32>, vector<384x128xf32>, vector<256x128xf32> -> vector<256x128xf32>
    %c1_49 = arith.constant 1 : index
    %c0_50 = arith.constant 0 : index
    %c0_51 = arith.constant 0 : index
    %36 = vector.load %arg5[%c1_49, %c0_50, %c0_51] : memref<18x16x384xf32, #tpu.memory_space<vmem>>, vector<16x16x384xf32>
    %37 = vector.shape_cast %36 : vector<16x16x384xf32> to vector<256x384xf32>
    %c1_52 = arith.constant 1 : index
    %c0_53 = arith.constant 0 : index
    %c0_54 = arith.constant 0 : index
    %38 = vector.load %arg2[%c1_52, %c0_53, %c0_54] : memref<3x384x128xf32, #tpu.memory_space<vmem>>, vector<1x384x128xf32>
    %39 = vector.shape_cast %38 : vector<1x384x128xf32> to vector<384x128xf32>
    %cst_55 = arith.constant dense<0.000000e+00> : vector<256x128xf32>
    %40 = tpu.matmul %37, %39, %cst_55 {dimension_numbers = #tpu.dot_dimension_numbers<[1], [0], [0], [1], [0, 0, 1, 1], [], []>} : vector<256x384xf32>, vector<384x128xf32>, vector<256x128xf32> -> vector<256x128xf32>
    %41 = arith.addf %35, %40 : vector<256x128xf32>
    %c2 = arith.constant 2 : index
    %c0_56 = arith.constant 0 : index
    %c0_57 = arith.constant 0 : index
    %42 = vector.load %arg5[%c2, %c0_56, %c0_57] : memref<18x16x384xf32, #tpu.memory_space<vmem>>, vector<16x16x384xf32>
    %43 = vector.shape_cast %42 : vector<16x16x384xf32> to vector<256x384xf32>
    %c2_58 = arith.constant 2 : index
    %c0_59 = arith.constant 0 : index
    %c0_60 = arith.constant 0 : index
    %44 = vector.load %arg2[%c2_58, %c0_59, %c0_60] : memref<3x384x128xf32, #tpu.memory_space<vmem>>, vector<1x384x128xf32>
    %45 = vector.shape_cast %44 : vector<1x384x128xf32> to vector<384x128xf32>
    %cst_61 = arith.constant dense<0.000000e+00> : vector<256x128xf32>
    %46 = tpu.matmul %43, %45, %cst_61 {dimension_numbers = #tpu.dot_dimension_numbers<[1], [0], [0], [1], [0, 0, 1, 1], [], []>} : vector<256x384xf32>, vector<384x128xf32>, vector<256x128xf32> -> vector<256x128xf32>
    %47 = arith.addf %41, %46 : vector<256x128xf32>
    %cst_62 = arith.constant dense<0.000000e+00> : vector<128xf32>
    %48 = vector.multi_reduction <add>, %47, %cst_62 [0] : vector<256x128xf32> to vector<128xf32>
    %49 = vector.shape_cast %48 : vector<128xf32> to vector<1x128xf32>
    %50 = arith.mulf %47, %47 : vector<256x128xf32>
    %cst_63 = arith.constant dense<0.000000e+00> : vector<128xf32>
    %51 = vector.multi_reduction <add>, %50, %cst_63 [0] : vector<256x128xf32> to vector<128xf32>
    %52 = vector.shape_cast %51 : vector<128xf32> to vector<1x128xf32>
    %cst_64 = arith.constant 3.906250e-03 : f32
    %53 = vector.broadcast %cst_64 : f32 to vector<1x128xf32>
    %54 = arith.mulf %49, %53 : vector<1x128xf32>
    %cst_65 = arith.constant 3.906250e-03 : f32
    %55 = vector.broadcast %cst_65 : f32 to vector<1x128xf32>
    %56 = arith.mulf %52, %55 : vector<1x128xf32>
    %57 = arith.mulf %54, %54 : vector<1x128xf32>
    %58 = arith.subf %56, %57 : vector<1x128xf32>
    %cst_66 = arith.constant 0.000000e+00 : f32
    %59 = vector.broadcast %cst_66 : f32 to vector<1x128xf32>
    %60 = arith.maximumf %58, %59 : vector<1x128xf32>
    %61 = vector.broadcast %54 : vector<1x128xf32> to vector<256x128xf32>
    %62 = arith.subf %47, %61 : vector<256x128xf32>
    %cst_67 = arith.constant 9.99999974E-6 : f32
    %63 = vector.broadcast %cst_67 : f32 to vector<1x128xf32>
    %64 = arith.addf %60, %63 : vector<1x128xf32>
    %65 = math.rsqrt %64 : vector<1x128xf32>
    %66 = vector.broadcast %65 : vector<1x128xf32> to vector<256x128xf32>
    %67 = arith.mulf %62, %66 : vector<256x128xf32>
    %cst_68 = arith.constant 0.000000e+00 : f32
    %68 = vector.broadcast %cst_68 : f32 to vector<256x128xf32>
    %69 = arith.maximumf %67, %68 : vector<256x128xf32>
    %70 = vector.shape_cast %69 : vector<256x128xf32> to vector<16x16x128xf32>
    %c1_69 = arith.constant 1 : index
    %c0_70 = arith.constant 0 : index
    %c128_71 = arith.constant 128 : index
    %71 = vector.load %arg5[%c1_69, %c0_70, %c128_71] : memref<18x16x384xf32, #tpu.memory_space<vmem>>, vector<16x16x128xf32>
    tpu.vector_store %arg5[%c1_69, %c0_70, %c128_71], %70 {strides = array<i32>} : memref<18x16x384xf32, #tpu.memory_space<vmem>>, vector<16x16x128xf32>,
    %72 = vector.extract_strided_slice %70 {offsets = [0, 0, 0], sizes = [16, 15, 128], strides = [1, 1, 1]} : vector<16x16x128xf32> to vector<16x15x128xf32>
    %c1_72 = arith.constant 1 : index
    %c1_73 = arith.constant 1 : index
    %c0_74 = arith.constant 0 : index
    %73 = vector.load %arg5[%c1_72, %c1_73, %c0_74] : memref<18x16x384xf32, #tpu.memory_space<vmem>>, vector<16x15x128xf32>
    tpu.vector_store %arg5[%c1_72, %c1_73, %c0_74], %72 {strides = array<i32>} : memref<18x16x384xf32, #tpu.memory_space<vmem>>, vector<16x15x128xf32>,
    %74 = vector.extract_strided_slice %70 {offsets = [0, 1, 0], sizes = [16, 1, 128], strides = [1, 1, 1]} : vector<16x16x128xf32> to vector<16x1x128xf32>
    %c1_75 = arith.constant 1 : index
    %c0_76 = arith.constant 0 : index
    %c0_77 = arith.constant 0 : index
    %75 = vector.load %arg5[%c1_75, %c0_76, %c0_77] : memref<18x16x384xf32, #tpu.memory_space<vmem>>, vector<16x1x128xf32>
    tpu.vector_store %arg5[%c1_75, %c0_76, %c0_77], %74 {strides = array<i32>} : memref<18x16x384xf32, #tpu.memory_space<vmem>>, vector<16x1x128xf32>,
    %76 = vector.extract_strided_slice %70 {offsets = [0, 1, 0], sizes = [16, 15, 128], strides = [1, 1, 1]} : vector<16x16x128xf32> to vector<16x15x128xf32>
    %c1_78 = arith.constant 1 : index
    %c0_79 = arith.constant 0 : index
    %c256_80 = arith.constant 256 : index
    %77 = vector.load %arg5[%c1_78, %c0_79, %c256_80] : memref<18x16x384xf32, #tpu.memory_space<vmem>>, vector<16x15x128xf32>
    tpu.vector_store %arg5[%c1_78, %c0_79, %c256_80], %76 {strides = array<i32>} : memref<18x16x384xf32, #tpu.memory_space<vmem>>, vector<16x15x128xf32>,
    %78 = vector.extract_strided_slice %70 {offsets = [0, 14, 0], sizes = [16, 1, 128], strides = [1, 1, 1]} : vector<16x16x128xf32> to vector<16x1x128xf32>
    %c1_81 = arith.constant 1 : index
    %c15_82 = arith.constant 15 : index
    %c256_83 = arith.constant 256 : index
    %79 = vector.load %arg5[%c1_81, %c15_82, %c256_83] : memref<18x16x384xf32, #tpu.memory_space<vmem>>, vector<16x1x128xf32>
    tpu.vector_store %arg5[%c1_81, %c15_82, %c256_83], %78 {strides = array<i32>} : memref<18x16x384xf32, #tpu.memory_space<vmem>>, vector<16x1x128xf32>,
    %80 = vector.extract_strided_slice %70 {offsets = [1, 0, 0], sizes = [1, 16, 128], strides = [1, 1, 1]} : vector<16x16x128xf32> to vector<1x16x128xf32>
    %c0_84 = arith.constant 0 : index
    %c0_85 = arith.constant 0 : index
    %c128_86 = arith.constant 128 : index
    %81 = vector.load %arg5[%c0_84, %c0_85, %c128_86] : memref<18x16x384xf32, #tpu.memory_space<vmem>>, vector<1x16x128xf32>
    tpu.vector_store %arg5[%c0_84, %c0_85, %c128_86], %80 {strides = array<i32>} : memref<18x16x384xf32, #tpu.memory_space<vmem>>, vector<1x16x128xf32>,
    %82 = vector.extract_strided_slice %80 {offsets = [0, 0, 0], sizes = [1, 15, 128], strides = [1, 1, 1]} : vector<1x16x128xf32> to vector<1x15x128xf32>
    %c0_87 = arith.constant 0 : index
    %c1_88 = arith.constant 1 : index
    %c0_89 = arith.constant 0 : index
    %83 = vector.load %arg5[%c0_87, %c1_88, %c0_89] : memref<18x16x384xf32, #tpu.memory_space<vmem>>, vector<1x15x128xf32>
    tpu.vector_store %arg5[%c0_87, %c1_88, %c0_89], %82 {strides = array<i32>} : memref<18x16x384xf32, #tpu.memory_space<vmem>>, vector<1x15x128xf32>,
    %84 = vector.extract_strided_slice %80 {offsets = [0, 1, 0], sizes = [1, 1, 128], strides = [1, 1, 1]} : vector<1x16x128xf32> to vector<1x1x128xf32>
    %c0_90 = arith.constant 0 : index
    %c0_91 = arith.constant 0 : index
    %c0_92 = arith.constant 0 : index
    %85 = vector.load %arg5[%c0_90, %c0_91, %c0_92] : memref<18x16x384xf32, #tpu.memory_space<vmem>>, vector<1x1x128xf32>
    tpu.vector_store %arg5[%c0_90, %c0_91, %c0_92], %84 {strides = array<i32>} : memref<18x16x384xf32, #tpu.memory_space<vmem>>, vector<1x1x128xf32>,
    %86 = vector.extract_strided_slice %80 {offsets = [0, 1, 0], sizes = [1, 15, 128], strides = [1, 1, 1]} : vector<1x16x128xf32> to vector<1x15x128xf32>
    %c0_93 = arith.constant 0 : index
    %c0_94 = arith.constant 0 : index
    %c256_95 = arith.constant 256 : index
    %87 = vector.load %arg5[%c0_93, %c0_94, %c256_95] : memref<18x16x384xf32, #tpu.memory_space<vmem>>, vector<1x15x128xf32>
    tpu.vector_store %arg5[%c0_93, %c0_94, %c256_95], %86 {strides = array<i32>} : memref<18x16x384xf32, #tpu.memory_space<vmem>>, vector<1x15x128xf32>,
    %88 = vector.extract_strided_slice %80 {offsets = [0, 14, 0], sizes = [1, 1, 128], strides = [1, 1, 1]} : vector<1x16x128xf32> to vector<1x1x128xf32>
    %c0_96 = arith.constant 0 : index
    %c15_97 = arith.constant 15 : index
    %c256_98 = arith.constant 256 : index
    %89 = vector.load %arg5[%c0_96, %c15_97, %c256_98] : memref<18x16x384xf32, #tpu.memory_space<vmem>>, vector<1x1x128xf32>
    tpu.vector_store %arg5[%c0_96, %c15_97, %c256_98], %88 {strides = array<i32>} : memref<18x16x384xf32, #tpu.memory_space<vmem>>, vector<1x1x128xf32>,
    %90 = vector.extract_strided_slice %70 {offsets = [14, 0, 0], sizes = [1, 16, 128], strides = [1, 1, 1]} : vector<16x16x128xf32> to vector<1x16x128xf32>
    %c17_99 = arith.constant 17 : index
    %c0_100 = arith.constant 0 : index
    %c128_101 = arith.constant 128 : index
    %91 = vector.load %arg5[%c17_99, %c0_100, %c128_101] : memref<18x16x384xf32, #tpu.memory_space<vmem>>, vector<1x16x128xf32>
    tpu.vector_store %arg5[%c17_99, %c0_100, %c128_101], %90 {strides = array<i32>} : memref<18x16x384xf32, #tpu.memory_space<vmem>>, vector<1x16x128xf32>,
    %92 = vector.extract_strided_slice %90 {offsets = [0, 0, 0], sizes = [1, 15, 128], strides = [1, 1, 1]} : vector<1x16x128xf32> to vector<1x15x128xf32>
    %c17_102 = arith.constant 17 : index
    %c1_103 = arith.constant 1 : index
    %c0_104 = arith.constant 0 : index
    %93 = vector.load %arg5[%c17_102, %c1_103, %c0_104] : memref<18x16x384xf32, #tpu.memory_space<vmem>>, vector<1x15x128xf32>
    tpu.vector_store %arg5[%c17_102, %c1_103, %c0_104], %92 {strides = array<i32>} : memref<18x16x384xf32, #tpu.memory_space<vmem>>, vector<1x15x128xf32>,
    %94 = vector.extract_strided_slice %90 {offsets = [0, 1, 0], sizes = [1, 1, 128], strides = [1, 1, 1]} : vector<1x16x128xf32> to vector<1x1x128xf32>
    %c17_105 = arith.constant 17 : index
    %c0_106 = arith.constant 0 : index
    %c0_107 = arith.constant 0 : index
    %95 = vector.load %arg5[%c17_105, %c0_106, %c0_107] : memref<18x16x384xf32, #tpu.memory_space<vmem>>, vector<1x1x128xf32>
    tpu.vector_store %arg5[%c17_105, %c0_106, %c0_107], %94 {strides = array<i32>} : memref<18x16x384xf32, #tpu.memory_space<vmem>>, vector<1x1x128xf32>,
    %96 = vector.extract_strided_slice %90 {offsets = [0, 1, 0], sizes = [1, 15, 128], strides = [1, 1, 1]} : vector<1x16x128xf32> to vector<1x15x128xf32>
    %c17_108 = arith.constant 17 : index
    %c0_109 = arith.constant 0 : index
    %c256_110 = arith.constant 256 : index
    %97 = vector.load %arg5[%c17_108, %c0_109, %c256_110] : memref<18x16x384xf32, #tpu.memory_space<vmem>>, vector<1x15x128xf32>
    tpu.vector_store %arg5[%c17_108, %c0_109, %c256_110], %96 {strides = array<i32>} : memref<18x16x384xf32, #tpu.memory_space<vmem>>, vector<1x15x128xf32>,
    %98 = vector.extract_strided_slice %90 {offsets = [0, 14, 0], sizes = [1, 1, 128], strides = [1, 1, 1]} : vector<1x16x128xf32> to vector<1x1x128xf32>
    %c17_111 = arith.constant 17 : index
    %c15_112 = arith.constant 15 : index
    %c256_113 = arith.constant 256 : index
    %99 = vector.load %arg5[%c17_111, %c15_112, %c256_113] : memref<18x16x384xf32, #tpu.memory_space<vmem>>, vector<1x1x128xf32>
    tpu.vector_store %arg5[%c17_111, %c15_112, %c256_113], %98 {strides = array<i32>} : memref<18x16x384xf32, #tpu.memory_space<vmem>>, vector<1x1x128xf32>,
    %c0_114 = arith.constant 0 : index
    %c0_115 = arith.constant 0 : index
    %c0_116 = arith.constant 0 : index
    %100 = vector.load %arg5[%c0_114, %c0_115, %c0_116] : memref<18x16x384xf32, #tpu.memory_space<vmem>>, vector<16x16x384xf32>
    %101 = vector.shape_cast %100 : vector<16x16x384xf32> to vector<256x384xf32>
    %c0_117 = arith.constant 0 : index
    %c0_118 = arith.constant 0 : index
    %c0_119 = arith.constant 0 : index
    %102 = vector.load %arg3[%c0_117, %c0_118, %c0_119] : memref<3x384x128xf32, #tpu.memory_space<vmem>>, vector<1x384x128xf32>
    %103 = vector.shape_cast %102 : vector<1x384x128xf32> to vector<384x128xf32>
    %cst_120 = arith.constant dense<0.000000e+00> : vector<256x128xf32>
    %104 = tpu.matmul %101, %103, %cst_120 {dimension_numbers = #tpu.dot_dimension_numbers<[1], [0], [0], [1], [0, 0, 1, 1], [], []>} : vector<256x384xf32>, vector<384x128xf32>, vector<256x128xf32> -> vector<256x128xf32>
    %c1_121 = arith.constant 1 : index
    %c0_122 = arith.constant 0 : index
    %c0_123 = arith.constant 0 : index
    %105 = vector.load %arg5[%c1_121, %c0_122, %c0_123] : memref<18x16x384xf32, #tpu.memory_space<vmem>>, vector<16x16x384xf32>
    %106 = vector.shape_cast %105 : vector<16x16x384xf32> to vector<256x384xf32>
    %c1_124 = arith.constant 1 : index
    %c0_125 = arith.constant 0 : index
    %c0_126 = arith.constant 0 : index
    %107 = vector.load %arg3[%c1_124, %c0_125, %c0_126] : memref<3x384x128xf32, #tpu.memory_space<vmem>>, vector<1x384x128xf32>
    %108 = vector.shape_cast %107 : vector<1x384x128xf32> to vector<384x128xf32>
    %cst_127 = arith.constant dense<0.000000e+00> : vector<256x128xf32>
    %109 = tpu.matmul %106, %108, %cst_127 {dimension_numbers = #tpu.dot_dimension_numbers<[1], [0], [0], [1], [0, 0, 1, 1], [], []>} : vector<256x384xf32>, vector<384x128xf32>, vector<256x128xf32> -> vector<256x128xf32>
    %110 = arith.addf %104, %109 : vector<256x128xf32>
    %c2_128 = arith.constant 2 : index
    %c0_129 = arith.constant 0 : index
    %c0_130 = arith.constant 0 : index
    %111 = vector.load %arg5[%c2_128, %c0_129, %c0_130] : memref<18x16x384xf32, #tpu.memory_space<vmem>>, vector<16x16x384xf32>
    %112 = vector.shape_cast %111 : vector<16x16x384xf32> to vector<256x384xf32>
    %c2_131 = arith.constant 2 : index
    %c0_132 = arith.constant 0 : index
    %c0_133 = arith.constant 0 : index
    %113 = vector.load %arg3[%c2_131, %c0_132, %c0_133] : memref<3x384x128xf32, #tpu.memory_space<vmem>>, vector<1x384x128xf32>
    %114 = vector.shape_cast %113 : vector<1x384x128xf32> to vector<384x128xf32>
    %cst_134 = arith.constant dense<0.000000e+00> : vector<256x128xf32>
    %115 = tpu.matmul %112, %114, %cst_134 {dimension_numbers = #tpu.dot_dimension_numbers<[1], [0], [0], [1], [0, 0, 1, 1], [], []>} : vector<256x384xf32>, vector<384x128xf32>, vector<256x128xf32> -> vector<256x128xf32>
    %116 = arith.addf %110, %115 : vector<256x128xf32>
    %cst_135 = arith.constant dense<0.000000e+00> : vector<128xf32>
    %117 = vector.multi_reduction <add>, %116, %cst_135 [0] : vector<256x128xf32> to vector<128xf32>
    %118 = vector.shape_cast %117 : vector<128xf32> to vector<1x128xf32>
    %119 = arith.mulf %116, %116 : vector<256x128xf32>
    %cst_136 = arith.constant dense<0.000000e+00> : vector<128xf32>
    %120 = vector.multi_reduction <add>, %119, %cst_136 [0] : vector<256x128xf32> to vector<128xf32>
    %121 = vector.shape_cast %120 : vector<128xf32> to vector<1x128xf32>
    %cst_137 = arith.constant 3.906250e-03 : f32
    %122 = vector.broadcast %cst_137 : f32 to vector<1x128xf32>
    %123 = arith.mulf %118, %122 : vector<1x128xf32>
    %cst_138 = arith.constant 3.906250e-03 : f32
    %124 = vector.broadcast %cst_138 : f32 to vector<1x128xf32>
    %125 = arith.mulf %121, %124 : vector<1x128xf32>
    %126 = arith.mulf %123, %123 : vector<1x128xf32>
    %127 = arith.subf %125, %126 : vector<1x128xf32>
    %cst_139 = arith.constant 0.000000e+00 : f32
    %128 = vector.broadcast %cst_139 : f32 to vector<1x128xf32>
    %129 = arith.maximumf %127, %128 : vector<1x128xf32>
    %130 = vector.broadcast %123 : vector<1x128xf32> to vector<256x128xf32>
    %131 = arith.subf %116, %130 : vector<256x128xf32>
    %cst_140 = arith.constant 9.99999974E-6 : f32
    %132 = vector.broadcast %cst_140 : f32 to vector<1x128xf32>
    %133 = arith.addf %129, %132 : vector<1x128xf32>
    %134 = math.rsqrt %133 : vector<1x128xf32>
    %135 = vector.broadcast %134 : vector<1x128xf32> to vector<256x128xf32>
    %136 = arith.mulf %131, %135 : vector<256x128xf32>
    %137 = vector.shape_cast %136 : vector<256x128xf32> to vector<16x16x128xf32>
    %c0_141 = arith.constant 0 : index
    %c0_142 = arith.constant 0 : index
    %c0_143 = arith.constant 0 : index
    %c0_144 = arith.constant 0 : index
    %138 = vector.load %arg1[%c0_141, %c0_142, %c0_143, %c0_144] : memref<1x16x16x128xf32, #tpu.memory_space<vmem>>, vector<1x16x16x128xf32>
    %139 = vector.shape_cast %138 : vector<1x16x16x128xf32> to vector<16x16x128xf32>
    %140 = arith.addf %137, %139 : vector<16x16x128xf32>
    %c0_145 = arith.constant 0 : index
    %c0_146 = arith.constant 0 : index
    %c0_147 = arith.constant 0 : index
    %c0_148 = arith.constant 0 : index
    %141 = vector.load %arg4[%c0_145, %c0_146, %c0_147, %c0_148] : memref<1x16x16x128xf32, #tpu.memory_space<vmem>>, vector<1x16x16x128xf32>
    %142 = vector.shape_cast %141 : vector<1x16x16x128xf32> to vector<16x16x128xf32>
    %143 = vector.shape_cast %140 : vector<16x16x128xf32> to vector<1x16x16x128xf32>
    tpu.vector_store %arg4[%c0_145, %c0_146, %c0_147, %c0_148], %143 {strides = array<i32>} : memref<1x16x16x128xf32, #tpu.memory_space<vmem>>, vector<1x16x16x128xf32>,
    return
  }
  func.func @transform_0(%arg0: i32) -> (i32, i32, i32, i32) {
    %c0_i32 = arith.constant 0 : i32
    %c0_i32_0 = arith.constant 0 : i32
    %c0_i32_1 = arith.constant 0 : i32
    %c0_i32_2 = arith.constant 0 : i32
    return %arg0, %c0_i32, %c0_i32_0, %c0_i32_1 : i32, i32, i32, i32
  }
  func.func @transform_1(%arg0: i32) -> (i32, i32, i32) {
    %c0_i32 = arith.constant 0 : i32
    %c0_i32_0 = arith.constant 0 : i32
    %c0_i32_1 = arith.constant 0 : i32
    %c0_i32_2 = arith.constant 0 : i32
    return %c0_i32, %c0_i32_0, %c0_i32_1 : i32, i32, i32
  }
  func.func @transform_2(%arg0: i32) -> (i32, i32, i32) {
    %c0_i32 = arith.constant 0 : i32
    %c0_i32_0 = arith.constant 0 : i32
    %c0_i32_1 = arith.constant 0 : i32
    %c0_i32_2 = arith.constant 0 : i32
    return %c0_i32, %c0_i32_0, %c0_i32_1 : i32, i32, i32
  }
  func.func @transform_3(%arg0: i32) -> (i32, i32, i32, i32) {
    %c0_i32 = arith.constant 0 : i32
    %c0_i32_0 = arith.constant 0 : i32
    %c0_i32_1 = arith.constant 0 : i32
    %c0_i32_2 = arith.constant 0 : i32
    return %arg0, %c0_i32, %c0_i32_0, %c0_i32_1 : i32, i32, i32, i32
  }
}

</mosaic_0001>

<llo_original>
// kernel: tpu_custom_call.1
$region0: #{tpu_custom_call.1}
  #allocation0 [shape = 'u32[]', space=smem, size = 0x4, offset = 0x4, fixed_abs, tag = 'smem constant byte address 0x4 - core index']
  #allocation1 [shape = 'u32[72,128]{1,0:T(1,128)}', space=vmem, size = 0x9000, scoped, tag = 'internal scratch']
  #allocation2 [shape = 'f32[18,16,384]{2,1,0:T(8,128)}', space=vmem, size = 0x6c000, scoped, tag = 'scratch operand']
  %s0 = inlined_call_operand.hbm [shape: f32[2,16,16,128], index: 0, kind: input, shape index: {}]
  %s1 = inlined_call_operand.hbm [shape: f32[3,384,128], index: 1, kind: input, shape index: {}]
  %s2 = inlined_call_operand.hbm [shape: f32[3,384,128], index: 2, kind: input, shape index: {}]
  %s3 = inlined_call_operand.hbm [shape: f32[2,16,16,128], index: 3, kind: output, shape index: {}]
  %s4 = sld [smem:[#allocation0]]
  $region57: #{tpu_custom_call.1} parent=0
    _
  %s6 = ssub.s32 1, %s4
  %s7 = scalar_select 0, %s6, %s4
  $region1: #{tpu_custom_call.1} parent=0
    #allocation3 [shape = 'u8[262144]{0}', space=vmem, size = 0x40000, scoped, tag = 'input window, operand 0']
    #allocation4 [shape = 's32[2]{0}', space=sflag, size = 0x8, scoped, tag = 'scoped memory for tpu_custom_call.1']
    #allocation5 [shape = 's32[2]{0}', space=sflag, size = 0x8, scoped, tag = 'scoped memory for tpu_custom_call.1']
    #allocation6 [shape = 'u8[589824]{0}', space=vmem, size = 0x90000, scoped, tag = 'input window, operand 1, single buffered']
    #allocation7 [shape = 's32[1]{0}', space=sflag, size = 0x4, scoped, tag = 'scoped memory for tpu_custom_call.1']
    #allocation8 [shape = 'u8[589824]{0}', space=vmem, size = 0x90000, scoped, tag = 'input window, operand 2, single buffered']
    #allocation9 [shape = 'u8[262144]{0}', space=vmem, size = 0x40000, scoped, tag = 'output window, operand 0']
    %8 = vsyncpa [#allocation4], 0
    %s9 = scalar_lea.sflag [#allocation4], 1
    %10 = vsyncpa %s9, 0
    %11 = vsyncpa [#allocation7], 0
    %12 = vsyncpa [#allocation5], 0
    %s13 = scalar_lea.sflag [#allocation5], 1
    %14 = vsyncpa %s13, 0
    loop: start=0, step=1, limit=4
    $region2: #{tpu_custom_call.1} parent=1 // loop_pre_header
      _
    $region3: #{tpu_custom_call.1} parent=1 // loop_header
      %s16 = sphi 0, %s20
      %p17 = scmp.ge.s32.totalorder %s16, 4
      %s26 = sphi 0, %s28
      %s29 = sphi 0, %s26
      %s30 = sphi 0, %s29
      %s46 = sphi 0, %s30
      %s50 = sphi 0, %s50
      %s52 = sphi 0, %s50
      %s53 = sphi 0, %s52
      %s67 = sphi 0, %s53
      %s71 = sphi 0, %s71
      %s73 = sphi 0, %s71
      %s74 = sphi 0, %s73
      %s88 = sphi 0, %s74
      %s94 = sphi 0, %s96
      %s97 = sphi 0, %s94
      %s98 = sphi 0, %s97
      %s114 = sphi 0, %s98
    $region4: #{tpu_custom_call.1} parent=1 // loop_header_branch
      %19 = sbr.rel (%p17) target = $region8
    $region5: #{tpu_custom_call.1} parent=1 // loop_body
      %s21 = ssub.s32 %s16, 1
      %s22 = ssub.s32 %s16, 2
      %s23 = sadd.s32 %s16, 1
      %s24 = ssub.s32 %s16, %s23
      %p25 = scmp.eq.s32.totalorder %s24, 0
      %s27 = sadd.s32 %s26, 1
      %s28 = scalar_select %p25, %s26, %s27
      %p31 = pneg %p25
      %p32 = scmp.eq.s32.totalorder %s16, 1
      %p33 = por %p31, %p32
      %p34 = scmp.ne.s32.totalorder %s26, %s29
      %p35 = scmp.eq.s32.totalorder %s16, 0
      %p36 = por %p34, %p35
      %p37 = scmp.ne.s32.totalorder %s26, %s29
      %p38 = scmp.eq.s32.totalorder %s21, 1
      %p39 = por %p37, %p38
      %p40 = scmp.ne.s32.totalorder %s29, %s30
      %p41 = scmp.eq.s32.totalorder %s21, 0
      %p42 = por %p40, %p41
      %p43 = scmp.ne.s32.totalorder %s29, %s30
      %p44 = scmp.eq.s32.totalorder %s22, 1
      %p45 = por %p43, %p44
      %p47 = scmp.ne.s32.totalorder %s30, %s46
      %p48 = scmp.eq.s32.totalorder %s22, 0
      %p49 = por %p47, %p48
      %s51 = sadd.s32 %s50, 1
      %p54 = scmp.eq.s32.totalorder %s16, 1
      %p55 = scmp.ne.s32.totalorder %s50, %s52
      %p56 = scmp.eq.s32.totalorder %s16, 0
      %p57 = por %p55, %p56
      %p58 = scmp.ne.s32.totalorder %s50, %s52
      %p59 = scmp.eq.s32.totalorder %s21, 1
      %p60 = por %p58, %p59
      %p61 = scmp.ne.s32.totalorder %s52, %s53
      %p62 = scmp.eq.s32.totalorder %s21, 0
      %p63 = por %p61, %p62
      %p64 = scmp.ne.s32.totalorder %s52, %s53
      %p65 = scmp.eq.s32.totalorder %s22, 1
      %p66 = por %p64, %p65
      %p68 = scmp.ne.s32.totalorder %s53, %s67
      %p69 = scmp.eq.s32.totalorder %s22, 0
      %p70 = por %p68, %p69
      %s72 = sadd.s32 %s71, 1
      %p75 = scmp.eq.s32.totalorder %s16, 1
      %p76 = scmp.ne.s32.totalorder %s71, %s73
      %p77 = scmp.eq.s32.totalorder %s16, 0
      %p78 = por %p76, %p77
      %p79 = scmp.ne.s32.totalorder %s71, %s73
      %p80 = scmp.eq.s32.totalorder %s21, 1
      %p81 = por %p79, %p80
      %p82 = scmp.ne.s32.totalorder %s73, %s74
      %p83 = scmp.eq.s32.totalorder %s21, 0
      %p84 = por %p82, %p83
      %p85 = scmp.ne.s32.totalorder %s73, %s74
      %p86 = scmp.eq.s32.totalorder %s22, 1
      %p87 = por %p85, %p86
      %p89 = scmp.ne.s32.totalorder %s74, %s88
      %p90 = scmp.eq.s32.totalorder %s22, 0
      %p91 = por %p89, %p90
      %s92 = ssub.s32 %s16, %s23
      %p93 = scmp.eq.s32.totalorder %s92, 0
      %s95 = sadd.s32 %s94, 1
      %s96 = scalar_select %p93, %s94, %s95
      %p99 = pneg %p93
      %p100 = scmp.eq.s32.totalorder %s16, 1
      %p101 = por %p99, %p100
      %p102 = scmp.ne.s32.totalorder %s94, %s97
      %p103 = scmp.eq.s32.totalorder %s16, 0
      %p104 = por %p102, %p103
      %p105 = scmp.ne.s32.totalorder %s94, %s97
      %p106 = scmp.eq.s32.totalorder %s21, 1
      %p107 = por %p105, %p106
      %p108 = scmp.ne.s32.totalorder %s97, %s98
      %p109 = scmp.eq.s32.totalorder %s21, 0
      %p110 = por %p108, %p109
      %p111 = scmp.ne.s32.totalorder %s97, %s98
      %p112 = scmp.eq.s32.totalorder %s22, 1
      %p113 = por %p111, %p112
      %p115 = scmp.ne.s32.totalorder %s98, %s114
      %p116 = scmp.eq.s32.totalorder %s22, 0
      %p117 = por %p115, %p116
      %p118 = scmp.le.s32.totalorder 1, %s16
      %p119 = scmp.lt.s32.totalorder %s16, 3
      %p120 = pnand %p118, %p119
      %p121 = pneg %p120
      // Predicated region
      $region9: #{tpu_custom_call.1} parent=5 // pred_check
        _
      $region10: #{tpu_custom_call.1} parent=5 // pred_check_branch
        %123 = sbr.rel (%p120) target = $region12
      $region11: #{tpu_custom_call.1} parent=5 // pred_region
        %s124 = ssub.s32 %s16, 1
        // Predicated region
        $region13: #{tpu_custom_call.1} parent=11 // pred_check
          %p125 = pneg %p63
        $region14: #{tpu_custom_call.1} parent=11 // pred_check_branch
          %127 = sbr.rel (%p125) target = $region16
        $region15: #{tpu_custom_call.1} parent=11 // pred_region
          %129 = vsyncadd [#allocation7], 0
          %s130 = sshll.u32 %s1, 4
          %s131 = int_to_ptr.hbm [resolvable:$true] %s130
          %s132 = sshll.u32 [#allocation6], 4
          %s133 = int_to_ptr.vmem [resolvable:$true] %s132
          %138 = dma.hbm_to_vmem [thread:$0]  %s131, 18432, %s133, [#allocation7], 128, 128, 8
        $region16: #{tpu_custom_call.1} parent=11 // pred_fallthru
          _
        // Predicated region
        $region17: #{tpu_custom_call.1} parent=11 // pred_check
          %p139 = pneg %p84
        $region18: #{tpu_custom_call.1} parent=11 // pred_check_branch
          %141 = sbr.rel (%p139) target = $region20
        $region19: #{tpu_custom_call.1} parent=11 // pred_region
          %143 = vsyncadd [#allocation7], 0
          %s144 = sshll.u32 %s2, 4
          %s145 = int_to_ptr.hbm [resolvable:$true] %s144
          %s146 = sshll.u32 [#allocation8], 4
          %s147 = int_to_ptr.vmem [resolvable:$true] %s146
          %152 = dma.hbm_to_vmem [thread:$0]  %s145, 18432, %s147, [#allocation7], 128, 128, 8
        $region20: #{tpu_custom_call.1} parent=11 // pred_fallthru
          _
      $region12: #{tpu_custom_call.1} parent=5 // pred_fallthru
        _
      %p153 = scmp.lt.s32.totalorder %s16, 2
      // Predicated region
      $region21: #{tpu_custom_call.1} parent=5 // pred_check
        %p154 = pneg %p153
      $region22: #{tpu_custom_call.1} parent=5 // pred_check_branch
        %156 = sbr.rel (%p154) target = $region24
      $region23: #{tpu_custom_call.1} parent=5 // pred_region
        // Predicated region
        $region25: #{tpu_custom_call.1} parent=23 // pred_check
          %p157 = pneg %p36
        $region26: #{tpu_custom_call.1} parent=23 // pred_check_branch
          %159 = sbr.rel (%p157) target = $region28
        $region27: #{tpu_custom_call.1} parent=23 // pred_region
          %s160 = sand.u32 %s26, 1
          %s161 = scalar_lea.sflag [#allocation4], %s160
          %s162 = sand.u32 %s26, 1
          %s163 = smul.addr %s162, 256
          %s164 = scalar_lea.vmem [#allocation3], %s163
          %166 = vsyncadd %s161, 0
          %s167 = smul.addr %s16, 32
          %s168 = smul.addr %s167, 8
          %s169 = scalar_lea.hbm %s0, %s168
          %s170 = sshll.u32 %s169, 4
          %s171 = int_to_ptr.hbm [resolvable:$true] %s170
          %s172 = sshll.u32 %s164, 4
          %s173 = int_to_ptr.vmem [resolvable:$true] %s172
          %178 = dma.hbm_to_vmem [thread:$0]  %s171, 4096, %s173, %s161, 128, 128, 8
        $region28: #{tpu_custom_call.1} parent=23 // pred_fallthru
          _
      $region24: #{tpu_custom_call.1} parent=5 // pred_fallthru
        _
      %p179 = scmp.le.s32.totalorder 1, %s16
      %p180 = scmp.lt.s32.totalorder %s16, 3
      %p181 = pnand %p179, %p180
      %p182 = pneg %p181
      // Predicated region
      $region29: #{tpu_custom_call.1} parent=5 // pred_check
        _
      $region30: #{tpu_custom_call.1} parent=5 // pred_check_branch
        %184 = sbr.rel (%p181) target = $region32
      $region31: #{tpu_custom_call.1} parent=5 // pred_region
        %s185 = ssub.s32 %s16, 1
        %s186 = sand.u32 %s29, 1
        %s187 = scalar_lea.sflag [#allocation4], %s186
        %s188 = sand.u32 %s29, 1
        %s189 = smul.addr %s188, 256
        %s190 = scalar_lea.vmem [#allocation3], %s189
        // Predicated region
        $region33: #{tpu_custom_call.1} parent=31 // pred_check
          %p191 = pneg %p42
        $region34: #{tpu_custom_call.1} parent=31 // pred_check_branch
          %193 = sbr.rel (%p191) target = $region36
        $region35: #{tpu_custom_call.1} parent=31 // pred_region
          %195 = dma.done %s187, 4096
        $region36: #{tpu_custom_call.1} parent=31 // pred_fallthru
          _
        // Predicated region
        $region37: #{tpu_custom_call.1} parent=31 // pred_check
          %p196 = pneg %p63
        $region38: #{tpu_custom_call.1} parent=31 // pred_check_branch
          %198 = sbr.rel (%p196) target = $region40
        $region39: #{tpu_custom_call.1} parent=31 // pred_region
          %200 = dma.done [#allocation7], 18432
        $region40: #{tpu_custom_call.1} parent=31 // pred_fallthru
          _
        // Predicated region
        $region41: #{tpu_custom_call.1} parent=31 // pred_check
          %p201 = pneg %p84
        $region42: #{tpu_custom_call.1} parent=31 // pred_check_branch
          %203 = sbr.rel (%p201) target = $region44
        $region43: #{tpu_custom_call.1} parent=31 // pred_region
          %205 = dma.done [#allocation7], 18432
        $region44: #{tpu_custom_call.1} parent=31 // pred_fallthru
          _
        %s206 = sand.u32 %s29, 1
        %s207 = scalar_lea.sflag [#allocation4], %s206
        %s208 = sand.u32 %s29, 1
        %s209 = smul.addr %s208, 256
        %s210 = scalar_lea.vmem [#allocation3], %s209
        %p211 = pneg %p42
        %p212 = pneg %p39
        %p213 = pneg %p63
        %p214 = pneg %p60
        %p215 = pneg %p84
        %p216 = pneg %p81
        %p217 = pneg %p110
        %p218 = pneg %p107
        %s219 = sand.u32 %s97, 1
        %s220 = scalar_lea.sflag [#allocation5], %s219
        %s221 = sand.u32 %s97, 1
        %s222 = smul.addr %s221, 256
        %s223 = scalar_lea.vmem [#allocation9], %s222
        %v224 = vld [vmem:[%s190] sm:$0xff]
        %v225 = vld [vmem:[%s190 + $0x8] sm:$0xff]
        %v226 = vld [vmem:[%s190 + $0x10] sm:$0xff]
        %v227 = vld [vmem:[%s190 + $0x18] sm:$0xff]
        %v228 = vld [vmem:[%s190 + $0x20] sm:$0xff]
        %v229 = vld [vmem:[%s190 + $0x28] sm:$0xff]
        %v230 = vld [vmem:[%s190 + $0x30] sm:$0xff]
        %v231 = vld [vmem:[%s190 + $0x38] sm:$0xff]
        %v232 = vld [vmem:[%s190 + $0x40] sm:$0xff]
        %v233 = vld [vmem:[%s190 + $0x48] sm:$0xff]
        %v234 = vld [vmem:[%s190 + $0x50] sm:$0xff]
        %v235 = vld [vmem:[%s190 + $0x58] sm:$0xff]
        %v236 = vld [vmem:[%s190 + $0x60] sm:$0xff]
        %v237 = vld [vmem:[%s190 + $0x68] sm:$0xff]
        %v238 = vld [vmem:[%s190 + $0x70] sm:$0xff]
        %v239 = vld [vmem:[%s190 + $0x78] sm:$0xff]
        %v240 = vld [vmem:[%s190 + $0x80] sm:$0xff]
        %v241 = vld [vmem:[%s190 + $0x88] sm:$0xff]
        %v242 = vld [vmem:[%s190 + $0x90] sm:$0xff]
        %v243 = vld [vmem:[%s190 + $0x98] sm:$0xff]
        %v244 = vld [vmem:[%s190 + $0xa0] sm:$0xff]
        %v245 = vld [vmem:[%s190 + $0xa8] sm:$0xff]
        %v246 = vld [vmem:[%s190 + $0xb0] sm:$0xff]
        %v247 = vld [vmem:[%s190 + $0xb8] sm:$0xff]
        %v248 = vld [vmem:[%s190 + $0xc0] sm:$0xff]
        %v249 = vld [vmem:[%s190 + $0xc8] sm:$0xff]
        %v250 = vld [vmem:[%s190 + $0xd0] sm:$0xff]
        %v251 = vld [vmem:[%s190 + $0xd8] sm:$0xff]
        %v252 = vld [vmem:[%s190 + $0xe0] sm:$0xff]
        %v253 = vld [vmem:[%s190 + $0xe8] sm:$0xff]
        %v254 = vld [vmem:[%s190 + $0xf0] sm:$0xff]
        %v255 = vld [vmem:[%s190 + $0xf8] sm:$0xff]
        %s256 = scalar_lea.vmem [#allocation2], 48
        %257 = vst [vmem:[%s256 + $0x8] sm:$0xff] %v224
        %258 = vst [vmem:[%s256 + $0x20] sm:$0xff] %v225
        %259 = vst [vmem:[%s256 + $0x38] sm:$0xff] %v226
        %260 = vst [vmem:[%s256 + $0x50] sm:$0xff] %v227
        %261 = vst [vmem:[%s256 + $0x68] sm:$0xff] %v228
        %262 = vst [vmem:[%s256 + $0x80] sm:$0xff] %v229
        %263 = vst [vmem:[%s256 + $0x98] sm:$0xff] %v230
        %264 = vst [vmem:[%s256 + $0xb0] sm:$0xff] %v231
        %265 = vst [vmem:[%s256 + $0xc8] sm:$0xff] %v232
        %266 = vst [vmem:[%s256 + $0xe0] sm:$0xff] %v233
        %267 = vst [vmem:[%s256 + $0xf8] sm:$0xff] %v234
        %268 = vst [vmem:[%s256 + $0x110] sm:$0xff] %v235
        %269 = vst [vmem:[%s256 + $0x128] sm:$0xff] %v236
        %270 = vst [vmem:[%s256 + $0x140] sm:$0xff] %v237
        %271 = vst [vmem:[%s256 + $0x158] sm:$0xff] %v238
        %272 = vst [vmem:[%s256 + $0x170] sm:$0xff] %v239
        %273 = vst [vmem:[%s256 + $0x188] sm:$0xff] %v240
        %274 = vst [vmem:[%s256 + $0x1a0] sm:$0xff] %v241
        %275 = vst [vmem:[%s256 + $0x1b8] sm:$0xff] %v242
        %276 = vst [vmem:[%s256 + $0x1d0] sm:$0xff] %v243
        %277 = vst [vmem:[%s256 + $0x1e8] sm:$0xff] %v244
        %278 = vst [vmem:[%s256 + $0x200] sm:$0xff] %v245
        %279 = vst [vmem:[%s256 + $0x218] sm:$0xff] %v246
        %280 = vst [vmem:[%s256 + $0x230] sm:$0xff] %v247
        %281 = vst [vmem:[%s256 + $0x248] sm:$0xff] %v248
        %282 = vst [vmem:[%s256 + $0x260] sm:$0xff] %v249
        %283 = vst [vmem:[%s256 + $0x278] sm:$0xff] %v250
        %284 = vst [vmem:[%s256 + $0x290] sm:$0xff] %v251
        %285 = vst [vmem:[%s256 + $0x2a8] sm:$0xff] %v252
        %286 = vst [vmem:[%s256 + $0x2c0] sm:$0xff] %v253
        %287 = vst [vmem:[%s256 + $0x2d8] sm:$0xff] %v254
        %288 = vst [vmem:[%s256 + $0x2f0] sm:$0xff] %v255
        %vm321 = vcmask 1040384
        %v322 = vrot.slane %v224, 7
        %v323 = vrot.slane %v225, 7
        %v324 = vsel %vm321, %v322, %v323
        %v325 = vrot.slane %v226, 7
        %v326 = vrot.slane %v227, 7
        %v327 = vsel %vm321, %v325, %v326
        %v328 = vrot.slane %v228, 7
        %v329 = vrot.slane %v229, 7
        %v330 = vsel %vm321, %v328, %v329
        %v331 = vrot.slane %v230, 7
        %v332 = vrot.slane %v231, 7
        %v333 = vsel %vm321, %v331, %v332
        %v334 = vrot.slane %v232, 7
        %v335 = vrot.slane %v233, 7
        %v336 = vsel %vm321, %v334, %v335
        %v337 = vrot.slane %v234, 7
        %v338 = vrot.slane %v235, 7
        %v339 = vsel %vm321, %v337, %v338
        %v340 = vrot.slane %v236, 7
        %v341 = vrot.slane %v237, 7
        %v342 = vsel %vm321, %v340, %v341
        %v343 = vrot.slane %v238, 7
        %v344 = vrot.slane %v239, 7
        %v345 = vsel %vm321, %v343, %v344
        %v346 = vrot.slane %v240, 7
        %v347 = vrot.slane %v241, 7
        %v348 = vsel %vm321, %v346, %v347
        %v349 = vrot.slane %v242, 7
        %v350 = vrot.slane %v243, 7
        %v351 = vsel %vm321, %v349, %v350
        %v352 = vrot.slane %v244, 7
        %v353 = vrot.slane %v245, 7
        %v354 = vsel %vm321, %v352, %v353
        %v355 = vrot.slane %v246, 7
        %v356 = vrot.slane %v247, 7
        %v357 = vsel %vm321, %v355, %v356
        %v358 = vrot.slane %v248, 7
        %v359 = vrot.slane %v249, 7
        %v360 = vsel %vm321, %v358, %v359
        %v361 = vrot.slane %v250, 7
        %v362 = vrot.slane %v251, 7
        %v363 = vsel %vm321, %v361, %v362
        %v364 = vrot.slane %v252, 7
        %v365 = vrot.slane %v253, 7
        %v366 = vsel %vm321, %v364, %v365
        %v367 = vrot.slane %v254, 7
        %v368 = vrot.slane %v255, 7
        %v369 = vsel %vm321, %v367, %v368
        %402 = vst [vmem:[%s256] sm:$0xfe] %v322
        %403 = vst [vmem:[%s256 + $0x18] sm:$0xff] %v324
        %404 = vst [vmem:[%s256 + $0x30] sm:$0xfe] %v325
        %405 = vst [vmem:[%s256 + $0x48] sm:$0xff] %v327
        %406 = vst [vmem:[%s256 + $0x60] sm:$0xfe] %v328
        %407 = vst [vmem:[%s256 + $0x78] sm:$0xff] %v330
        %408 = vst [vmem:[%s256 + $0x90] sm:$0xfe] %v331
        %409 = vst [vmem:[%s256 + $0xa8] sm:$0xff] %v333
        %410 = vst [vmem:[%s256 + $0xc0] sm:$0xfe] %v334
        %411 = vst [vmem:[%s256 + $0xd8] sm:$0xff] %v336
        %412 = vst [vmem:[%s256 + $0xf0] sm:$0xfe] %v337
        %413 = vst [vmem:[%s256 + $0x108] sm:$0xff] %v339
        %414 = vst [vmem:[%s256 + $0x120] sm:$0xfe] %v340
        %415 = vst [vmem:[%s256 + $0x138] sm:$0xff] %v342
        %416 = vst [vmem:[%s256 + $0x150] sm:$0xfe] %v343
        %417 = vst [vmem:[%s256 + $0x168] sm:$0xff] %v345
        %418 = vst [vmem:[%s256 + $0x180] sm:$0xfe] %v346
        %419 = vst [vmem:[%s256 + $0x198] sm:$0xff] %v348
        %420 = vst [vmem:[%s256 + $0x1b0] sm:$0xfe] %v349
        %421 = vst [vmem:[%s256 + $0x1c8] sm:$0xff] %v351
        %422 = vst [vmem:[%s256 + $0x1e0] sm:$0xfe] %v352
        %423 = vst [vmem:[%s256 + $0x1f8] sm:$0xff] %v354
        %424 = vst [vmem:[%s256 + $0x210] sm:$0xfe] %v355
        %425 = vst [vmem:[%s256 + $0x228] sm:$0xff] %v357
        %426 = vst [vmem:[%s256 + $0x240] sm:$0xfe] %v358
        %427 = vst [vmem:[%s256 + $0x258] sm:$0xff] %v360
        %428 = vst [vmem:[%s256 + $0x270] sm:$0xfe] %v361
        %429 = vst [vmem:[%s256 + $0x288] sm:$0xff] %v363
        %430 = vst [vmem:[%s256 + $0x2a0] sm:$0xfe] %v364
        %431 = vst [vmem:[%s256 + $0x2b8] sm:$0xff] %v366
        %432 = vst [vmem:[%s256 + $0x2d0] sm:$0xfe] %v367
        %433 = vst [vmem:[%s256 + $0x2e8] sm:$0xff] %v369
        %v434 = vrot.slane %v224, 1
        %v435 = vrot.slane %v226, 1
        %v436 = vrot.slane %v228, 1
        %v437 = vrot.slane %v230, 1
        %v438 = vrot.slane %v232, 1
        %v439 = vrot.slane %v234, 1
        %v440 = vrot.slane %v236, 1
        %v441 = vrot.slane %v238, 1
        %v442 = vrot.slane %v240, 1
        %v443 = vrot.slane %v242, 1
        %v444 = vrot.slane %v244, 1
        %v445 = vrot.slane %v246, 1
        %v446 = vrot.slane %v248, 1
        %v447 = vrot.slane %v250, 1
        %v448 = vrot.slane %v252, 1
        %v449 = vrot.slane %v254, 1
        %466 = vst [vmem:[%s256] sm:$0x1] %v434
        %467 = vst [vmem:[%s256 + $0x30] sm:$0x1] %v435
        %468 = vst [vmem:[%s256 + $0x60] sm:$0x1] %v436
        %469 = vst [vmem:[%s256 + $0x90] sm:$0x1] %v437
        %470 = vst [vmem:[%s256 + $0xc0] sm:$0x1] %v438
        %471 = vst [vmem:[%s256 + $0xf0] sm:$0x1] %v439
        %472 = vst [vmem:[%s256 + $0x120] sm:$0x1] %v440
        %473 = vst [vmem:[%s256 + $0x150] sm:$0x1] %v441
        %474 = vst [vmem:[%s256 + $0x180] sm:$0x1] %v442
        %475 = vst [vmem:[%s256 + $0x1b0] sm:$0x1] %v443
        %476 = vst [vmem:[%s256 + $0x1e0] sm:$0x1] %v444
        %477 = vst [vmem:[%s256 + $0x210] sm:$0x1] %v445
        %478 = vst [vmem:[%s256 + $0x240] sm:$0x1] %v446
        %479 = vst [vmem:[%s256 + $0x270] sm:$0x1] %v447
        %480 = vst [vmem:[%s256 + $0x2a0] sm:$0x1] %v448
        %481 = vst [vmem:[%s256 + $0x2d0] sm:$0x1] %v449
        %vm482 = vcmask 1046528
        %v483 = vrot.slane %v225, 1
        %v484 = vsel %vm482, %v434, %v483
        %v485 = vrot.slane %v227, 1
        %v486 = vsel %vm482, %v435, %v485
        %v487 = vrot.slane %v229, 1
        %v488 = vsel %vm482, %v436, %v487
        %v489 = vrot.slane %v231, 1
        %v490 = vsel %vm482, %v437, %v489
        %v491 = vrot.slane %v233, 1
        %v492 = vsel %vm482, %v438, %v491
        %v493 = vrot.slane %v235, 1
        %v494 = vsel %vm482, %v439, %v493
        %v495 = vrot.slane %v237, 1
        %v496 = vsel %vm482, %v440, %v495
        %v497 = vrot.slane %v239, 1
        %v498 = vsel %vm482, %v441, %v497
        %v499 = vrot.slane %v241, 1
        %v500 = vsel %vm482, %v442, %v499
        %v501 = vrot.slane %v243, 1
        %v502 = vsel %vm482, %v443, %v501
        %v503 = vrot.slane %v245, 1
        %v504 = vsel %vm482, %v444, %v503
        %v505 = vrot.slane %v247, 1
        %v506 = vsel %vm482, %v445, %v505
        %v507 = vrot.slane %v249, 1
        %v508 = vsel %vm482, %v446, %v507
        %v509 = vrot.slane %v251, 1
        %v510 = vsel %vm482, %v447, %v509
        %v511 = vrot.slane %v253, 1
        %v512 = vsel %vm482, %v448, %v511
        %v513 = vrot.slane %v255, 1
        %v514 = vsel %vm482, %v449, %v513
        %547 = vst [vmem:[%s256 + $0x10] sm:$0xff] %v484
        %548 = vst [vmem:[%s256 + $0x28] sm:$0x7f] %v483
        %549 = vst [vmem:[%s256 + $0x40] sm:$0xff] %v486
        %550 = vst [vmem:[%s256 + $0x58] sm:$0x7f] %v485
        %551 = vst [vmem:[%s256 + $0x70] sm:$0xff] %v488
        %552 = vst [vmem:[%s256 + $0x88] sm:$0x7f] %v487
        %553 = vst [vmem:[%s256 + $0xa0] sm:$0xff] %v490
        %554 = vst [vmem:[%s256 + $0xb8] sm:$0x7f] %v489
        %555 = vst [vmem:[%s256 + $0xd0] sm:$0xff] %v492
        %556 = vst [vmem:[%s256 + $0xe8] sm:$0x7f] %v491
        %557 = vst [vmem:[%s256 + $0x100] sm:$0xff] %v494
        %558 = vst [vmem:[%s256 + $0x118] sm:$0x7f] %v493
        %559 = vst [vmem:[%s256 + $0x130] sm:$0xff] %v496
        %560 = vst [vmem:[%s256 + $0x148] sm:$0x7f] %v495
        %561 = vst [vmem:[%s256 + $0x160] sm:$0xff] %v498
        %562 = vst [vmem:[%s256 + $0x178] sm:$0x7f] %v497
        %563 = vst [vmem:[%s256 + $0x190] sm:$0xff] %v500
        %564 = vst [vmem:[%s256 + $0x1a8] sm:$0x7f] %v499
        %565 = vst [vmem:[%s256 + $0x1c0] sm:$0xff] %v502
        %566 = vst [vmem:[%s256 + $0x1d8] sm:$0x7f] %v501
        %567 = vst [vmem:[%s256 + $0x1f0] sm:$0xff] %v504
        %568 = vst [vmem:[%s256 + $0x208] sm:$0x7f] %v503
        %569 = vst [vmem:[%s256 + $0x220] sm:$0xff] %v506
        %570 = vst [vmem:[%s256 + $0x238] sm:$0x7f] %v505
        %571 = vst [vmem:[%s256 + $0x250] sm:$0xff] %v508
        %572 = vst [vmem:[%s256 + $0x268] sm:$0x7f] %v507
        %573 = vst [vmem:[%s256 + $0x280] sm:$0xff] %v510
        %574 = vst [vmem:[%s256 + $0x298] sm:$0x7f] %v509
        %575 = vst [vmem:[%s256 + $0x2b0] sm:$0xff] %v512
        %576 = vst [vmem:[%s256 + $0x2c8] sm:$0x7f] %v511
        %577 = vst [vmem:[%s256 + $0x2e0] sm:$0xff] %v514
        %578 = vst [vmem:[%s256 + $0x2f8] sm:$0x7f] %v513
        %v579 = vrot.slane %v225, 6
        %v580 = vrot.slane %v227, 6
        %v581 = vrot.slane %v229, 6
        %v582 = vrot.slane %v231, 6
        %v583 = vrot.slane %v233, 6
        %v584 = vrot.slane %v235, 6
        %v585 = vrot.slane %v237, 6
        %v586 = vrot.slane %v239, 6
        %v587 = vrot.slane %v241, 6
        %v588 = vrot.slane %v243, 6
        %v589 = vrot.slane %v245, 6
        %v590 = vrot.slane %v247, 6
        %v591 = vrot.slane %v249, 6
        %v592 = vrot.slane %v251, 6
        %v593 = vrot.slane %v253, 6
        %v594 = vrot.slane %v255, 6
        %611 = vst [vmem:[%s256 + $0x2f] sm:$0x1] %v579
        %612 = vst [vmem:[%s256 + $0x5f] sm:$0x1] %v580
        %613 = vst [vmem:[%s256 + $0x8f] sm:$0x1] %v581
        %614 = vst [vmem:[%s256 + $0xbf] sm:$0x1] %v582
        %615 = vst [vmem:[%s256 + $0xef] sm:$0x1] %v583
        %616 = vst [vmem:[%s256 + $0x11f] sm:$0x1] %v584
        %617 = vst [vmem:[%s256 + $0x14f] sm:$0x1] %v585
        %618 = vst [vmem:[%s256 + $0x17f] sm:$0x1] %v586
        %619 = vst [vmem:[%s256 + $0x1af] sm:$0x1] %v587
        %620 = vst [vmem:[%s256 + $0x1df] sm:$0x1] %v588
        %621 = vst [vmem:[%s256 + $0x20f] sm:$0x1] %v589
        %622 = vst [vmem:[%s256 + $0x23f] sm:$0x1] %v590
        %623 = vst [vmem:[%s256 + $0x26f] sm:$0x1] %v591
        %624 = vst [vmem:[%s256 + $0x29f] sm:$0x1] %v592
        %625 = vst [vmem:[%s256 + $0x2cf] sm:$0x1] %v593
        %626 = vst [vmem:[%s256 + $0x2ff] sm:$0x1] %v594
        %627 = vst [vmem:[#allocation2 + $0x8] sm:$0xff] %v226
        %628 = vst [vmem:[#allocation2 + $0x20] sm:$0xff] %v227
        %629 = vst [vmem:[#allocation2] sm:$0xfe] %v325
        %630 = vst [vmem:[#allocation2 + $0x18] sm:$0xff] %v327
        %631 = vst [vmem:[#allocation2] sm:$0x1] %v435
        %632 = vst [vmem:[#allocation2 + $0x10] sm:$0xff] %v486
        %633 = vst [vmem:[#allocation2 + $0x28] sm:$0x7f] %v485
        %634 = vst [vmem:[#allocation2 + $0x2f] sm:$0x1] %v580
        %s635 = scalar_lea.vmem [#allocation2], 816
        %636 = vst [vmem:[%s635 + $0x8] sm:$0xff] %v252
        %637 = vst [vmem:[%s635 + $0x20] sm:$0xff] %v253
        %638 = vst [vmem:[%s635] sm:$0xfe] %v364
        %639 = vst [vmem:[%s635 + $0x18] sm:$0xff] %v366
        %640 = vst [vmem:[%s635] sm:$0x1] %v448
        %641 = vst [vmem:[%s635 + $0x10] sm:$0xff] %v512
        %642 = vst [vmem:[%s635 + $0x28] sm:$0x7f] %v511
        %643 = vst [vmem:[%s635 + $0x2f] sm:$0x1] %v593
        %v644 = vld [vmem:[#allocation2] sm:$0xff]
        %v645 = vld [vmem:[#allocation2 + $0x8] sm:$0xff]
        %v646 = vld [vmem:[#allocation2 + $0x10] sm:$0xff]
        %v647 = vld [vmem:[#allocation2 + $0x18] sm:$0xff]
        %v648 = vld [vmem:[#allocation2 + $0x20] sm:$0xff]
        %v649 = vld [vmem:[#allocation2 + $0x28] sm:$0xff]
        %v650 = vld [vmem:[#allocation2 + $0x30] sm:$0xff]
        %v651 = vld [vmem:[#allocation2 + $0x38] sm:$0xff]
        %v652 = vld [vmem:[#allocation2 + $0x40] sm:$0xff]
        %v653 = vld [vmem:[#allocation2 + $0x48] sm:$0xff]
        %v654 = vld [vmem:[#allocation2 + $0x50] sm:$0xff]
        %v655 = vld [vmem:[#allocation2 + $0x58] sm:$0xff]
        %v656 = vld [vmem:[#allocation2 + $0x60] sm:$0xff]
        %v657 = vld [vmem:[#allocation2 + $0x68] sm:$0xff]
        %v658 = vld [vmem:[#allocation2 + $0x70] sm:$0xff]
        %v659 = vld [vmem:[#allocation2 + $0x78] sm:$0xff]
        %v660 = vld [vmem:[#allocation2 + $0x80] sm:$0xff]
        %v661 = vld [vmem:[#allocation2 + $0x88] sm:$0xff]
        %v662 = vld [vmem:[#allocation2 + $0x90] sm:$0xff]
        %v663 = vld [vmem:[#allocation2 + $0x98] sm:$0xff]
        %v664 = vld [vmem:[#allocation2 + $0xa0] sm:$0xff]
        %v665 = vld [vmem:[#allocation2 + $0xa8] sm:$0xff]
        %v666 = vld [vmem:[#allocation2 + $0xb0] sm:$0xff]
        %v667 = vld [vmem:[#allocation2 + $0xb8] sm:$0xff]
        %v668 = vld [vmem:[#allocation2 + $0xc0] sm:$0xff]
        %v669 = vld [vmem:[#allocation2 + $0xc8] sm:$0xff]
        %v670 = vld [vmem:[#allocation2 + $0xd0] sm:$0xff]
        %v671 = vld [vmem:[#allocation2 + $0xd8] sm:$0xff]
        %v672 = vld [vmem:[#allocation2 + $0xe0] sm:$0xff]
        %v673 = vld [vmem:[#allocation2 + $0xe8] sm:$0xff]
        %v674 = vld [vmem:[#allocation2 + $0xf0] sm:$0xff]
        %v675 = vld [vmem:[#allocation2 + $0xf8] sm:$0xff]
        %v676 = vld [vmem:[#allocation2 + $0x100] sm:$0xff]
        %v677 = vld [vmem:[#allocation2 + $0x108] sm:$0xff]
        %v678 = vld [vmem:[#allocation2 + $0x110] sm:$0xff]
        %v679 = vld [vmem:[#allocation2 + $0x118] sm:$0xff]
        %v680 = vld [vmem:[#allocation2 + $0x120] sm:$0xff]
        %v681 = vld [vmem:[#allocation2 + $0x128] sm:$0xff]
        %v682 = vld [vmem:[#allocation2 + $0x130] sm:$0xff]
        %v683 = vld [vmem:[#allocation2 + $0x138] sm:$0xff]
        %v684 = vld [vmem:[#allocation2 + $0x140] sm:$0xff]
        %v685 = vld [vmem:[#allocation2 + $0x148] sm:$0xff]
        %v686 = vld [vmem:[#allocation2 + $0x150] sm:$0xff]
        %v687 = vld [vmem:[#allocation2 + $0x158] sm:$0xff]
        %v688 = vld [vmem:[#allocation2 + $0x160] sm:$0xff]
        %v689 = vld [vmem:[#allocation2 + $0x168] sm:$0xff]
        %v690 = vld [vmem:[#allocation2 + $0x170] sm:$0xff]
        %v691 = vld [vmem:[#allocation2 + $0x178] sm:$0xff]
        %v692 = vld [vmem:[#allocation2 + $0x180] sm:$0xff]
        %v693 = vld [vmem:[#allocation2 + $0x188] sm:$0xff]
        %v694 = vld [vmem:[#allocation2 + $0x190] sm:$0xff]
        %v695 = vld [vmem:[#allocation2 + $0x198] sm:$0xff]
        %v696 = vld [vmem:[#allocation2 + $0x1a0] sm:$0xff]
        %v697 = vld [vmem:[#allocation2 + $0x1a8] sm:$0xff]
        %v698 = vld [vmem:[#allocation2 + $0x1b0] sm:$0xff]
        %v699 = vld [vmem:[#allocation2 + $0x1b8] sm:$0xff]
        %v700 = vld [vmem:[#allocation2 + $0x1c0] sm:$0xff]
        %v701 = vld [vmem:[#allocation2 + $0x1c8] sm:$0xff]
        %v702 = vld [vmem:[#allocation2 + $0x1d0] sm:$0xff]
        %v703 = vld [vmem:[#allocation2 + $0x1d8] sm:$0xff]
        %v704 = vld [vmem:[#allocation2 + $0x1e0] sm:$0xff]
        %v705 = vld [vmem:[#allocation2 + $0x1e8] sm:$0xff]
        %v706 = vld [vmem:[#allocation2 + $0x1f0] sm:$0xff]
        %v707 = vld [vmem:[#allocation2 + $0x1f8] sm:$0xff]
        %v708 = vld [vmem:[#allocation2 + $0x200] sm:$0xff]
        %v709 = vld [vmem:[#allocation2 + $0x208] sm:$0xff]
        %v710 = vld [vmem:[#allocation2 + $0x210] sm:$0xff]
        %v711 = vld [vmem:[#allocation2 + $0x218] sm:$0xff]
        %v712 = vld [vmem:[#allocation2 + $0x220] sm:$0xff]
        %v713 = vld [vmem:[#allocation2 + $0x228] sm:$0xff]
        %v714 = vld [vmem:[#allocation2 + $0x230] sm:$0xff]
        %v715 = vld [vmem:[#allocation2 + $0x238] sm:$0xff]
        %v716 = vld [vmem:[#allocation2 + $0x240] sm:$0xff]
        %v717 = vld [vmem:[#allocation2 + $0x248] sm:$0xff]
        %v718 = vld [vmem:[#allocation2 + $0x250] sm:$0xff]
        %v719 = vld [vmem:[#allocation2 + $0x258] sm:$0xff]
        %v720 = vld [vmem:[#allocation2 + $0x260] sm:$0xff]
        %v721 = vld [vmem:[#allocation2 + $0x268] sm:$0xff]
        %v722 = vld [vmem:[#allocation2 + $0x270] sm:$0xff]
        %v723 = vld [vmem:[#allocation2 + $0x278] sm:$0xff]
        %v724 = vld [vmem:[#allocation2 + $0x280] sm:$0xff]
        %v725 = vld [vmem:[#allocation2 + $0x288] sm:$0xff]
        %v726 = vld [vmem:[#allocation2 + $0x290] sm:$0xff]
        %v727 = vld [vmem:[#allocation2 + $0x298] sm:$0xff]
        %v728 = vld [vmem:[#allocation2 + $0x2a0] sm:$0xff]
        %v729 = vld [vmem:[#allocation2 + $0x2a8] sm:$0xff]
        %v730 = vld [vmem:[#allocation2 + $0x2b0] sm:$0xff]
        %v731 = vld [vmem:[#allocation2 + $0x2b8] sm:$0xff]
        %v732 = vld [vmem:[#allocation2 + $0x2c0] sm:$0xff]
        %v733 = vld [vmem:[#allocation2 + $0x2c8] sm:$0xff]
        %v734 = vld [vmem:[#allocation2 + $0x2d0] sm:$0xff]
        %v735 = vld [vmem:[#allocation2 + $0x2d8] sm:$0xff]
        %v736 = vld [vmem:[#allocation2 + $0x2e0] sm:$0xff]
        %v737 = vld [vmem:[#allocation2 + $0x2e8] sm:$0xff]
        %v738 = vld [vmem:[#allocation2 + $0x2f0] sm:$0xff]
        %v739 = vld [vmem:[#allocation2 + $0x2f8] sm:$0xff]
        %v740 = vld [vmem:[#allocation6] sm:$0xff]
        %v741 = vld [vmem:[#allocation6 + $0x8] sm:$0xff]
        %v742 = vld [vmem:[#allocation6 + $0x10] sm:$0xff]
        %v743 = vld [vmem:[#allocation6 + $0x18] sm:$0xff]
        %v744 = vld [vmem:[#allocation6 + $0x20] sm:$0xff]
        %v745 = vld [vmem:[#allocation6 + $0x28] sm:$0xff]
        %v746 = vld [vmem:[#allocation6 + $0x30] sm:$0xff]
        %v747 = vld [vmem:[#allocation6 + $0x38] sm:$0xff]
        %v748 = vld [vmem:[#allocation6 + $0x40] sm:$0xff]
        %v749 = vld [vmem:[#allocation6 + $0x48] sm:$0xff]
        %v750 = vld [vmem:[#allocation6 + $0x50] sm:$0xff]
        %v751 = vld [vmem:[#allocation6 + $0x58] sm:$0xff]
        %v752 = vld [vmem:[#allocation6 + $0x60] sm:$0xff]
        %v753 = vld [vmem:[#allocation6 + $0x68] sm:$0xff]
        %v754 = vld [vmem:[#allocation6 + $0x70] sm:$0xff]
        %v755 = vld [vmem:[#allocation6 + $0x78] sm:$0xff]
        %v756 = vld [vmem:[#allocation6 + $0x80] sm:$0xff]
        %v757 = vld [vmem:[#allocation6 + $0x88] sm:$0xff]
        %v758 = vld [vmem:[#allocation6 + $0x90] sm:$0xff]
        %v759 = vld [vmem:[#allocation6 + $0x98] sm:$0xff]
        %v760 = vld [vmem:[#allocation6 + $0xa0] sm:$0xff]
        %v761 = vld [vmem:[#allocation6 + $0xa8] sm:$0xff]
        %v762 = vld [vmem:[#allocation6 + $0xb0] sm:$0xff]
        %v763 = vld [vmem:[#allocation6 + $0xb8] sm:$0xff]
        %v764 = vld [vmem:[#allocation6 + $0xc0] sm:$0xff]
        %v765 = vld [vmem:[#allocation6 + $0xc8] sm:$0xff]
        %v766 = vld [vmem:[#allocation6 + $0xd0] sm:$0xff]
        %v767 = vld [vmem:[#allocation6 + $0xd8] sm:$0xff]
        %v768 = vld [vmem:[#allocation6 + $0xe0] sm:$0xff]
        %v769 = vld [vmem:[#allocation6 + $0xe8] sm:$0xff]
        %v770 = vld [vmem:[#allocation6 + $0xf0] sm:$0xff]
        %v771 = vld [vmem:[#allocation6 + $0xf8] sm:$0xff]
        %v772 = vld [vmem:[#allocation6 + $0x100] sm:$0xff]
        %v773 = vld [vmem:[#allocation6 + $0x108] sm:$0xff]
        %v774 = vld [vmem:[#allocation6 + $0x110] sm:$0xff]
        %v775 = vld [vmem:[#allocation6 + $0x118] sm:$0xff]
        %v776 = vld [vmem:[#allocation6 + $0x120] sm:$0xff]
        %v777 = vld [vmem:[#allocation6 + $0x128] sm:$0xff]
        %v778 = vld [vmem:[#allocation6 + $0x130] sm:$0xff]
        %v779 = vld [vmem:[#allocation6 + $0x138] sm:$0xff]
        %v780 = vld [vmem:[#allocation6 + $0x140] sm:$0xff]
        %v781 = vld [vmem:[#allocation6 + $0x148] sm:$0xff]
        %v782 = vld [vmem:[#allocation6 + $0x150] sm:$0xff]
        %v783 = vld [vmem:[#allocation6 + $0x158] sm:$0xff]
        %v784 = vld [vmem:[#allocation6 + $0x160] sm:$0xff]
        %v785 = vld [vmem:[#allocation6 + $0x168] sm:$0xff]
        %v786 = vld [vmem:[#allocation6 + $0x170] sm:$0xff]
        %v787 = vld [vmem:[#allocation6 + $0x178] sm:$0xff]
        %v788 = vld [vmem:[%s256] sm:$0xff]
        %v789 = vld [vmem:[%s256 + $0x8] sm:$0xff]
        %v790 = vld [vmem:[%s256 + $0x10] sm:$0xff]
        %v791 = vld [vmem:[%s256 + $0x18] sm:$0xff]
        %v792 = vld [vmem:[%s256 + $0x20] sm:$0xff]
        %v793 = vld [vmem:[%s256 + $0x28] sm:$0xff]
        %v794 = vld [vmem:[%s256 + $0x30] sm:$0xff]
        %v795 = vld [vmem:[%s256 + $0x38] sm:$0xff]
        %v796 = vld [vmem:[%s256 + $0x40] sm:$0xff]
        %v797 = vld [vmem:[%s256 + $0x48] sm:$0xff]
        %v798 = vld [vmem:[%s256 + $0x50] sm:$0xff]
        %v799 = vld [vmem:[%s256 + $0x58] sm:$0xff]
        %v800 = vld [vmem:[%s256 + $0x60] sm:$0xff]
        %v801 = vld [vmem:[%s256 + $0x68] sm:$0xff]
        %v802 = vld [vmem:[%s256 + $0x70] sm:$0xff]
        %v803 = vld [vmem:[%s256 + $0x78] sm:$0xff]
        %v804 = vld [vmem:[%s256 + $0x80] sm:$0xff]
        %v805 = vld [vmem:[%s256 + $0x88] sm:$0xff]
        %v806 = vld [vmem:[%s256 + $0x90] sm:$0xff]
        %v807 = vld [vmem:[%s256 + $0x98] sm:$0xff]
        %v808 = vld [vmem:[%s256 + $0xa0] sm:$0xff]
        %v809 = vld [vmem:[%s256 + $0xa8] sm:$0xff]
        %v810 = vld [vmem:[%s256 + $0xb0] sm:$0xff]
        %v811 = vld [vmem:[%s256 + $0xb8] sm:$0xff]
        %v812 = vld [vmem:[%s256 + $0xc0] sm:$0xff]
        %v813 = vld [vmem:[%s256 + $0xc8] sm:$0xff]
        %v814 = vld [vmem:[%s256 + $0xd0] sm:$0xff]
        %v815 = vld [vmem:[%s256 + $0xd8] sm:$0xff]
        %v816 = vld [vmem:[%s256 + $0xe0] sm:$0xff]
        %v817 = vld [vmem:[%s256 + $0xe8] sm:$0xff]
        %v818 = vld [vmem:[%s256 + $0xf0] sm:$0xff]
        %v819 = vld [vmem:[%s256 + $0xf8] sm:$0xff]
        %v820 = vld [vmem:[%s256 + $0x100] sm:$0xff]
        %v821 = vld [vmem:[%s256 + $0x108] sm:$0xff]
        %v822 = vld [vmem:[%s256 + $0x110] sm:$0xff]
        %v823 = vld [vmem:[%s256 + $0x118] sm:$0xff]
        %v824 = vld [vmem:[%s256 + $0x120] sm:$0xff]
        %v825 = vld [vmem:[%s256 + $0x128] sm:$0xff]
        %v826 = vld [vmem:[%s256 + $0x130] sm:$0xff]
        %v827 = vld [vmem:[%s256 + $0x138] sm:$0xff]
        %v828 = vld [vmem:[%s256 + $0x140] sm:$0xff]
        %v829 = vld [vmem:[%s256 + $0x148] sm:$0xff]
        %v830 = vld [vmem:[%s256 + $0x150] sm:$0xff]
        %v831 = vld [vmem:[%s256 + $0x158] sm:$0xff]
        %v832 = vld [vmem:[%s256 + $0x160] sm:$0xff]
        %v833 = vld [vmem:[%s256 + $0x168] sm:$0xff]
        %v834 = vld [vmem:[%s256 + $0x170] sm:$0xff]
        %v835 = vld [vmem:[%s256 + $0x178] sm:$0xff]
        %v836 = vld [vmem:[%s256 + $0x180] sm:$0xff]
        %v837 = vld [vmem:[%s256 + $0x188] sm:$0xff]
        %v838 = vld [vmem:[%s256 + $0x190] sm:$0xff]
        %v839 = vld [vmem:[%s256 + $0x198] sm:$0xff]
        %v840 = vld [vmem:[%s256 + $0x1a0] sm:$0xff]
        %v841 = vld [vmem:[%s256 + $0x1a8] sm:$0xff]
        %v842 = vld [vmem:[%s256 + $0x1b0] sm:$0xff]
        %v843 = vld [vmem:[%s256 + $0x1b8] sm:$0xff]
        %v844 = vld [vmem:[%s256 + $0x1c0] sm:$0xff]
        %v845 = vld [vmem:[%s256 + $0x1c8] sm:$0xff]
        %v846 = vld [vmem:[%s256 + $0x1d0] sm:$0xff]
        %v847 = vld [vmem:[%s256 + $0x1d8] sm:$0xff]
        %v848 = vld [vmem:[%s256 + $0x1e0] sm:$0xff]
        %v849 = vld [vmem:[%s256 + $0x1e8] sm:$0xff]
        %v850 = vld [vmem:[%s256 + $0x1f0] sm:$0xff]
        %v851 = vld [vmem:[%s256 + $0x1f8] sm:$0xff]
        %v852 = vld [vmem:[%s256 + $0x200] sm:$0xff]
        %v853 = vld [vmem:[%s256 + $0x208] sm:$0xff]
        %v854 = vld [vmem:[%s256 + $0x210] sm:$0xff]
        %v855 = vld [vmem:[%s256 + $0x218] sm:$0xff]
        %v856 = vld [vmem:[%s256 + $0x220] sm:$0xff]
        %v857 = vld [vmem:[%s256 + $0x228] sm:$0xff]
        %v858 = vld [vmem:[%s256 + $0x230] sm:$0xff]
        %v859 = vld [vmem:[%s256 + $0x238] sm:$0xff]
        %v860 = vld [vmem:[%s256 + $0x240] sm:$0xff]
        %v861 = vld [vmem:[%s256 + $0x248] sm:$0xff]
        %v862 = vld [vmem:[%s256 + $0x250] sm:$0xff]
        %v863 = vld [vmem:[%s256 + $0x258] sm:$0xff]
        %v864 = vld [vmem:[%s256 + $0x260] sm:$0xff]
        %v865 = vld [vmem:[%s256 + $0x268] sm:$0xff]
        %v866 = vld [vmem:[%s256 + $0x270] sm:$0xff]
        %v867 = vld [vmem:[%s256 + $0x278] sm:$0xff]
        %v868 = vld [vmem:[%s256 + $0x280] sm:$0xff]
        %v869 = vld [vmem:[%s256 + $0x288] sm:$0xff]
        %v870 = vld [vmem:[%s256 + $0x290] sm:$0xff]
        %v871 = vld [vmem:[%s256 + $0x298] sm:$0xff]
        %v872 = vld [vmem:[%s256 + $0x2a0] sm:$0xff]
        %v873 = vld [vmem:[%s256 + $0x2a8] sm:$0xff]
        %v874 = vld [vmem:[%s256 + $0x2b0] sm:$0xff]
        %v875 = vld [vmem:[%s256 + $0x2b8] sm:$0xff]
        %v876 = vld [vmem:[%s256 + $0x2c0] sm:$0xff]
        %v877 = vld [vmem:[%s256 + $0x2c8] sm:$0xff]
        %v878 = vld [vmem:[%s256 + $0x2d0] sm:$0xff]
        %v879 = vld [vmem:[%s256 + $0x2d8] sm:$0xff]
        %v880 = vld [vmem:[%s256 + $0x2e0] sm:$0xff]
        %v881 = vld [vmem:[%s256 + $0x2e8] sm:$0xff]
        %v882 = vld [vmem:[%s256 + $0x2f0] sm:$0xff]
        %v883 = vld [vmem:[%s256 + $0x2f8] sm:$0xff]
        %s884 = scalar_lea.vmem [#allocation6], 384
        %v885 = vld [vmem:[%s884] sm:$0xff]
        %v886 = vld [vmem:[%s884 + $0x8] sm:$0xff]
        %v887 = vld [vmem:[%s884 + $0x10] sm:$0xff]
        %v888 = vld [vmem:[%s884 + $0x18] sm:$0xff]
        %v889 = vld [vmem:[%s884 + $0x20] sm:$0xff]
        %v890 = vld [vmem:[%s884 + $0x28] sm:$0xff]
        %v891 = vld [vmem:[%s884 + $0x30] sm:$0xff]
        %v892 = vld [vmem:[%s884 + $0x38] sm:$0xff]
        %v893 = vld [vmem:[%s884 + $0x40] sm:$0xff]
        %v894 = vld [vmem:[%s884 + $0x48] sm:$0xff]
        %v895 = vld [vmem:[%s884 + $0x50] sm:$0xff]
        %v896 = vld [vmem:[%s884 + $0x58] sm:$0xff]
        %v897 = vld [vmem:[%s884 + $0x60] sm:$0xff]
        %v898 = vld [vmem:[%s884 + $0x68] sm:$0xff]
        %v899 = vld [vmem:[%s884 + $0x70] sm:$0xff]
        %v900 = vld [vmem:[%s884 + $0x78] sm:$0xff]
        %v901 = vld [vmem:[%s884 + $0x80] sm:$0xff]
        %v902 = vld [vmem:[%s884 + $0x88] sm:$0xff]
        %v903 = vld [vmem:[%s884 + $0x90] sm:$0xff]
        %v904 = vld [vmem:[%s884 + $0x98] sm:$0xff]
        %v905 = vld [vmem:[%s884 + $0xa0] sm:$0xff]
        %v906 = vld [vmem:[%s884 + $0xa8] sm:$0xff]
        %v907 = vld [vmem:[%s884 + $0xb0] sm:$0xff]
        %v908 = vld [vmem:[%s884 + $0xb8] sm:$0xff]
        %v909 = vld [vmem:[%s884 + $0xc0] sm:$0xff]
        %v910 = vld [vmem:[%s884 + $0xc8] sm:$0xff]
        %v911 = vld [vmem:[%s884 + $0xd0] sm:$0xff]
        %v912 = vld [vmem:[%s884 + $0xd8] sm:$0xff]
        %v913 = vld [vmem:[%s884 + $0xe0] sm:$0xff]
        %v914 = vld [vmem:[%s884 + $0xe8] sm:$0xff]
        %v915 = vld [vmem:[%s884 + $0xf0] sm:$0xff]
        %v916 = vld [vmem:[%s884 + $0xf8] sm:$0xff]
        %v917 = vld [vmem:[%s884 + $0x100] sm:$0xff]
        %v918 = vld [vmem:[%s884 + $0x108] sm:$0xff]
        %v919 = vld [vmem:[%s884 + $0x110] sm:$0xff]
        %v920 = vld [vmem:[%s884 + $0x118] sm:$0xff]
        %v921 = vld [vmem:[%s884 + $0x120] sm:$0xff]
        %v922 = vld [vmem:[%s884 + $0x128] sm:$0xff]
        %v923 = vld [vmem:[%s884 + $0x130] sm:$0xff]
        %v924 = vld [vmem:[%s884 + $0x138] sm:$0xff]
        %v925 = vld [vmem:[%s884 + $0x140] sm:$0xff]
        %v926 = vld [vmem:[%s884 + $0x148] sm:$0xff]
        %v927 = vld [vmem:[%s884 + $0x150] sm:$0xff]
        %v928 = vld [vmem:[%s884 + $0x158] sm:$0xff]
        %v929 = vld [vmem:[%s884 + $0x160] sm:$0xff]
        %v930 = vld [vmem:[%s884 + $0x168] sm:$0xff]
        %v931 = vld [vmem:[%s884 + $0x170] sm:$0xff]
        %v932 = vld [vmem:[%s884 + $0x178] sm:$0xff]
        %933 = vmatpush.msra.mxu0 %v900
        %934 = vmatpush.msra.mxu0 %v899
        %935 = vmatpush.msra.mxu0 %v898
        %936 = vmatpush.msra.mxu0 %v897
        %937 = vmatpush.msra.mxu0 %v896
        %938 = vmatpush.msra.mxu0 %v895
        %939 = vmatpush.msra.mxu0 %v894
        %940 = vmatpush.msra.mxu0 %v893
        %941 = vmatpush.msra.mxu0 %v892
        %942 = vmatpush.msra.mxu0 %v891
        %943 = vmatpush.msra.mxu0 %v890
        %944 = vmatpush.msra.mxu0 %v889
        %945 = vmatpush.msra.mxu0 %v888
        %946 = vmatpush.msra.mxu0 %v887
        %947 = vmatpush.msra.mxu0 %v886
        %948 = vmatpush.msra.mxu0 %v885
        %949 = vmatmul.f32.gmra.mxu0 %v788
        %v950 = vpop.f32.mrf.mxu0
        %v951 = vadd.f32 0.0, %v950
        %952 = vmatmul.f32.gmra.mxu0 %v791
        %v953 = vpop.f32.mrf.mxu0
        %v954 = vadd.f32 0.0, %v953
        %955 = vmatmul.f32.gmra.mxu0 %v794
        %v956 = vpop.f32.mrf.mxu0
        %v957 = vadd.f32 0.0, %v956
        %958 = vmatmul.f32.gmra.mxu0 %v797
        %v959 = vpop.f32.mrf.mxu0
        %v960 = vadd.f32 0.0, %v959
        %961 = vmatmul.f32.gmra.mxu0 %v800
        %v962 = vpop.f32.mrf.mxu0
        %v963 = vadd.f32 0.0, %v962
        %964 = vmatmul.f32.gmra.mxu0 %v803
        %v965 = vpop.f32.mrf.mxu0
        %v966 = vadd.f32 0.0, %v965
        %967 = vmatmul.f32.gmra.mxu0 %v806
        %v968 = vpop.f32.mrf.mxu0
        %v969 = vadd.f32 0.0, %v968
        %970 = vmatmul.f32.gmra.mxu0 %v809
        %v971 = vpop.f32.mrf.mxu0
        %v972 = vadd.f32 0.0, %v971
        %973 = vmatmul.f32.gmra.mxu0 %v812
        %v974 = vpop.f32.mrf.mxu0
        %v975 = vadd.f32 0.0, %v974
        %976 = vmatmul.f32.gmra.mxu0 %v815
        %v977 = vpop.f32.mrf.mxu0
        %v978 = vadd.f32 0.0, %v977
        %979 = vmatmul.f32.gmra.mxu0 %v818
        %v980 = vpop.f32.mrf.mxu0
        %v981 = vadd.f32 0.0, %v980
        %982 = vmatmul.f32.gmra.mxu0 %v821
        %v983 = vpop.f32.mrf.mxu0
        %v984 = vadd.f32 0.0, %v983
        %985 = vmatmul.f32.gmra.mxu0 %v824
        %v986 = vpop.f32.mrf.mxu0
        %v987 = vadd.f32 0.0, %v986
        %988 = vmatmul.f32.gmra.mxu0 %v827
        %v989 = vpop.f32.mrf.mxu0
        %v990 = vadd.f32 0.0, %v989
        %991 = vmatmul.f32.gmra.mxu0 %v830
        %v992 = vpop.f32.mrf.mxu0
        %v993 = vadd.f32 0.0, %v992
        %994 = vmatmul.f32.gmra.mxu0 %v833
        %v995 = vpop.f32.mrf.mxu0
        %v996 = vadd.f32 0.0, %v995
        %997 = vmatmul.f32.gmra.mxu0 %v836
        %v998 = vpop.f32.mrf.mxu0
        %v999 = vadd.f32 0.0, %v998
        %1000 = vmatmul.f32.gmra.mxu0 %v839
        %v1001 = vpop.f32.mrf.mxu0
        %v1002 = vadd.f32 0.0, %v1001
        %1003 = vmatmul.f32.gmra.mxu0 %v842
        %v1004 = vpop.f32.mrf.mxu0
        %v1005 = vadd.f32 0.0, %v1004
        %1006 = vmatmul.f32.gmra.mxu0 %v845
        %v1007 = vpop.f32.mrf.mxu0
        %v1008 = vadd.f32 0.0, %v1007
        %1009 = vmatmul.f32.gmra.mxu0 %v848
        %v1010 = vpop.f32.mrf.mxu0
        %v1011 = vadd.f32 0.0, %v1010
        %1012 = vmatmul.f32.gmra.mxu0 %v851
        %v1013 = vpop.f32.mrf.mxu0
        %v1014 = vadd.f32 0.0, %v1013
        %1015 = vmatmul.f32.gmra.mxu0 %v854
        %v1016 = vpop.f32.mrf.mxu0
        %v1017 = vadd.f32 0.0, %v1016
        %1018 = vmatmul.f32.gmra.mxu0 %v857
        %v1019 = vpop.f32.mrf.mxu0
        %v1020 = vadd.f32 0.0, %v1019
        %1021 = vmatmul.f32.gmra.mxu0 %v860
        %v1022 = vpop.f32.mrf.mxu0
        %v1023 = vadd.f32 0.0, %v1022
        %1024 = vmatmul.f32.gmra.mxu0 %v863
        %v1025 = vpop.f32.mrf.mxu0
        %v1026 = vadd.f32 0.0, %v1025
        %1027 = vmatmul.f32.gmra.mxu0 %v866
        %v1028 = vpop.f32.mrf.mxu0
        %v1029 = vadd.f32 0.0, %v1028
        %1030 = vmatmul.f32.gmra.mxu0 %v869
        %v1031 = vpop.f32.mrf.mxu0
        %v1032 = vadd.f32 0.0, %v1031
        %1033 = vmatmul.f32.gmra.mxu0 %v872
        %v1034 = vpop.f32.mrf.mxu0
        %v1035 = vadd.f32 0.0, %v1034
        %1036 = vmatmul.f32.gmra.mxu0 %v875
        %v1037 = vpop.f32.mrf.mxu0
        %v1038 = vadd.f32 0.0, %v1037
        %1039 = vmatmul.f32.gmra.mxu0 %v878
        %v1040 = vpop.f32.mrf.mxu0
        %v1041 = vadd.f32 0.0, %v1040
        %1042 = vmatmul.f32.gmra.mxu0 %v881
        %v1043 = vpop.f32.mrf.mxu0
        %v1044 = vadd.f32 0.0, %v1043
        %1045 = vdwg.mxu0
        %1046 = vmatpush.msra.mxu0 %v916
        %1047 = vmatpush.msra.mxu0 %v915
        %1048 = vmatpush.msra.mxu0 %v914
        %1049 = vmatpush.msra.mxu0 %v913
        %1050 = vmatpush.msra.mxu0 %v912
        %1051 = vmatpush.msra.mxu0 %v911
        %1052 = vmatpush.msra.mxu0 %v910
        %1053 = vmatpush.msra.mxu0 %v909
        %1054 = vmatpush.msra.mxu0 %v908
        %1055 = vmatpush.msra.mxu0 %v907
        %1056 = vmatpush.msra.mxu0 %v906
        %1057 = vmatpush.msra.mxu0 %v905
        %1058 = vmatpush.msra.mxu0 %v904
        %1059 = vmatpush.msra.mxu0 %v903
        %1060 = vmatpush.msra.mxu0 %v902
        %1061 = vmatpush.msra.mxu0 %v901
        %1062 = vmatmul.f32.gmra.mxu0 %v789
        %v1063 = vpop.f32.mrf.mxu0
        %v1064 = vadd.f32 %v951, %v1063
        %1065 = vmatmul.f32.gmra.mxu0 %v792
        %v1066 = vpop.f32.mrf.mxu0
        %v1067 = vadd.f32 %v954, %v1066
        %1068 = vmatmul.f32.gmra.mxu0 %v795
        %v1069 = vpop.f32.mrf.mxu0
        %v1070 = vadd.f32 %v957, %v1069
        %1071 = vmatmul.f32.gmra.mxu0 %v798
        %v1072 = vpop.f32.mrf.mxu0
        %v1073 = vadd.f32 %v960, %v1072
        %1074 = vmatmul.f32.gmra.mxu0 %v801
        %v1075 = vpop.f32.mrf.mxu0
        %v1076 = vadd.f32 %v963, %v1075
        %1077 = vmatmul.f32.gmra.mxu0 %v804
        %v1078 = vpop.f32.mrf.mxu0
        %v1079 = vadd.f32 %v966, %v1078
        %1080 = vmatmul.f32.gmra.mxu0 %v807
        %v1081 = vpop.f32.mrf.mxu0
        %v1082 = vadd.f32 %v969, %v1081
        %1083 = vmatmul.f32.gmra.mxu0 %v810
        %v1084 = vpop.f32.mrf.mxu0
        %v1085 = vadd.f32 %v972, %v1084
        %1086 = vmatmul.f32.gmra.mxu0 %v813
        %v1087 = vpop.f32.mrf.mxu0
        %v1088 = vadd.f32 %v975, %v1087
        %1089 = vmatmul.f32.gmra.mxu0 %v816
        %v1090 = vpop.f32.mrf.mxu0
        %v1091 = vadd.f32 %v978, %v1090
        %1092 = vmatmul.f32.gmra.mxu0 %v819
        %v1093 = vpop.f32.mrf.mxu0
        %v1094 = vadd.f32 %v981, %v1093
        %1095 = vmatmul.f32.gmra.mxu0 %v822
        %v1096 = vpop.f32.mrf.mxu0
        %v1097 = vadd.f32 %v984, %v1096
        %1098 = vmatmul.f32.gmra.mxu0 %v825
        %v1099 = vpop.f32.mrf.mxu0
        %v1100 = vadd.f32 %v987, %v1099
        %1101 = vmatmul.f32.gmra.mxu0 %v828
        %v1102 = vpop.f32.mrf.mxu0
        %v1103 = vadd.f32 %v990, %v1102
        %1104 = vmatmul.f32.gmra.mxu0 %v831
        %v1105 = vpop.f32.mrf.mxu0
        %v1106 = vadd.f32 %v993, %v1105
        %1107 = vmatmul.f32.gmra.mxu0 %v834
        %v1108 = vpop.f32.mrf.mxu0
        %v1109 = vadd.f32 %v996, %v1108
        %1110 = vmatmul.f32.gmra.mxu0 %v837
        %v1111 = vpop.f32.mrf.mxu0
        %v1112 = vadd.f32 %v999, %v1111
        %1113 = vmatmul.f32.gmra.mxu0 %v840
        %v1114 = vpop.f32.mrf.mxu0
        %v1115 = vadd.f32 %v1002, %v1114
        %1116 = vmatmul.f32.gmra.mxu0 %v843
        %v1117 = vpop.f32.mrf.mxu0
        %v1118 = vadd.f32 %v1005, %v1117
        %1119 = vmatmul.f32.gmra.mxu0 %v846
        %v1120 = vpop.f32.mrf.mxu0
        %v1121 = vadd.f32 %v1008, %v1120
        %1122 = vmatmul.f32.gmra.mxu0 %v849
        %v1123 = vpop.f32.mrf.mxu0
        %v1124 = vadd.f32 %v1011, %v1123
        %1125 = vmatmul.f32.gmra.mxu0 %v852
        %v1126 = vpop.f32.mrf.mxu0
        %v1127 = vadd.f32 %v1014, %v1126
        %1128 = vmatmul.f32.gmra.mxu0 %v855
        %v1129 = vpop.f32.mrf.mxu0
        %v1130 = vadd.f32 %v1017, %v1129
        %1131 = vmatmul.f32.gmra.mxu0 %v858
        %v1132 = vpop.f32.mrf.mxu0
        %v1133 = vadd.f32 %v1020, %v1132
        %1134 = vmatmul.f32.gmra.mxu0 %v861
        %v1135 = vpop.f32.mrf.mxu0
        %v1136 = vadd.f32 %v1023, %v1135
        %1137 = vmatmul.f32.gmra.mxu0 %v864
        %v1138 = vpop.f32.mrf.mxu0
        %v1139 = vadd.f32 %v1026, %v1138
        %1140 = vmatmul.f32.gmra.mxu0 %v867
        %v1141 = vpop.f32.mrf.mxu0
        %v1142 = vadd.f32 %v1029, %v1141
        %1143 = vmatmul.f32.gmra.mxu0 %v870
        %v1144 = vpop.f32.mrf.mxu0
        %v1145 = vadd.f32 %v1032, %v1144
        %1146 = vmatmul.f32.gmra.mxu0 %v873
        %v1147 = vpop.f32.mrf.mxu0
        %v1148 = vadd.f32 %v1035, %v1147
        %1149 = vmatmul.f32.gmra.mxu0 %v876
        %v1150 = vpop.f32.mrf.mxu0
        %v1151 = vadd.f32 %v1038, %v1150
        %1152 = vmatmul.f32.gmra.mxu0 %v879
        %v1153 = vpop.f32.mrf.mxu0
        %v1154 = vadd.f32 %v1041, %v1153
        %1155 = vmatmul.f32.gmra.mxu0 %v882
        %v1156 = vpop.f32.mrf.mxu0
        %v1157 = vadd.f32 %v1044, %v1156
        %1158 = vdwg.mxu0
        %1159 = vmatpush.msra.mxu0 %v932
        %1160 = vmatpush.msra.mxu0 %v931
        %1161 = vmatpush.msra.mxu0 %v930
        %1162 = vmatpush.msra.mxu0 %v929
        %1163 = vmatpush.msra.mxu0 %v928
        %1164 = vmatpush.msra.mxu0 %v927
        %1165 = vmatpush.msra.mxu0 %v926
        %1166 = vmatpush.msra.mxu0 %v925
        %1167 = vmatpush.msra.mxu0 %v924
        %1168 = vmatpush.msra.mxu0 %v923
        %1169 = vmatpush.msra.mxu0 %v922
        %1170 = vmatpush.msra.mxu0 %v921
        %1171 = vmatpush.msra.mxu0 %v920
        %1172 = vmatpush.msra.mxu0 %v919
        %1173 = vmatpush.msra.mxu0 %v918
        %1174 = vmatpush.msra.mxu0 %v917
        %1175 = vmatmul.f32.gmra.mxu0 %v790
        %v1176 = vpop.f32.mrf.mxu0
        %v1177 = vadd.f32 %v1064, %v1176
        %1178 = vmatmul.f32.gmra.mxu0 %v793
        %v1179 = vpop.f32.mrf.mxu0
        %v1180 = vadd.f32 %v1067, %v1179
        %1181 = vmatmul.f32.gmra.mxu0 %v796
        %v1182 = vpop.f32.mrf.mxu0
        %v1183 = vadd.f32 %v1070, %v1182
        %1184 = vmatmul.f32.gmra.mxu0 %v799
        %v1185 = vpop.f32.mrf.mxu0
        %v1186 = vadd.f32 %v1073, %v1185
        %1187 = vmatmul.f32.gmra.mxu0 %v802
        %v1188 = vpop.f32.mrf.mxu0
        %v1189 = vadd.f32 %v1076, %v1188
        %1190 = vmatmul.f32.gmra.mxu0 %v805
        %v1191 = vpop.f32.mrf.mxu0
        %v1192 = vadd.f32 %v1079, %v1191
        %1193 = vmatmul.f32.gmra.mxu0 %v808
        %v1194 = vpop.f32.mrf.mxu0
        %v1195 = vadd.f32 %v1082, %v1194
        %1196 = vmatmul.f32.gmra.mxu0 %v811
        %v1197 = vpop.f32.mrf.mxu0
        %v1198 = vadd.f32 %v1085, %v1197
        %1199 = vmatmul.f32.gmra.mxu0 %v814
        %v1200 = vpop.f32.mrf.mxu0
        %v1201 = vadd.f32 %v1088, %v1200
        %1202 = vmatmul.f32.gmra.mxu0 %v817
        %v1203 = vpop.f32.mrf.mxu0
        %v1204 = vadd.f32 %v1091, %v1203
        %1205 = vmatmul.f32.gmra.mxu0 %v820
        %v1206 = vpop.f32.mrf.mxu0
        %v1207 = vadd.f32 %v1094, %v1206
        %1208 = vmatmul.f32.gmra.mxu0 %v823
        %v1209 = vpop.f32.mrf.mxu0
        %v1210 = vadd.f32 %v1097, %v1209
        %1211 = vmatmul.f32.gmra.mxu0 %v826
        %v1212 = vpop.f32.mrf.mxu0
        %v1213 = vadd.f32 %v1100, %v1212
        %1214 = vmatmul.f32.gmra.mxu0 %v829
        %v1215 = vpop.f32.mrf.mxu0
        %v1216 = vadd.f32 %v1103, %v1215
        %1217 = vmatmul.f32.gmra.mxu0 %v832
        %v1218 = vpop.f32.mrf.mxu0
        %v1219 = vadd.f32 %v1106, %v1218
        %1220 = vmatmul.f32.gmra.mxu0 %v835
        %v1221 = vpop.f32.mrf.mxu0
        %v1222 = vadd.f32 %v1109, %v1221
        %1223 = vmatmul.f32.gmra.mxu0 %v838
        %v1224 = vpop.f32.mrf.mxu0
        %v1225 = vadd.f32 %v1112, %v1224
        %1226 = vmatmul.f32.gmra.mxu0 %v841
        %v1227 = vpop.f32.mrf.mxu0
        %v1228 = vadd.f32 %v1115, %v1227
        %1229 = vmatmul.f32.gmra.mxu0 %v844
        %v1230 = vpop.f32.mrf.mxu0
        %v1231 = vadd.f32 %v1118, %v1230
        %1232 = vmatmul.f32.gmra.mxu0 %v847
        %v1233 = vpop.f32.mrf.mxu0
        %v1234 = vadd.f32 %v1121, %v1233
        %1235 = vmatmul.f32.gmra.mxu0 %v850
        %v1236 = vpop.f32.mrf.mxu0
        %v1237 = vadd.f32 %v1124, %v1236
        %1238 = vmatmul.f32.gmra.mxu0 %v853
        %v1239 = vpop.f32.mrf.mxu0
        %v1240 = vadd.f32 %v1127, %v1239
        %1241 = vmatmul.f32.gmra.mxu0 %v856
        %v1242 = vpop.f32.mrf.mxu0
        %v1243 = vadd.f32 %v1130, %v1242
        %1244 = vmatmul.f32.gmra.mxu0 %v859
        %v1245 = vpop.f32.mrf.mxu0
        %v1246 = vadd.f32 %v1133, %v1245
        %1247 = vmatmul.f32.gmra.mxu0 %v862
        %v1248 = vpop.f32.mrf.mxu0
        %v1249 = vadd.f32 %v1136, %v1248
        %1250 = vmatmul.f32.gmra.mxu0 %v865
        %v1251 = vpop.f32.mrf.mxu0
        %v1252 = vadd.f32 %v1139, %v1251
        %1253 = vmatmul.f32.gmra.mxu0 %v868
        %v1254 = vpop.f32.mrf.mxu0
        %v1255 = vadd.f32 %v1142, %v1254
        %1256 = vmatmul.f32.gmra.mxu0 %v871
        %v1257 = vpop.f32.mrf.mxu0
        %v1258 = vadd.f32 %v1145, %v1257
        %1259 = vmatmul.f32.gmra.mxu0 %v874
        %v1260 = vpop.f32.mrf.mxu0
        %v1261 = vadd.f32 %v1148, %v1260
        %1262 = vmatmul.f32.gmra.mxu0 %v877
        %v1263 = vpop.f32.mrf.mxu0
        %v1264 = vadd.f32 %v1151, %v1263
        %1265 = vmatmul.f32.gmra.mxu0 %v880
        %v1266 = vpop.f32.mrf.mxu0
        %v1267 = vadd.f32 %v1154, %v1266
        %1268 = vmatmul.f32.gmra.mxu0 %v883
        %v1269 = vpop.f32.mrf.mxu0
        %v1270 = vadd.f32 %v1157, %v1269
        %1271 = vdwg.mxu0
        %1272 = vmatpush.msra.mxu0 %v755
        %1273 = vmatpush.msra.mxu0 %v754
        %1274 = vmatpush.msra.mxu0 %v753
        %1275 = vmatpush.msra.mxu0 %v752
        %1276 = vmatpush.msra.mxu0 %v751
        %1277 = vmatpush.msra.mxu0 %v750
        %1278 = vmatpush.msra.mxu0 %v749
        %1279 = vmatpush.msra.mxu0 %v748
        %1280 = vmatpush.msra.mxu0 %v747
        %1281 = vmatpush.msra.mxu0 %v746
        %1282 = vmatpush.msra.mxu0 %v745
        %1283 = vmatpush.msra.mxu0 %v744
        %1284 = vmatpush.msra.mxu0 %v743
        %1285 = vmatpush.msra.mxu0 %v742
        %1286 = vmatpush.msra.mxu0 %v741
        %1287 = vmatpush.msra.mxu0 %v740
        %1288 = vmatmul.f32.gmra.mxu0 %v644
        %v1289 = vpop.f32.mrf.mxu0
        %v1290 = vadd.f32 %v1177, %v1289
        %1291 = vmatmul.f32.gmra.mxu0 %v647
        %v1292 = vpop.f32.mrf.mxu0
        %v1293 = vadd.f32 %v1180, %v1292
        %1294 = vmatmul.f32.gmra.mxu0 %v650
        %v1295 = vpop.f32.mrf.mxu0
        %v1296 = vadd.f32 %v1183, %v1295
        %1297 = vmatmul.f32.gmra.mxu0 %v653
        %v1298 = vpop.f32.mrf.mxu0
        %v1299 = vadd.f32 %v1186, %v1298
        %1300 = vmatmul.f32.gmra.mxu0 %v656
        %v1301 = vpop.f32.mrf.mxu0
        %v1302 = vadd.f32 %v1189, %v1301
        %1303 = vmatmul.f32.gmra.mxu0 %v659
        %v1304 = vpop.f32.mrf.mxu0
        %v1305 = vadd.f32 %v1192, %v1304
        %1306 = vmatmul.f32.gmra.mxu0 %v662
        %v1307 = vpop.f32.mrf.mxu0
        %v1308 = vadd.f32 %v1195, %v1307
        %1309 = vmatmul.f32.gmra.mxu0 %v665
        %v1310 = vpop.f32.mrf.mxu0
        %v1311 = vadd.f32 %v1198, %v1310
        %1312 = vmatmul.f32.gmra.mxu0 %v668
        %v1313 = vpop.f32.mrf.mxu0
        %v1314 = vadd.f32 %v1201, %v1313
        %1315 = vmatmul.f32.gmra.mxu0 %v671
        %v1316 = vpop.f32.mrf.mxu0
        %v1317 = vadd.f32 %v1204, %v1316
        %1318 = vmatmul.f32.gmra.mxu0 %v674
        %v1319 = vpop.f32.mrf.mxu0
        %v1320 = vadd.f32 %v1207, %v1319
        %1321 = vmatmul.f32.gmra.mxu0 %v677
        %v1322 = vpop.f32.mrf.mxu0
        %v1323 = vadd.f32 %v1210, %v1322
        %1324 = vmatmul.f32.gmra.mxu0 %v680
        %v1325 = vpop.f32.mrf.mxu0
        %v1326 = vadd.f32 %v1213, %v1325
        %1327 = vmatmul.f32.gmra.mxu0 %v683
        %v1328 = vpop.f32.mrf.mxu0
        %v1329 = vadd.f32 %v1216, %v1328
        %1330 = vmatmul.f32.gmra.mxu0 %v686
        %v1331 = vpop.f32.mrf.mxu0
        %v1332 = vadd.f32 %v1219, %v1331
        %1333 = vmatmul.f32.gmra.mxu0 %v689
        %v1334 = vpop.f32.mrf.mxu0
        %v1335 = vadd.f32 %v1222, %v1334
        %1336 = vmatmul.f32.gmra.mxu0 %v692
        %v1337 = vpop.f32.mrf.mxu0
        %v1338 = vadd.f32 %v1225, %v1337
        %1339 = vmatmul.f32.gmra.mxu0 %v695
        %v1340 = vpop.f32.mrf.mxu0
        %v1341 = vadd.f32 %v1228, %v1340
        %1342 = vmatmul.f32.gmra.mxu0 %v698
        %v1343 = vpop.f32.mrf.mxu0
        %v1344 = vadd.f32 %v1231, %v1343
        %1345 = vmatmul.f32.gmra.mxu0 %v701
        %v1346 = vpop.f32.mrf.mxu0
        %v1347 = vadd.f32 %v1234, %v1346
        %1348 = vmatmul.f32.gmra.mxu0 %v704
        %v1349 = vpop.f32.mrf.mxu0
        %v1350 = vadd.f32 %v1237, %v1349
        %1351 = vmatmul.f32.gmra.mxu0 %v707
        %v1352 = vpop.f32.mrf.mxu0
        %v1353 = vadd.f32 %v1240, %v1352
        %1354 = vmatmul.f32.gmra.mxu0 %v710
        %v1355 = vpop.f32.mrf.mxu0
        %v1356 = vadd.f32 %v1243, %v1355
        %1357 = vmatmul.f32.gmra.mxu0 %v713
        %v1358 = vpop.f32.mrf.mxu0
        %v1359 = vadd.f32 %v1246, %v1358
        %1360 = vmatmul.f32.gmra.mxu0 %v716
        %v1361 = vpop.f32.mrf.mxu0
        %v1362 = vadd.f32 %v1249, %v1361
        %1363 = vmatmul.f32.gmra.mxu0 %v719
        %v1364 = vpop.f32.mrf.mxu0
        %v1365 = vadd.f32 %v1252, %v1364
        %1366 = vmatmul.f32.gmra.mxu0 %v722
        %v1367 = vpop.f32.mrf.mxu0
        %v1368 = vadd.f32 %v1255, %v1367
        %1369 = vmatmul.f32.gmra.mxu0 %v725
        %v1370 = vpop.f32.mrf.mxu0
        %v1371 = vadd.f32 %v1258, %v1370
        %1372 = vmatmul.f32.gmra.mxu0 %v728
        %v1373 = vpop.f32.mrf.mxu0
        %v1374 = vadd.f32 %v1261, %v1373
        %1375 = vmatmul.f32.gmra.mxu0 %v731
        %v1376 = vpop.f32.mrf.mxu0
        %v1377 = vadd.f32 %v1264, %v1376
        %1378 = vmatmul.f32.gmra.mxu0 %v734
        %v1379 = vpop.f32.mrf.mxu0
        %v1380 = vadd.f32 %v1267, %v1379
        %1381 = vmatmul.f32.gmra.mxu0 %v737
        %v1382 = vpop.f32.mrf.mxu0
        %v1383 = vadd.f32 %v1270, %v1382
        %1384 = vdwg.mxu0
        %1385 = vmatpush.msra.mxu0 %v771
        %1386 = vmatpush.msra.mxu0 %v770
        %1387 = vmatpush.msra.mxu0 %v769
        %1388 = vmatpush.msra.mxu0 %v768
        %1389 = vmatpush.msra.mxu0 %v767
        %1390 = vmatpush.msra.mxu0 %v766
        %1391 = vmatpush.msra.mxu0 %v765
        %1392 = vmatpush.msra.mxu0 %v764
        %1393 = vmatpush.msra.mxu0 %v763
        %1394 = vmatpush.msra.mxu0 %v762
        %1395 = vmatpush.msra.mxu0 %v761
        %1396 = vmatpush.msra.mxu0 %v760
        %1397 = vmatpush.msra.mxu0 %v759
        %1398 = vmatpush.msra.mxu0 %v758
        %1399 = vmatpush.msra.mxu0 %v757
        %1400 = vmatpush.msra.mxu0 %v756
        %1401 = vmatmul.f32.gmra.mxu0 %v645
        %v1402 = vpop.f32.mrf.mxu0
        %v1403 = vadd.f32 %v1290, %v1402
        %1404 = vmatmul.f32.gmra.mxu0 %v648
        %v1405 = vpop.f32.mrf.mxu0
        %v1406 = vadd.f32 %v1293, %v1405
        %1407 = vmatmul.f32.gmra.mxu0 %v651
        %v1408 = vpop.f32.mrf.mxu0
        %v1409 = vadd.f32 %v1296, %v1408
        %1410 = vmatmul.f32.gmra.mxu0 %v654
        %v1411 = vpop.f32.mrf.mxu0
        %v1412 = vadd.f32 %v1299, %v1411
        %1413 = vmatmul.f32.gmra.mxu0 %v657
        %v1414 = vpop.f32.mrf.mxu0
        %v1415 = vadd.f32 %v1302, %v1414
        %1416 = vmatmul.f32.gmra.mxu0 %v660
        %v1417 = vpop.f32.mrf.mxu0
        %v1418 = vadd.f32 %v1305, %v1417
        %1419 = vmatmul.f32.gmra.mxu0 %v663
        %v1420 = vpop.f32.mrf.mxu0
        %v1421 = vadd.f32 %v1308, %v1420
        %1422 = vmatmul.f32.gmra.mxu0 %v666
        %v1423 = vpop.f32.mrf.mxu0
        %v1424 = vadd.f32 %v1311, %v1423
        %1425 = vmatmul.f32.gmra.mxu0 %v669
        %v1426 = vpop.f32.mrf.mxu0
        %v1427 = vadd.f32 %v1314, %v1426
        %1428 = vmatmul.f32.gmra.mxu0 %v672
        %v1429 = vpop.f32.mrf.mxu0
        %v1430 = vadd.f32 %v1317, %v1429
        %1431 = vmatmul.f32.gmra.mxu0 %v675
        %v1432 = vpop.f32.mrf.mxu0
        %v1433 = vadd.f32 %v1320, %v1432
        %1434 = vmatmul.f32.gmra.mxu0 %v678
        %v1435 = vpop.f32.mrf.mxu0
        %v1436 = vadd.f32 %v1323, %v1435
        %1437 = vmatmul.f32.gmra.mxu0 %v681
        %v1438 = vpop.f32.mrf.mxu0
        %v1439 = vadd.f32 %v1326, %v1438
        %1440 = vmatmul.f32.gmra.mxu0 %v684
        %v1441 = vpop.f32.mrf.mxu0
        %v1442 = vadd.f32 %v1329, %v1441
        %1443 = vmatmul.f32.gmra.mxu0 %v687
        %v1444 = vpop.f32.mrf.mxu0
        %v1445 = vadd.f32 %v1332, %v1444
        %1446 = vmatmul.f32.gmra.mxu0 %v690
        %v1447 = vpop.f32.mrf.mxu0
        %v1448 = vadd.f32 %v1335, %v1447
        %1449 = vmatmul.f32.gmra.mxu0 %v693
        %v1450 = vpop.f32.mrf.mxu0
        %v1451 = vadd.f32 %v1338, %v1450
        %1452 = vmatmul.f32.gmra.mxu0 %v696
        %v1453 = vpop.f32.mrf.mxu0
        %v1454 = vadd.f32 %v1341, %v1453
        %1455 = vmatmul.f32.gmra.mxu0 %v699
        %v1456 = vpop.f32.mrf.mxu0
        %v1457 = vadd.f32 %v1344, %v1456
        %1458 = vmatmul.f32.gmra.mxu0 %v702
        %v1459 = vpop.f32.mrf.mxu0
        %v1460 = vadd.f32 %v1347, %v1459
        %1461 = vmatmul.f32.gmra.mxu0 %v705
        %v1462 = vpop.f32.mrf.mxu0
        %v1463 = vadd.f32 %v1350, %v1462
        %1464 = vmatmul.f32.gmra.mxu0 %v708
        %v1465 = vpop.f32.mrf.mxu0
        %v1466 = vadd.f32 %v1353, %v1465
        %1467 = vmatmul.f32.gmra.mxu0 %v711
        %v1468 = vpop.f32.mrf.mxu0
        %v1469 = vadd.f32 %v1356, %v1468
        %1470 = vmatmul.f32.gmra.mxu0 %v714
        %v1471 = vpop.f32.mrf.mxu0
        %v1472 = vadd.f32 %v1359, %v1471
        %1473 = vmatmul.f32.gmra.mxu0 %v717
        %v1474 = vpop.f32.mrf.mxu0
        %v1475 = vadd.f32 %v1362, %v1474
        %1476 = vmatmul.f32.gmra.mxu0 %v720
        %v1477 = vpop.f32.mrf.mxu0
        %v1478 = vadd.f32 %v1365, %v1477
        %1479 = vmatmul.f32.gmra.mxu0 %v723
        %v1480 = vpop.f32.mrf.mxu0
        %v1481 = vadd.f32 %v1368, %v1480
        %1482 = vmatmul.f32.gmra.mxu0 %v726
        %v1483 = vpop.f32.mrf.mxu0
        %v1484 = vadd.f32 %v1371, %v1483
        %1485 = vmatmul.f32.gmra.mxu0 %v729
        %v1486 = vpop.f32.mrf.mxu0
        %v1487 = vadd.f32 %v1374, %v1486
        %1488 = vmatmul.f32.gmra.mxu0 %v732
        %v1489 = vpop.f32.mrf.mxu0
        %v1490 = vadd.f32 %v1377, %v1489
        %1491 = vmatmul.f32.gmra.mxu0 %v735
        %v1492 = vpop.f32.mrf.mxu0
        %v1493 = vadd.f32 %v1380, %v1492
        %1494 = vmatmul.f32.gmra.mxu0 %v738
        %v1495 = vpop.f32.mrf.mxu0
        %v1496 = vadd.f32 %v1383, %v1495
        %1497 = vdwg.mxu0
        %1498 = vmatpush.msra.mxu0 %v787
        %1499 = vmatpush.msra.mxu0 %v786
        %1500 = vmatpush.msra.mxu0 %v785
        %1501 = vmatpush.msra.mxu0 %v784
        %1502 = vmatpush.msra.mxu0 %v783
        %1503 = vmatpush.msra.mxu0 %v782
        %1504 = vmatpush.msra.mxu0 %v781
        %1505 = vmatpush.msra.mxu0 %v780
        %1506 = vmatpush.msra.mxu0 %v779
        %1507 = vmatpush.msra.mxu0 %v778
        %1508 = vmatpush.msra.mxu0 %v777
        %1509 = vmatpush.msra.mxu0 %v776
        %1510 = vmatpush.msra.mxu0 %v775
        %1511 = vmatpush.msra.mxu0 %v774
        %1512 = vmatpush.msra.mxu0 %v773
        %1513 = vmatpush.msra.mxu0 %v772
        %1514 = vmatmul.f32.gmra.mxu0 %v646
        %v1515 = vpop.f32.mrf.mxu0
        %v1516 = vadd.f32 %v1403, %v1515
        %1517 = vmatmul.f32.gmra.mxu0 %v649
        %v1518 = vpop.f32.mrf.mxu0
        %v1519 = vadd.f32 %v1406, %v1518
        %1520 = vmatmul.f32.gmra.mxu0 %v652
        %v1521 = vpop.f32.mrf.mxu0
        %v1522 = vadd.f32 %v1409, %v1521
        %1523 = vmatmul.f32.gmra.mxu0 %v655
        %v1524 = vpop.f32.mrf.mxu0
        %v1525 = vadd.f32 %v1412, %v1524
        %1526 = vmatmul.f32.gmra.mxu0 %v658
        %v1527 = vpop.f32.mrf.mxu0
        %v1528 = vadd.f32 %v1415, %v1527
        %1529 = vmatmul.f32.gmra.mxu0 %v661
        %v1530 = vpop.f32.mrf.mxu0
        %v1531 = vadd.f32 %v1418, %v1530
        %1532 = vmatmul.f32.gmra.mxu0 %v664
        %v1533 = vpop.f32.mrf.mxu0
        %v1534 = vadd.f32 %v1421, %v1533
        %1535 = vmatmul.f32.gmra.mxu0 %v667
        %v1536 = vpop.f32.mrf.mxu0
        %v1537 = vadd.f32 %v1424, %v1536
        %1538 = vmatmul.f32.gmra.mxu0 %v670
        %v1539 = vpop.f32.mrf.mxu0
        %v1540 = vadd.f32 %v1427, %v1539
        %1541 = vmatmul.f32.gmra.mxu0 %v673
        %v1542 = vpop.f32.mrf.mxu0
        %v1543 = vadd.f32 %v1430, %v1542
        %1544 = vmatmul.f32.gmra.mxu0 %v676
        %v1545 = vpop.f32.mrf.mxu0
        %v1546 = vadd.f32 %v1433, %v1545
        %1547 = vmatmul.f32.gmra.mxu0 %v679
        %v1548 = vpop.f32.mrf.mxu0
        %v1549 = vadd.f32 %v1436, %v1548
        %1550 = vmatmul.f32.gmra.mxu0 %v682
        %v1551 = vpop.f32.mrf.mxu0
        %v1552 = vadd.f32 %v1439, %v1551
        %1553 = vmatmul.f32.gmra.mxu0 %v685
        %v1554 = vpop.f32.mrf.mxu0
        %v1555 = vadd.f32 %v1442, %v1554
        %1556 = vmatmul.f32.gmra.mxu0 %v688
        %v1557 = vpop.f32.mrf.mxu0
        %v1558 = vadd.f32 %v1445, %v1557
        %1559 = vmatmul.f32.gmra.mxu0 %v691
        %v1560 = vpop.f32.mrf.mxu0
        %v1561 = vadd.f32 %v1448, %v1560
        %1562 = vmatmul.f32.gmra.mxu0 %v694
        %v1563 = vpop.f32.mrf.mxu0
        %v1564 = vadd.f32 %v1451, %v1563
        %1565 = vmatmul.f32.gmra.mxu0 %v697
        %v1566 = vpop.f32.mrf.mxu0
        %v1567 = vadd.f32 %v1454, %v1566
        %1568 = vmatmul.f32.gmra.mxu0 %v700
        %v1569 = vpop.f32.mrf.mxu0
        %v1570 = vadd.f32 %v1457, %v1569
        %1571 = vmatmul.f32.gmra.mxu0 %v703
        %v1572 = vpop.f32.mrf.mxu0
        %v1573 = vadd.f32 %v1460, %v1572
        %1574 = vmatmul.f32.gmra.mxu0 %v706
        %v1575 = vpop.f32.mrf.mxu0
        %v1576 = vadd.f32 %v1463, %v1575
        %1577 = vmatmul.f32.gmra.mxu0 %v709
        %v1578 = vpop.f32.mrf.mxu0
        %v1579 = vadd.f32 %v1466, %v1578
        %1580 = vmatmul.f32.gmra.mxu0 %v712
        %v1581 = vpop.f32.mrf.mxu0
        %v1582 = vadd.f32 %v1469, %v1581
        %1583 = vmatmul.f32.gmra.mxu0 %v715
        %v1584 = vpop.f32.mrf.mxu0
        %v1585 = vadd.f32 %v1472, %v1584
        %1586 = vmatmul.f32.gmra.mxu0 %v718
        %v1587 = vpop.f32.mrf.mxu0
        %v1588 = vadd.f32 %v1475, %v1587
        %1589 = vmatmul.f32.gmra.mxu0 %v721
        %v1590 = vpop.f32.mrf.mxu0
        %v1591 = vadd.f32 %v1478, %v1590
        %1592 = vmatmul.f32.gmra.mxu0 %v724
        %v1593 = vpop.f32.mrf.mxu0
        %v1594 = vadd.f32 %v1481, %v1593
        %1595 = vmatmul.f32.gmra.mxu0 %v727
        %v1596 = vpop.f32.mrf.mxu0
        %v1597 = vadd.f32 %v1484, %v1596
        %1598 = vmatmul.f32.gmra.mxu0 %v730
        %v1599 = vpop.f32.mrf.mxu0
        %v1600 = vadd.f32 %v1487, %v1599
        %1601 = vmatmul.f32.gmra.mxu0 %v733
        %v1602 = vpop.f32.mrf.mxu0
        %v1603 = vadd.f32 %v1490, %v1602
        %1604 = vmatmul.f32.gmra.mxu0 %v736
        %v1605 = vpop.f32.mrf.mxu0
        %v1606 = vadd.f32 %v1493, %v1605
        %1607 = vmatmul.f32.gmra.mxu0 %v739
        %v1608 = vpop.f32.mrf.mxu0
        %v1609 = vadd.f32 %v1496, %v1608
        %1610 = vdwg.mxu0
        %s1611 = scalar_lea.vmem [#allocation2], 96
        %v1612 = vld [vmem:[%s1611] sm:$0xff]
        %v1613 = vld [vmem:[%s1611 + $0x8] sm:$0xff]
        %v1614 = vld [vmem:[%s1611 + $0x10] sm:$0xff]
        %v1615 = vld [vmem:[%s1611 + $0x18] sm:$0xff]
        %v1616 = vld [vmem:[%s1611 + $0x20] sm:$0xff]
        %v1617 = vld [vmem:[%s1611 + $0x28] sm:$0xff]
        %v1618 = vld [vmem:[%s1611 + $0x30] sm:$0xff]
        %v1619 = vld [vmem:[%s1611 + $0x38] sm:$0xff]
        %v1620 = vld [vmem:[%s1611 + $0x40] sm:$0xff]
        %v1621 = vld [vmem:[%s1611 + $0x48] sm:$0xff]
        %v1622 = vld [vmem:[%s1611 + $0x50] sm:$0xff]
        %v1623 = vld [vmem:[%s1611 + $0x58] sm:$0xff]
        %v1624 = vld [vmem:[%s1611 + $0x60] sm:$0xff]
        %v1625 = vld [vmem:[%s1611 + $0x68] sm:$0xff]
        %v1626 = vld [vmem:[%s1611 + $0x70] sm:$0xff]
        %v1627 = vld [vmem:[%s1611 + $0x78] sm:$0xff]
        %v1628 = vld [vmem:[%s1611 + $0x80] sm:$0xff]
        %v1629 = vld [vmem:[%s1611 + $0x88] sm:$0xff]
        %v1630 = vld [vmem:[%s1611 + $0x90] sm:$0xff]
        %v1631 = vld [vmem:[%s1611 + $0x98] sm:$0xff]
        %v1632 = vld [vmem:[%s1611 + $0xa0] sm:$0xff]
        %v1633 = vld [vmem:[%s1611 + $0xa8] sm:$0xff]
        %v1634 = vld [vmem:[%s1611 + $0xb0] sm:$0xff]
        %v1635 = vld [vmem:[%s1611 + $0xb8] sm:$0xff]
        %v1636 = vld [vmem:[%s1611 + $0xc0] sm:$0xff]
        %v1637 = vld [vmem:[%s1611 + $0xc8] sm:$0xff]
        %v1638 = vld [vmem:[%s1611 + $0xd0] sm:$0xff]
        %v1639 = vld [vmem:[%s1611 + $0xd8] sm:$0xff]
        %v1640 = vld [vmem:[%s1611 + $0xe0] sm:$0xff]
        %v1641 = vld [vmem:[%s1611 + $0xe8] sm:$0xff]
        %v1642 = vld [vmem:[%s1611 + $0xf0] sm:$0xff]
        %v1643 = vld [vmem:[%s1611 + $0xf8] sm:$0xff]
        %v1644 = vld [vmem:[%s1611 + $0x100] sm:$0xff]
        %v1645 = vld [vmem:[%s1611 + $0x108] sm:$0xff]
        %v1646 = vld [vmem:[%s1611 + $0x110] sm:$0xff]
        %v1647 = vld [vmem:[%s1611 + $0x118] sm:$0xff]
        %v1648 = vld [vmem:[%s1611 + $0x120] sm:$0xff]
        %v1649 = vld [vmem:[%s1611 + $0x128] sm:$0xff]
        %v1650 = vld [vmem:[%s1611 + $0x130] sm:$0xff]
        %v1651 = vld [vmem:[%s1611 + $0x138] sm:$0xff]
        %v1652 = vld [vmem:[%s1611 + $0x140] sm:$0xff]
        %v1653 = vld [vmem:[%s1611 + $0x148] sm:$0xff]
        %v1654 = vld [vmem:[%s1611 + $0x150] sm:$0xff]
        %v1655 = vld [vmem:[%s1611 + $0x158] sm:$0xff]
        %v1656 = vld [vmem:[%s1611 + $0x160] sm:$0xff]
        %v1657 = vld [vmem:[%s1611 + $0x168] sm:$0xff]
        %v1658 = vld [vmem:[%s1611 + $0x170] sm:$0xff]
        %v1659 = vld [vmem:[%s1611 + $0x178] sm:$0xff]
        %v1660 = vld [vmem:[%s1611 + $0x180] sm:$0xff]
        %v1661 = vld [vmem:[%s1611 + $0x188] sm:$0xff]
        %v1662 = vld [vmem:[%s1611 + $0x190] sm:$0xff]
        %v1663 = vld [vmem:[%s1611 + $0x198] sm:$0xff]
        %v1664 = vld [vmem:[%s1611 + $0x1a0] sm:$0xff]
        %v1665 = vld [vmem:[%s1611 + $0x1a8] sm:$0xff]
        %v1666 = vld [vmem:[%s1611 + $0x1b0] sm:$0xff]
        %v1667 = vld [vmem:[%s1611 + $0x1b8] sm:$0xff]
        %v1668 = vld [vmem:[%s1611 + $0x1c0] sm:$0xff]
        %v1669 = vld [vmem:[%s1611 + $0x1c8] sm:$0xff]
        %v1670 = vld [vmem:[%s1611 + $0x1d0] sm:$0xff]
        %v1671 = vld [vmem:[%s1611 + $0x1d8] sm:$0xff]
        %v1672 = vld [vmem:[%s1611 + $0x1e0] sm:$0xff]
        %v1673 = vld [vmem:[%s1611 + $0x1e8] sm:$0xff]
        %v1674 = vld [vmem:[%s1611 + $0x1f0] sm:$0xff]
        %v1675 = vld [vmem:[%s1611 + $0x1f8] sm:$0xff]
        %v1676 = vld [vmem:[%s1611 + $0x200] sm:$0xff]
        %v1677 = vld [vmem:[%s1611 + $0x208] sm:$0xff]
        %v1678 = vld [vmem:[%s1611 + $0x210] sm:$0xff]
        %v1679 = vld [vmem:[%s1611 + $0x218] sm:$0xff]
        %v1680 = vld [vmem:[%s1611 + $0x220] sm:$0xff]
        %v1681 = vld [vmem:[%s1611 + $0x228] sm:$0xff]
        %v1682 = vld [vmem:[%s1611 + $0x230] sm:$0xff]
        %v1683 = vld [vmem:[%s1611 + $0x238] sm:$0xff]
        %v1684 = vld [vmem:[%s1611 + $0x240] sm:$0xff]
        %v1685 = vld [vmem:[%s1611 + $0x248] sm:$0xff]
        %v1686 = vld [vmem:[%s1611 + $0x250] sm:$0xff]
        %v1687 = vld [vmem:[%s1611 + $0x258] sm:$0xff]
        %v1688 = vld [vmem:[%s1611 + $0x260] sm:$0xff]
        %v1689 = vld [vmem:[%s1611 + $0x268] sm:$0xff]
        %v1690 = vld [vmem:[%s1611 + $0x270] sm:$0xff]
        %v1691 = vld [vmem:[%s1611 + $0x278] sm:$0xff]
        %v1692 = vld [vmem:[%s1611 + $0x280] sm:$0xff]
        %v1693 = vld [vmem:[%s1611 + $0x288] sm:$0xff]
        %v1694 = vld [vmem:[%s1611 + $0x290] sm:$0xff]
        %v1695 = vld [vmem:[%s1611 + $0x298] sm:$0xff]
        %v1696 = vld [vmem:[%s1611 + $0x2a0] sm:$0xff]
        %v1697 = vld [vmem:[%s1611 + $0x2a8] sm:$0xff]
        %v1698 = vld [vmem:[%s1611 + $0x2b0] sm:$0xff]
        %v1699 = vld [vmem:[%s1611 + $0x2b8] sm:$0xff]
        %v1700 = vld [vmem:[%s1611 + $0x2c0] sm:$0xff]
        %v1701 = vld [vmem:[%s1611 + $0x2c8] sm:$0xff]
        %v1702 = vld [vmem:[%s1611 + $0x2d0] sm:$0xff]
        %v1703 = vld [vmem:[%s1611 + $0x2d8] sm:$0xff]
        %v1704 = vld [vmem:[%s1611 + $0x2e0] sm:$0xff]
        %v1705 = vld [vmem:[%s1611 + $0x2e8] sm:$0xff]
        %v1706 = vld [vmem:[%s1611 + $0x2f0] sm:$0xff]
        %v1707 = vld [vmem:[%s1611 + $0x2f8] sm:$0xff]
        %s1708 = scalar_lea.vmem [#allocation6], 768
        %v1709 = vld [vmem:[%s1708] sm:$0xff]
        %v1710 = vld [vmem:[%s1708 + $0x8] sm:$0xff]
        %v1711 = vld [vmem:[%s1708 + $0x10] sm:$0xff]
        %v1712 = vld [vmem:[%s1708 + $0x18] sm:$0xff]
        %v1713 = vld [vmem:[%s1708 + $0x20] sm:$0xff]
        %v1714 = vld [vmem:[%s1708 + $0x28] sm:$0xff]
        %v1715 = vld [vmem:[%s1708 + $0x30] sm:$0xff]
        %v1716 = vld [vmem:[%s1708 + $0x38] sm:$0xff]
        %v1717 = vld [vmem:[%s1708 + $0x40] sm:$0xff]
        %v1718 = vld [vmem:[%s1708 + $0x48] sm:$0xff]
        %v1719 = vld [vmem:[%s1708 + $0x50] sm:$0xff]
        %v1720 = vld [vmem:[%s1708 + $0x58] sm:$0xff]
        %v1721 = vld [vmem:[%s1708 + $0x60] sm:$0xff]
        %v1722 = vld [vmem:[%s1708 + $0x68] sm:$0xff]
        %v1723 = vld [vmem:[%s1708 + $0x70] sm:$0xff]
        %v1724 = vld [vmem:[%s1708 + $0x78] sm:$0xff]
        %v1725 = vld [vmem:[%s1708 + $0x80] sm:$0xff]
        %v1726 = vld [vmem:[%s1708 + $0x88] sm:$0xff]
        %v1727 = vld [vmem:[%s1708 + $0x90] sm:$0xff]
        %v1728 = vld [vmem:[%s1708 + $0x98] sm:$0xff]
        %v1729 = vld [vmem:[%s1708 + $0xa0] sm:$0xff]
        %v1730 = vld [vmem:[%s1708 + $0xa8] sm:$0xff]
        %v1731 = vld [vmem:[%s1708 + $0xb0] sm:$0xff]
        %v1732 = vld [vmem:[%s1708 + $0xb8] sm:$0xff]
        %v1733 = vld [vmem:[%s1708 + $0xc0] sm:$0xff]
        %v1734 = vld [vmem:[%s1708 + $0xc8] sm:$0xff]
        %v1735 = vld [vmem:[%s1708 + $0xd0] sm:$0xff]
        %v1736 = vld [vmem:[%s1708 + $0xd8] sm:$0xff]
        %v1737 = vld [vmem:[%s1708 + $0xe0] sm:$0xff]
        %v1738 = vld [vmem:[%s1708 + $0xe8] sm:$0xff]
        %v1739 = vld [vmem:[%s1708 + $0xf0] sm:$0xff]
        %v1740 = vld [vmem:[%s1708 + $0xf8] sm:$0xff]
        %v1741 = vld [vmem:[%s1708 + $0x100] sm:$0xff]
        %v1742 = vld [vmem:[%s1708 + $0x108] sm:$0xff]
        %v1743 = vld [vmem:[%s1708 + $0x110] sm:$0xff]
        %v1744 = vld [vmem:[%s1708 + $0x118] sm:$0xff]
        %v1745 = vld [vmem:[%s1708 + $0x120] sm:$0xff]
        %v1746 = vld [vmem:[%s1708 + $0x128] sm:$0xff]
        %v1747 = vld [vmem:[%s1708 + $0x130] sm:$0xff]
        %v1748 = vld [vmem:[%s1708 + $0x138] sm:$0xff]
        %v1749 = vld [vmem:[%s1708 + $0x140] sm:$0xff]
        %v1750 = vld [vmem:[%s1708 + $0x148] sm:$0xff]
        %v1751 = vld [vmem:[%s1708 + $0x150] sm:$0xff]
        %v1752 = vld [vmem:[%s1708 + $0x158] sm:$0xff]
        %v1753 = vld [vmem:[%s1708 + $0x160] sm:$0xff]
        %v1754 = vld [vmem:[%s1708 + $0x168] sm:$0xff]
        %v1755 = vld [vmem:[%s1708 + $0x170] sm:$0xff]
        %v1756 = vld [vmem:[%s1708 + $0x178] sm:$0xff]
        %1757 = vmatpush.msra.mxu0 %v1724
        %1758 = vmatpush.msra.mxu0 %v1723
        %1759 = vmatpush.msra.mxu0 %v1722
        %1760 = vmatpush.msra.mxu0 %v1721
        %1761 = vmatpush.msra.mxu0 %v1720
        %1762 = vmatpush.msra.mxu0 %v1719
        %1763 = vmatpush.msra.mxu0 %v1718
        %1764 = vmatpush.msra.mxu0 %v1717
        %1765 = vmatpush.msra.mxu0 %v1716
        %1766 = vmatpush.msra.mxu0 %v1715
        %1767 = vmatpush.msra.mxu0 %v1714
        %1768 = vmatpush.msra.mxu0 %v1713
        %1769 = vmatpush.msra.mxu0 %v1712
        %1770 = vmatpush.msra.mxu0 %v1711
        %1771 = vmatpush.msra.mxu0 %v1710
        %1772 = vmatpush.msra.mxu0 %v1709
        %1773 = vmatmul.f32.gmra.mxu0 %v1612
        %v1774 = vpop.f32.mrf.mxu0
        %v1775 = vadd.f32 0.0, %v1774
        %1776 = vmatmul.f32.gmra.mxu0 %v1615
        %v1777 = vpop.f32.mrf.mxu0
        %v1778 = vadd.f32 0.0, %v1777
        %1779 = vmatmul.f32.gmra.mxu0 %v1618
        %v1780 = vpop.f32.mrf.mxu0
        %v1781 = vadd.f32 0.0, %v1780
        %1782 = vmatmul.f32.gmra.mxu0 %v1621
        %v1783 = vpop.f32.mrf.mxu0
        %v1784 = vadd.f32 0.0, %v1783
        %1785 = vmatmul.f32.gmra.mxu0 %v1624
        %v1786 = vpop.f32.mrf.mxu0
        %v1787 = vadd.f32 0.0, %v1786
        %1788 = vmatmul.f32.gmra.mxu0 %v1627
        %v1789 = vpop.f32.mrf.mxu0
        %v1790 = vadd.f32 0.0, %v1789
        %1791 = vmatmul.f32.gmra.mxu0 %v1630
        %v1792 = vpop.f32.mrf.mxu0
        %v1793 = vadd.f32 0.0, %v1792
        %1794 = vmatmul.f32.gmra.mxu0 %v1633
        %v1795 = vpop.f32.mrf.mxu0
        %v1796 = vadd.f32 0.0, %v1795
        %1797 = vmatmul.f32.gmra.mxu0 %v1636
        %v1798 = vpop.f32.mrf.mxu0
        %v1799 = vadd.f32 0.0, %v1798
        %1800 = vmatmul.f32.gmra.mxu0 %v1639
        %v1801 = vpop.f32.mrf.mxu0
        %v1802 = vadd.f32 0.0, %v1801
        %1803 = vmatmul.f32.gmra.mxu0 %v1642
        %v1804 = vpop.f32.mrf.mxu0
        %v1805 = vadd.f32 0.0, %v1804
        %1806 = vmatmul.f32.gmra.mxu0 %v1645
        %v1807 = vpop.f32.mrf.mxu0
        %v1808 = vadd.f32 0.0, %v1807
        %1809 = vmatmul.f32.gmra.mxu0 %v1648
        %v1810 = vpop.f32.mrf.mxu0
        %v1811 = vadd.f32 0.0, %v1810
        %1812 = vmatmul.f32.gmra.mxu0 %v1651
        %v1813 = vpop.f32.mrf.mxu0
        %v1814 = vadd.f32 0.0, %v1813
        %1815 = vmatmul.f32.gmra.mxu0 %v1654
        %v1816 = vpop.f32.mrf.mxu0
        %v1817 = vadd.f32 0.0, %v1816
        %1818 = vmatmul.f32.gmra.mxu0 %v1657
        %v1819 = vpop.f32.mrf.mxu0
        %v1820 = vadd.f32 0.0, %v1819
        %1821 = vmatmul.f32.gmra.mxu0 %v1660
        %v1822 = vpop.f32.mrf.mxu0
        %v1823 = vadd.f32 0.0, %v1822
        %1824 = vmatmul.f32.gmra.mxu0 %v1663
        %v1825 = vpop.f32.mrf.mxu0
        %v1826 = vadd.f32 0.0, %v1825
        %1827 = vmatmul.f32.gmra.mxu0 %v1666
        %v1828 = vpop.f32.mrf.mxu0
        %v1829 = vadd.f32 0.0, %v1828
        %1830 = vmatmul.f32.gmra.mxu0 %v1669
        %v1831 = vpop.f32.mrf.mxu0
        %v1832 = vadd.f32 0.0, %v1831
        %1833 = vmatmul.f32.gmra.mxu0 %v1672
        %v1834 = vpop.f32.mrf.mxu0
        %v1835 = vadd.f32 0.0, %v1834
        %1836 = vmatmul.f32.gmra.mxu0 %v1675
        %v1837 = vpop.f32.mrf.mxu0
        %v1838 = vadd.f32 0.0, %v1837
        %1839 = vmatmul.f32.gmra.mxu0 %v1678
        %v1840 = vpop.f32.mrf.mxu0
        %v1841 = vadd.f32 0.0, %v1840
        %1842 = vmatmul.f32.gmra.mxu0 %v1681
        %v1843 = vpop.f32.mrf.mxu0
        %v1844 = vadd.f32 0.0, %v1843
        %1845 = vmatmul.f32.gmra.mxu0 %v1684
        %v1846 = vpop.f32.mrf.mxu0
        %v1847 = vadd.f32 0.0, %v1846
        %1848 = vmatmul.f32.gmra.mxu0 %v1687
        %v1849 = vpop.f32.mrf.mxu0
        %v1850 = vadd.f32 0.0, %v1849
        %1851 = vmatmul.f32.gmra.mxu0 %v1690
        %v1852 = vpop.f32.mrf.mxu0
        %v1853 = vadd.f32 0.0, %v1852
        %1854 = vmatmul.f32.gmra.mxu0 %v1693
        %v1855 = vpop.f32.mrf.mxu0
        %v1856 = vadd.f32 0.0, %v1855
        %1857 = vmatmul.f32.gmra.mxu0 %v1696
        %v1858 = vpop.f32.mrf.mxu0
        %v1859 = vadd.f32 0.0, %v1858
        %1860 = vmatmul.f32.gmra.mxu0 %v1699
        %v1861 = vpop.f32.mrf.mxu0
        %v1862 = vadd.f32 0.0, %v1861
        %1863 = vmatmul.f32.gmra.mxu0 %v1702
        %v1864 = vpop.f32.mrf.mxu0
        %v1865 = vadd.f32 0.0, %v1864
        %1866 = vmatmul.f32.gmra.mxu0 %v1705
        %v1867 = vpop.f32.mrf.mxu0
        %v1868 = vadd.f32 0.0, %v1867
        %1869 = vdwg.mxu0
        %1870 = vmatpush.msra.mxu0 %v1740
        %1871 = vmatpush.msra.mxu0 %v1739
        %1872 = vmatpush.msra.mxu0 %v1738
        %1873 = vmatpush.msra.mxu0 %v1737
        %1874 = vmatpush.msra.mxu0 %v1736
        %1875 = vmatpush.msra.mxu0 %v1735
        %1876 = vmatpush.msra.mxu0 %v1734
        %1877 = vmatpush.msra.mxu0 %v1733
        %1878 = vmatpush.msra.mxu0 %v1732
        %1879 = vmatpush.msra.mxu0 %v1731
        %1880 = vmatpush.msra.mxu0 %v1730
        %1881 = vmatpush.msra.mxu0 %v1729
        %1882 = vmatpush.msra.mxu0 %v1728
        %1883 = vmatpush.msra.mxu0 %v1727
        %1884 = vmatpush.msra.mxu0 %v1726
        %1885 = vmatpush.msra.mxu0 %v1725
        %1886 = vmatmul.f32.gmra.mxu0 %v1613
        %v1887 = vpop.f32.mrf.mxu0
        %v1888 = vadd.f32 %v1775, %v1887
        %1889 = vmatmul.f32.gmra.mxu0 %v1616
        %v1890 = vpop.f32.mrf.mxu0
        %v1891 = vadd.f32 %v1778, %v1890
        %1892 = vmatmul.f32.gmra.mxu0 %v1619
        %v1893 = vpop.f32.mrf.mxu0
        %v1894 = vadd.f32 %v1781, %v1893
        %1895 = vmatmul.f32.gmra.mxu0 %v1622
        %v1896 = vpop.f32.mrf.mxu0
        %v1897 = vadd.f32 %v1784, %v1896
        %1898 = vmatmul.f32.gmra.mxu0 %v1625
        %v1899 = vpop.f32.mrf.mxu0
        %v1900 = vadd.f32 %v1787, %v1899
        %1901 = vmatmul.f32.gmra.mxu0 %v1628
        %v1902 = vpop.f32.mrf.mxu0
        %v1903 = vadd.f32 %v1790, %v1902
        %1904 = vmatmul.f32.gmra.mxu0 %v1631
        %v1905 = vpop.f32.mrf.mxu0
        %v1906 = vadd.f32 %v1793, %v1905
        %1907 = vmatmul.f32.gmra.mxu0 %v1634
        %v1908 = vpop.f32.mrf.mxu0
        %v1909 = vadd.f32 %v1796, %v1908
        %1910 = vmatmul.f32.gmra.mxu0 %v1637
        %v1911 = vpop.f32.mrf.mxu0
        %v1912 = vadd.f32 %v1799, %v1911
        %1913 = vmatmul.f32.gmra.mxu0 %v1640
        %v1914 = vpop.f32.mrf.mxu0
        %v1915 = vadd.f32 %v1802, %v1914
        %1916 = vmatmul.f32.gmra.mxu0 %v1643
        %v1917 = vpop.f32.mrf.mxu0
        %v1918 = vadd.f32 %v1805, %v1917
        %1919 = vmatmul.f32.gmra.mxu0 %v1646
        %v1920 = vpop.f32.mrf.mxu0
        %v1921 = vadd.f32 %v1808, %v1920
        %1922 = vmatmul.f32.gmra.mxu0 %v1649
        %v1923 = vpop.f32.mrf.mxu0
        %v1924 = vadd.f32 %v1811, %v1923
        %1925 = vmatmul.f32.gmra.mxu0 %v1652
        %v1926 = vpop.f32.mrf.mxu0
        %v1927 = vadd.f32 %v1814, %v1926
        %1928 = vmatmul.f32.gmra.mxu0 %v1655
        %v1929 = vpop.f32.mrf.mxu0
        %v1930 = vadd.f32 %v1817, %v1929
        %1931 = vmatmul.f32.gmra.mxu0 %v1658
        %v1932 = vpop.f32.mrf.mxu0
        %v1933 = vadd.f32 %v1820, %v1932
        %1934 = vmatmul.f32.gmra.mxu0 %v1661
        %v1935 = vpop.f32.mrf.mxu0
        %v1936 = vadd.f32 %v1823, %v1935
        %1937 = vmatmul.f32.gmra.mxu0 %v1664
        %v1938 = vpop.f32.mrf.mxu0
        %v1939 = vadd.f32 %v1826, %v1938
        %1940 = vmatmul.f32.gmra.mxu0 %v1667
        %v1941 = vpop.f32.mrf.mxu0
        %v1942 = vadd.f32 %v1829, %v1941
        %1943 = vmatmul.f32.gmra.mxu0 %v1670
        %v1944 = vpop.f32.mrf.mxu0
        %v1945 = vadd.f32 %v1832, %v1944
        %1946 = vmatmul.f32.gmra.mxu0 %v1673
        %v1947 = vpop.f32.mrf.mxu0
        %v1948 = vadd.f32 %v1835, %v1947
        %1949 = vmatmul.f32.gmra.mxu0 %v1676
        %v1950 = vpop.f32.mrf.mxu0
        %v1951 = vadd.f32 %v1838, %v1950
        %1952 = vmatmul.f32.gmra.mxu0 %v1679
        %v1953 = vpop.f32.mrf.mxu0
        %v1954 = vadd.f32 %v1841, %v1953
        %1955 = vmatmul.f32.gmra.mxu0 %v1682
        %v1956 = vpop.f32.mrf.mxu0
        %v1957 = vadd.f32 %v1844, %v1956
        %1958 = vmatmul.f32.gmra.mxu0 %v1685
        %v1959 = vpop.f32.mrf.mxu0
        %v1960 = vadd.f32 %v1847, %v1959
        %1961 = vmatmul.f32.gmra.mxu0 %v1688
        %v1962 = vpop.f32.mrf.mxu0
        %v1963 = vadd.f32 %v1850, %v1962
        %1964 = vmatmul.f32.gmra.mxu0 %v1691
        %v1965 = vpop.f32.mrf.mxu0
        %v1966 = vadd.f32 %v1853, %v1965
        %1967 = vmatmul.f32.gmra.mxu0 %v1694
        %v1968 = vpop.f32.mrf.mxu0
        %v1969 = vadd.f32 %v1856, %v1968
        %1970 = vmatmul.f32.gmra.mxu0 %v1697
        %v1971 = vpop.f32.mrf.mxu0
        %v1972 = vadd.f32 %v1859, %v1971
        %1973 = vmatmul.f32.gmra.mxu0 %v1700
        %v1974 = vpop.f32.mrf.mxu0
        %v1975 = vadd.f32 %v1862, %v1974
        %1976 = vmatmul.f32.gmra.mxu0 %v1703
        %v1977 = vpop.f32.mrf.mxu0
        %v1978 = vadd.f32 %v1865, %v1977
        %1979 = vmatmul.f32.gmra.mxu0 %v1706
        %v1980 = vpop.f32.mrf.mxu0
        %v1981 = vadd.f32 %v1868, %v1980
        %1982 = vdwg.mxu0
        %1983 = vmatpush.msra.mxu0 %v1756
        %1984 = vmatpush.msra.mxu0 %v1755
        %1985 = vmatpush.msra.mxu0 %v1754
        %1986 = vmatpush.msra.mxu0 %v1753
        %1987 = vmatpush.msra.mxu0 %v1752
        %1988 = vmatpush.msra.mxu0 %v1751
        %1989 = vmatpush.msra.mxu0 %v1750
        %1990 = vmatpush.msra.mxu0 %v1749
        %1991 = vmatpush.msra.mxu0 %v1748
        %1992 = vmatpush.msra.mxu0 %v1747
        %1993 = vmatpush.msra.mxu0 %v1746
        %1994 = vmatpush.msra.mxu0 %v1745
        %1995 = vmatpush.msra.mxu0 %v1744
        %1996 = vmatpush.msra.mxu0 %v1743
        %1997 = vmatpush.msra.mxu0 %v1742
        %1998 = vmatpush.msra.mxu0 %v1741
        %1999 = vmatmul.f32.gmra.mxu0 %v1614
        %v2000 = vpop.f32.mrf.mxu0
        %v2001 = vadd.f32 %v1888, %v2000
        %2002 = vmatmul.f32.gmra.mxu0 %v1617
        %v2003 = vpop.f32.mrf.mxu0
        %v2004 = vadd.f32 %v1891, %v2003
        %2005 = vmatmul.f32.gmra.mxu0 %v1620
        %v2006 = vpop.f32.mrf.mxu0
        %v2007 = vadd.f32 %v1894, %v2006
        %2008 = vmatmul.f32.gmra.mxu0 %v1623
        %v2009 = vpop.f32.mrf.mxu0
        %v2010 = vadd.f32 %v1897, %v2009
        %2011 = vmatmul.f32.gmra.mxu0 %v1626
        %v2012 = vpop.f32.mrf.mxu0
        %v2013 = vadd.f32 %v1900, %v2012
        %2014 = vmatmul.f32.gmra.mxu0 %v1629
        %v2015 = vpop.f32.mrf.mxu0
        %v2016 = vadd.f32 %v1903, %v2015
        %2017 = vmatmul.f32.gmra.mxu0 %v1632
        %v2018 = vpop.f32.mrf.mxu0
        %v2019 = vadd.f32 %v1906, %v2018
        %2020 = vmatmul.f32.gmra.mxu0 %v1635
        %v2021 = vpop.f32.mrf.mxu0
        %v2022 = vadd.f32 %v1909, %v2021
        %2023 = vmatmul.f32.gmra.mxu0 %v1638
        %v2024 = vpop.f32.mrf.mxu0
        %v2025 = vadd.f32 %v1912, %v2024
        %2026 = vmatmul.f32.gmra.mxu0 %v1641
        %v2027 = vpop.f32.mrf.mxu0
        %v2028 = vadd.f32 %v1915, %v2027
        %2029 = vmatmul.f32.gmra.mxu0 %v1644
        %v2030 = vpop.f32.mrf.mxu0
        %v2031 = vadd.f32 %v1918, %v2030
        %2032 = vmatmul.f32.gmra.mxu0 %v1647
        %v2033 = vpop.f32.mrf.mxu0
        %v2034 = vadd.f32 %v1921, %v2033
        %2035 = vmatmul.f32.gmra.mxu0 %v1650
        %v2036 = vpop.f32.mrf.mxu0
        %v2037 = vadd.f32 %v1924, %v2036
        %2038 = vmatmul.f32.gmra.mxu0 %v1653
        %v2039 = vpop.f32.mrf.mxu0
        %v2040 = vadd.f32 %v1927, %v2039
        %2041 = vmatmul.f32.gmra.mxu0 %v1656
        %v2042 = vpop.f32.mrf.mxu0
        %v2043 = vadd.f32 %v1930, %v2042
        %2044 = vmatmul.f32.gmra.mxu0 %v1659
        %v2045 = vpop.f32.mrf.mxu0
        %v2046 = vadd.f32 %v1933, %v2045
        %2047 = vmatmul.f32.gmra.mxu0 %v1662
        %v2048 = vpop.f32.mrf.mxu0
        %v2049 = vadd.f32 %v1936, %v2048
        %2050 = vmatmul.f32.gmra.mxu0 %v1665
        %v2051 = vpop.f32.mrf.mxu0
        %v2052 = vadd.f32 %v1939, %v2051
        %2053 = vmatmul.f32.gmra.mxu0 %v1668
        %v2054 = vpop.f32.mrf.mxu0
        %v2055 = vadd.f32 %v1942, %v2054
        %2056 = vmatmul.f32.gmra.mxu0 %v1671
        %v2057 = vpop.f32.mrf.mxu0
        %v2058 = vadd.f32 %v1945, %v2057
        %2059 = vmatmul.f32.gmra.mxu0 %v1674
        %v2060 = vpop.f32.mrf.mxu0
        %v2061 = vadd.f32 %v1948, %v2060
        %2062 = vmatmul.f32.gmra.mxu0 %v1677
        %v2063 = vpop.f32.mrf.mxu0
        %v2064 = vadd.f32 %v1951, %v2063
        %2065 = vmatmul.f32.gmra.mxu0 %v1680
        %v2066 = vpop.f32.mrf.mxu0
        %v2067 = vadd.f32 %v1954, %v2066
        %2068 = vmatmul.f32.gmra.mxu0 %v1683
        %v2069 = vpop.f32.mrf.mxu0
        %v2070 = vadd.f32 %v1957, %v2069
        %2071 = vmatmul.f32.gmra.mxu0 %v1686
        %v2072 = vpop.f32.mrf.mxu0
        %v2073 = vadd.f32 %v1960, %v2072
        %2074 = vmatmul.f32.gmra.mxu0 %v1689
        %v2075 = vpop.f32.mrf.mxu0
        %v2076 = vadd.f32 %v1963, %v2075
        %2077 = vmatmul.f32.gmra.mxu0 %v1692
        %v2078 = vpop.f32.mrf.mxu0
        %v2079 = vadd.f32 %v1966, %v2078
        %2080 = vmatmul.f32.gmra.mxu0 %v1695
        %v2081 = vpop.f32.mrf.mxu0
        %v2082 = vadd.f32 %v1969, %v2081
        %2083 = vmatmul.f32.gmra.mxu0 %v1698
        %v2084 = vpop.f32.mrf.mxu0
        %v2085 = vadd.f32 %v1972, %v2084
        %2086 = vmatmul.f32.gmra.mxu0 %v1701
        %v2087 = vpop.f32.mrf.mxu0
        %v2088 = vadd.f32 %v1975, %v2087
        %2089 = vmatmul.f32.gmra.mxu0 %v1704
        %v2090 = vpop.f32.mrf.mxu0
        %v2091 = vadd.f32 %v1978, %v2090
        %2092 = vmatmul.f32.gmra.mxu0 %v1707
        %v2093 = vpop.f32.mrf.mxu0
        %v2094 = vadd.f32 %v1981, %v2093
        %2095 = vdwg.mxu0
        %v2096 = vadd.f32 %v1516, %v2001
        %v2097 = vadd.f32 %v1519, %v2004
        %v2098 = vadd.f32 %v1522, %v2007
        %v2099 = vadd.f32 %v1525, %v2010
        %v2100 = vadd.f32 %v1528, %v2013
        %v2101 = vadd.f32 %v1531, %v2016
        %v2102 = vadd.f32 %v1534, %v2019
        %v2103 = vadd.f32 %v1537, %v2022
        %v2104 = vadd.f32 %v1540, %v2025
        %v2105 = vadd.f32 %v1543, %v2028
        %v2106 = vadd.f32 %v1546, %v2031
        %v2107 = vadd.f32 %v1549, %v2034
        %v2108 = vadd.f32 %v1552, %v2037
        %v2109 = vadd.f32 %v1555, %v2040
        %v2110 = vadd.f32 %v1558, %v2043
        %v2111 = vadd.f32 %v1561, %v2046
        %v2112 = vadd.f32 %v1564, %v2049
        %v2113 = vadd.f32 %v1567, %v2052
        %v2114 = vadd.f32 %v1570, %v2055
        %v2115 = vadd.f32 %v1573, %v2058
        %v2116 = vadd.f32 %v1576, %v2061
        %v2117 = vadd.f32 %v1579, %v2064
        %v2118 = vadd.f32 %v1582, %v2067
        %v2119 = vadd.f32 %v1585, %v2070
        %v2120 = vadd.f32 %v1588, %v2073
        %v2121 = vadd.f32 %v1591, %v2076
        %v2122 = vadd.f32 %v1594, %v2079
        %v2123 = vadd.f32 %v1597, %v2082
        %v2124 = vadd.f32 %v1600, %v2085
        %v2125 = vadd.f32 %v1603, %v2088
        %v2126 = vadd.f32 %v1606, %v2091
        %v2127 = vadd.f32 %v1609, %v2094
        %v2128 = vadd.f32 %v2096, %v2097
        %v2129 = vadd.f32 %v2128, %v2098
        %v2130 = vadd.f32 %v2129, %v2099
        %v2131 = vadd.f32 %v2130, %v2100
        %v2132 = vadd.f32 %v2131, %v2101
        %v2133 = vadd.f32 %v2132, %v2102
        %v2134 = vadd.f32 %v2133, %v2103
        %v2135 = vadd.f32 %v2134, %v2104
        %v2136 = vadd.f32 %v2135, %v2105
        %v2137 = vadd.f32 %v2136, %v2106
        %v2138 = vadd.f32 %v2137, %v2107
        %v2139 = vadd.f32 %v2138, %v2108
        %v2140 = vadd.f32 %v2139, %v2109
        %v2141 = vadd.f32 %v2140, %v2110
        %v2142 = vadd.f32 %v2141, %v2111
        %v2143 = vadd.f32 %v2142, %v2112
        %v2144 = vadd.f32 %v2143, %v2113
        %v2145 = vadd.f32 %v2144, %v2114
        %v2146 = vadd.f32 %v2145, %v2115
        %v2147 = vadd.f32 %v2146, %v2116
        %v2148 = vadd.f32 %v2147, %v2117
        %v2149 = vadd.f32 %v2148, %v2118
        %v2150 = vadd.f32 %v2149, %v2119
        %v2151 = vadd.f32 %v2150, %v2120
        %v2152 = vadd.f32 %v2151, %v2121
        %v2153 = vadd.f32 %v2152, %v2122
        %v2154 = vadd.f32 %v2153, %v2123
        %v2155 = vadd.f32 %v2154, %v2124
        %v2156 = vadd.f32 %v2155, %v2125
        %v2157 = vadd.f32 %v2156, %v2126
        %v2158 = vadd.f32 %v2157, %v2127
        %v2159 = vrot.slane %v2158, 4
        %v2160 = vadd.f32 %v2158, %v2159
        %v2161 = vrot.slane %v2160, 2
        %v2162 = vadd.f32 %v2160, %v2161
        %v2163 = vrot.slane %v2162, 1
        %v2164 = vadd.f32 %v2162, %v2163
        %v2165 = vmul.f32 %v2096, %v2096
        %v2166 = vmul.f32 %v2097, %v2097
        %v2167 = vmul.f32 %v2098, %v2098
        %v2168 = vmul.f32 %v2099, %v2099
        %v2169 = vmul.f32 %v2100, %v2100
        %v2170 = vmul.f32 %v2101, %v2101
        %v2171 = vmul.f32 %v2102, %v2102
        %v2172 = vmul.f32 %v2103, %v2103
        %v2173 = vmul.f32 %v2104, %v2104
        %v2174 = vmul.f32 %v2105, %v2105
        %v2175 = vmul.f32 %v2106, %v2106
        %v2176 = vmul.f32 %v2107, %v2107
        %v2177 = vmul.f32 %v2108, %v2108
        %v2178 = vmul.f32 %v2109, %v2109
        %v2179 = vmul.f32 %v2110, %v2110
        %v2180 = vmul.f32 %v2111, %v2111
        %v2181 = vmul.f32 %v2112, %v2112
        %v2182 = vmul.f32 %v2113, %v2113
        %v2183 = vmul.f32 %v2114, %v2114
        %v2184 = vmul.f32 %v2115, %v2115
        %v2185 = vmul.f32 %v2116, %v2116
        %v2186 = vmul.f32 %v2117, %v2117
        %v2187 = vmul.f32 %v2118, %v2118
        %v2188 = vmul.f32 %v2119, %v2119
        %v2189 = vmul.f32 %v2120, %v2120
        %v2190 = vmul.f32 %v2121, %v2121
        %v2191 = vmul.f32 %v2122, %v2122
        %v2192 = vmul.f32 %v2123, %v2123
        %v2193 = vmul.f32 %v2124, %v2124
        %v2194 = vmul.f32 %v2125, %v2125
        %v2195 = vmul.f32 %v2126, %v2126
        %v2196 = vmul.f32 %v2127, %v2127
        %v2197 = vadd.f32 %v2165, %v2166
        %v2198 = vadd.f32 %v2197, %v2167
        %v2199 = vadd.f32 %v2198, %v2168
        %v2200 = vadd.f32 %v2199, %v2169
        %v2201 = vadd.f32 %v2200, %v2170
        %v2202 = vadd.f32 %v2201, %v2171
        %v2203 = vadd.f32 %v2202, %v2172
        %v2204 = vadd.f32 %v2203, %v2173
        %v2205 = vadd.f32 %v2204, %v2174
        %v2206 = vadd.f32 %v2205, %v2175
        %v2207 = vadd.f32 %v2206, %v2176
        %v2208 = vadd.f32 %v2207, %v2177
        %v2209 = vadd.f32 %v2208, %v2178
        %v2210 = vadd.f32 %v2209, %v2179
        %v2211 = vadd.f32 %v2210, %v2180
        %v2212 = vadd.f32 %v2211, %v2181
        %v2213 = vadd.f32 %v2212, %v2182
        %v2214 = vadd.f32 %v2213, %v2183
        %v2215 = vadd.f32 %v2214, %v2184
        %v2216 = vadd.f32 %v2215, %v2185
        %v2217 = vadd.f32 %v2216, %v2186
        %v2218 = vadd.f32 %v2217, %v2187
        %v2219 = vadd.f32 %v2218, %v2188
        %v2220 = vadd.f32 %v2219, %v2189
        %v2221 = vadd.f32 %v2220, %v2190
        %v2222 = vadd.f32 %v2221, %v2191
        %v2223 = vadd.f32 %v2222, %v2192
        %v2224 = vadd.f32 %v2223, %v2193
        %v2225 = vadd.f32 %v2224, %v2194
        %v2226 = vadd.f32 %v2225, %v2195
        %v2227 = vadd.f32 %v2226, %v2196
        %v2228 = vrot.slane %v2227, 4
        %v2229 = vadd.f32 %v2227, %v2228
        %v2230 = vrot.slane %v2229, 2
        %v2231 = vadd.f32 %v2229, %v2230
        %v2232 = vrot.slane %v2231, 1
        %v2233 = vadd.f32 %v2231, %v2232
        %v2234 = vmul.f32 %v2164, 0.00390625
        %v2235 = vmul.f32 %v2233, 0.00390625
        %v2236 = vmul.f32 %v2234, %v2234
        %v2237 = vsub.f32 %v2235, %v2236
        %v2238 = vmax.f32 %v2237, 0.0
        %v2239 = vsub.f32 %v2096, %v2234
        %v2240 = vsub.f32 %v2097, %v2234
        %v2241 = vsub.f32 %v2098, %v2234
        %v2242 = vsub.f32 %v2099, %v2234
        %v2243 = vsub.f32 %v2100, %v2234
        %v2244 = vsub.f32 %v2101, %v2234
        %v2245 = vsub.f32 %v2102, %v2234
        %v2246 = vsub.f32 %v2103, %v2234
        %v2247 = vsub.f32 %v2104, %v2234
        %v2248 = vsub.f32 %v2105, %v2234
        %v2249 = vsub.f32 %v2106, %v2234
        %v2250 = vsub.f32 %v2107, %v2234
        %v2251 = vsub.f32 %v2108, %v2234
        %v2252 = vsub.f32 %v2109, %v2234
        %v2253 = vsub.f32 %v2110, %v2234
        %v2254 = vsub.f32 %v2111, %v2234
        %v2255 = vsub.f32 %v2112, %v2234
        %v2256 = vsub.f32 %v2113, %v2234
        %v2257 = vsub.f32 %v2114, %v2234
        %v2258 = vsub.f32 %v2115, %v2234
        %v2259 = vsub.f32 %v2116, %v2234
        %v2260 = vsub.f32 %v2117, %v2234
        %v2261 = vsub.f32 %v2118, %v2234
        %v2262 = vsub.f32 %v2119, %v2234
        %v2263 = vsub.f32 %v2120, %v2234
        %v2264 = vsub.f32 %v2121, %v2234
        %v2265 = vsub.f32 %v2122, %v2234
        %v2266 = vsub.f32 %v2123, %v2234
        %v2267 = vsub.f32 %v2124, %v2234
        %v2268 = vsub.f32 %v2125, %v2234
        %v2269 = vsub.f32 %v2126, %v2234
        %v2270 = vsub.f32 %v2127, %v2234
        %v2271 = vadd.f32 %v2238, 1e-05
        %v2272 = vrsqrt.pop %v2271
        %v2273 = vmul.f32 %v2272, %v2271
        %v2274 = vmul.f32 %v2273, %v2272
        %v2275 = vmul.f32 0.5, %v2274
        %v2276 = vsub.f32 1.5, %v2275
        %v2277 = vmul.f32 %v2272, %v2276
        %vm2278 = vweird.f32 %v2271
        %vm2279 = vweird.f32 %v2272
        %vm2280 = vmor %vm2278, %vm2279
        %v2281 = vsel %vm2280, %v2272, %v2277
        %v2282 = vmul.f32 %v2239, %v2281
        %v2283 = vmul.f32 %v2240, %v2281
        %v2284 = vmul.f32 %v2241, %v2281
        %v2285 = vmul.f32 %v2242, %v2281
        %v2286 = vmul.f32 %v2243, %v2281
        %v2287 = vmul.f32 %v2244, %v2281
        %v2288 = vmul.f32 %v2245, %v2281
        %v2289 = vmul.f32 %v2246, %v2281
        %v2290 = vmul.f32 %v2247, %v2281
        %v2291 = vmul.f32 %v2248, %v2281
        %v2292 = vmul.f32 %v2249, %v2281
        %v2293 = vmul.f32 %v2250, %v2281
        %v2294 = vmul.f32 %v2251, %v2281
        %v2295 = vmul.f32 %v2252, %v2281
        %v2296 = vmul.f32 %v2253, %v2281
        %v2297 = vmul.f32 %v2254, %v2281
        %v2298 = vmul.f32 %v2255, %v2281
        %v2299 = vmul.f32 %v2256, %v2281
        %v2300 = vmul.f32 %v2257, %v2281
        %v2301 = vmul.f32 %v2258, %v2281
        %v2302 = vmul.f32 %v2259, %v2281
        %v2303 = vmul.f32 %v2260, %v2281
        %v2304 = vmul.f32 %v2261, %v2281
        %v2305 = vmul.f32 %v2262, %v2281
        %v2306 = vmul.f32 %v2263, %v2281
        %v2307 = vmul.f32 %v2264, %v2281
        %v2308 = vmul.f32 %v2265, %v2281
        %v2309 = vmul.f32 %v2266, %v2281
        %v2310 = vmul.f32 %v2267, %v2281
        %v2311 = vmul.f32 %v2268, %v2281
        %v2312 = vmul.f32 %v2269, %v2281
        %v2313 = vmul.f32 %v2270, %v2281
        %v2314 = vmax.f32 %v2282, 0.0
        %v2315 = vmax.f32 %v2283, 0.0
        %v2316 = vmax.f32 %v2284, 0.0
        %v2317 = vmax.f32 %v2285, 0.0
        %v2318 = vmax.f32 %v2286, 0.0
        %v2319 = vmax.f32 %v2287, 0.0
        %v2320 = vmax.f32 %v2288, 0.0
        %v2321 = vmax.f32 %v2289, 0.0
        %v2322 = vmax.f32 %v2290, 0.0
        %v2323 = vmax.f32 %v2291, 0.0
        %v2324 = vmax.f32 %v2292, 0.0
        %v2325 = vmax.f32 %v2293, 0.0
        %v2326 = vmax.f32 %v2294, 0.0
        %v2327 = vmax.f32 %v2295, 0.0
        %v2328 = vmax.f32 %v2296, 0.0
        %v2329 = vmax.f32 %v2297, 0.0
        %v2330 = vmax.f32 %v2298, 0.0
        %v2331 = vmax.f32 %v2299, 0.0
        %v2332 = vmax.f32 %v2300, 0.0
        %v2333 = vmax.f32 %v2301, 0.0
        %v2334 = vmax.f32 %v2302, 0.0
        %v2335 = vmax.f32 %v2303, 0.0
        %v2336 = vmax.f32 %v2304, 0.0
        %v2337 = vmax.f32 %v2305, 0.0
        %v2338 = vmax.f32 %v2306, 0.0
        %v2339 = vmax.f32 %v2307, 0.0
        %v2340 = vmax.f32 %v2308, 0.0
        %v2341 = vmax.f32 %v2309, 0.0
        %v2342 = vmax.f32 %v2310, 0.0
        %v2343 = vmax.f32 %v2311, 0.0
        %v2344 = vmax.f32 %v2312, 0.0
        %v2345 = vmax.f32 %v2313, 0.0
        %2346 = vst [vmem:[%s256 + $0x8] sm:$0xff] %v2314
        %2347 = vst [vmem:[%s256 + $0x20] sm:$0xff] %v2315
        %2348 = vst [vmem:[%s256 + $0x38] sm:$0xff] %v2316
        %2349 = vst [vmem:[%s256 + $0x50] sm:$0xff] %v2317
        %2350 = vst [vmem:[%s256 + $0x68] sm:$0xff] %v2318
        %2351 = vst [vmem:[%s256 + $0x80] sm:$0xff] %v2319
        %2352 = vst [vmem:[%s256 + $0x98] sm:$0xff] %v2320
        %2353 = vst [vmem:[%s256 + $0xb0] sm:$0xff] %v2321
        %2354 = vst [vmem:[%s256 + $0xc8] sm:$0xff] %v2322
        %2355 = vst [vmem:[%s256 + $0xe0] sm:$0xff] %v2323
        %2356 = vst [vmem:[%s256 + $0xf8] sm:$0xff] %v2324
        %2357 = vst [vmem:[%s256 + $0x110] sm:$0xff] %v2325
        %2358 = vst [vmem:[%s256 + $0x128] sm:$0xff] %v2326
        %2359 = vst [vmem:[%s256 + $0x140] sm:$0xff] %v2327
        %2360 = vst [vmem:[%s256 + $0x158] sm:$0xff] %v2328
        %2361 = vst [vmem:[%s256 + $0x170] sm:$0xff] %v2329
        %2362 = vst [vmem:[%s256 + $0x188] sm:$0xff] %v2330
        %2363 = vst [vmem:[%s256 + $0x1a0] sm:$0xff] %v2331
        %2364 = vst [vmem:[%s256 + $0x1b8] sm:$0xff] %v2332
        %2365 = vst [vmem:[%s256 + $0x1d0] sm:$0xff] %v2333
        %2366 = vst [vmem:[%s256 + $0x1e8] sm:$0xff] %v2334
        %2367 = vst [vmem:[%s256 + $0x200] sm:$0xff] %v2335
        %2368 = vst [vmem:[%s256 + $0x218] sm:$0xff] %v2336
        %2369 = vst [vmem:[%s256 + $0x230] sm:$0xff] %v2337
        %2370 = vst [vmem:[%s256 + $0x248] sm:$0xff] %v2338
        %2371 = vst [vmem:[%s256 + $0x260] sm:$0xff] %v2339
        %2372 = vst [vmem:[%s256 + $0x278] sm:$0xff] %v2340
        %2373 = vst [vmem:[%s256 + $0x290] sm:$0xff] %v2341
        %2374 = vst [vmem:[%s256 + $0x2a8] sm:$0xff] %v2342
        %2375 = vst [vmem:[%s256 + $0x2c0] sm:$0xff] %v2343
        %2376 = vst [vmem:[%s256 + $0x2d8] sm:$0xff] %v2344
        %2377 = vst [vmem:[%s256 + $0x2f0] sm:$0xff] %v2345
        %v2410 = vrot.slane %v2314, 7
        %v2411 = vrot.slane %v2315, 7
        %v2412 = vsel %vm321, %v2410, %v2411
        %v2413 = vrot.slane %v2316, 7
        %v2414 = vrot.slane %v2317, 7
        %v2415 = vsel %vm321, %v2413, %v2414
        %v2416 = vrot.slane %v2318, 7
        %v2417 = vrot.slane %v2319, 7
        %v2418 = vsel %vm321, %v2416, %v2417
        %v2419 = vrot.slane %v2320, 7
        %v2420 = vrot.slane %v2321, 7
        %v2421 = vsel %vm321, %v2419, %v2420
        %v2422 = vrot.slane %v2322, 7
        %v2423 = vrot.slane %v2323, 7
        %v2424 = vsel %vm321, %v2422, %v2423
        %v2425 = vrot.slane %v2324, 7
        %v2426 = vrot.slane %v2325, 7
        %v2427 = vsel %vm321, %v2425, %v2426
        %v2428 = vrot.slane %v2326, 7
        %v2429 = vrot.slane %v2327, 7
        %v2430 = vsel %vm321, %v2428, %v2429
        %v2431 = vrot.slane %v2328, 7
        %v2432 = vrot.slane %v2329, 7
        %v2433 = vsel %vm321, %v2431, %v2432
        %v2434 = vrot.slane %v2330, 7
        %v2435 = vrot.slane %v2331, 7
        %v2436 = vsel %vm321, %v2434, %v2435
        %v2437 = vrot.slane %v2332, 7
        %v2438 = vrot.slane %v2333, 7
        %v2439 = vsel %vm321, %v2437, %v2438
        %v2440 = vrot.slane %v2334, 7
        %v2441 = vrot.slane %v2335, 7
        %v2442 = vsel %vm321, %v2440, %v2441
        %v2443 = vrot.slane %v2336, 7
        %v2444 = vrot.slane %v2337, 7
        %v2445 = vsel %vm321, %v2443, %v2444
        %v2446 = vrot.slane %v2338, 7
        %v2447 = vrot.slane %v2339, 7
        %v2448 = vsel %vm321, %v2446, %v2447
        %v2449 = vrot.slane %v2340, 7
        %v2450 = vrot.slane %v2341, 7
        %v2451 = vsel %vm321, %v2449, %v2450
        %v2452 = vrot.slane %v2342, 7
        %v2453 = vrot.slane %v2343, 7
        %v2454 = vsel %vm321, %v2452, %v2453
        %v2455 = vrot.slane %v2344, 7
        %v2456 = vrot.slane %v2345, 7
        %v2457 = vsel %vm321, %v2455, %v2456
        %2490 = vst [vmem:[%s256] sm:$0xfe] %v2410
        %2491 = vst [vmem:[%s256 + $0x18] sm:$0xff] %v2412
        %2492 = vst [vmem:[%s256 + $0x30] sm:$0xfe] %v2413
        %2493 = vst [vmem:[%s256 + $0x48] sm:$0xff] %v2415
        %2494 = vst [vmem:[%s256 + $0x60] sm:$0xfe] %v2416
        %2495 = vst [vmem:[%s256 + $0x78] sm:$0xff] %v2418
        %2496 = vst [vmem:[%s256 + $0x90] sm:$0xfe] %v2419
        %2497 = vst [vmem:[%s256 + $0xa8] sm:$0xff] %v2421
        %2498 = vst [vmem:[%s256 + $0xc0] sm:$0xfe] %v2422
        %2499 = vst [vmem:[%s256 + $0xd8] sm:$0xff] %v2424
        %2500 = vst [vmem:[%s256 + $0xf0] sm:$0xfe] %v2425
        %2501 = vst [vmem:[%s256 + $0x108] sm:$0xff] %v2427
        %2502 = vst [vmem:[%s256 + $0x120] sm:$0xfe] %v2428
        %2503 = vst [vmem:[%s256 + $0x138] sm:$0xff] %v2430
        %2504 = vst [vmem:[%s256 + $0x150] sm:$0xfe] %v2431
        %2505 = vst [vmem:[%s256 + $0x168] sm:$0xff] %v2433
        %2506 = vst [vmem:[%s256 + $0x180] sm:$0xfe] %v2434
        %2507 = vst [vmem:[%s256 + $0x198] sm:$0xff] %v2436
        %2508 = vst [vmem:[%s256 + $0x1b0] sm:$0xfe] %v2437
        %2509 = vst [vmem:[%s256 + $0x1c8] sm:$0xff] %v2439
        %2510 = vst [vmem:[%s256 + $0x1e0] sm:$0xfe] %v2440
        %2511 = vst [vmem:[%s256 + $0x1f8] sm:$0xff] %v2442
        %2512 = vst [vmem:[%s256 + $0x210] sm:$0xfe] %v2443
        %2513 = vst [vmem:[%s256 + $0x228] sm:$0xff] %v2445
        %2514 = vst [vmem:[%s256 + $0x240] sm:$0xfe] %v2446
        %2515 = vst [vmem:[%s256 + $0x258] sm:$0xff] %v2448
        %2516 = vst [vmem:[%s256 + $0x270] sm:$0xfe] %v2449
        %2517 = vst [vmem:[%s256 + $0x288] sm:$0xff] %v2451
        %2518 = vst [vmem:[%s256 + $0x2a0] sm:$0xfe] %v2452
        %2519 = vst [vmem:[%s256 + $0x2b8] sm:$0xff] %v2454
        %2520 = vst [vmem:[%s256 + $0x2d0] sm:$0xfe] %v2455
        %2521 = vst [vmem:[%s256 + $0x2e8] sm:$0xff] %v2457
        %v2522 = vrot.slane %v2314, 1
        %v2523 = vrot.slane %v2316, 1
        %v2524 = vrot.slane %v2318, 1
        %v2525 = vrot.slane %v2320, 1
        %v2526 = vrot.slane %v2322, 1
        %v2527 = vrot.slane %v2324, 1
        %v2528 = vrot.slane %v2326, 1
        %v2529 = vrot.slane %v2328, 1
        %v2530 = vrot.slane %v2330, 1
        %v2531 = vrot.slane %v2332, 1
        %v2532 = vrot.slane %v2334, 1
        %v2533 = vrot.slane %v2336, 1
        %v2534 = vrot.slane %v2338, 1
        %v2535 = vrot.slane %v2340, 1
        %v2536 = vrot.slane %v2342, 1
        %v2537 = vrot.slane %v2344, 1
        %2554 = vst [vmem:[%s256] sm:$0x1] %v2522
        %2555 = vst [vmem:[%s256 + $0x30] sm:$0x1] %v2523
        %2556 = vst [vmem:[%s256 + $0x60] sm:$0x1] %v2524
        %2557 = vst [vmem:[%s256 + $0x90] sm:$0x1] %v2525
        %2558 = vst [vmem:[%s256 + $0xc0] sm:$0x1] %v2526
        %2559 = vst [vmem:[%s256 + $0xf0] sm:$0x1] %v2527
        %2560 = vst [vmem:[%s256 + $0x120] sm:$0x1] %v2528
        %2561 = vst [vmem:[%s256 + $0x150] sm:$0x1] %v2529
        %2562 = vst [vmem:[%s256 + $0x180] sm:$0x1] %v2530
        %2563 = vst [vmem:[%s256 + $0x1b0] sm:$0x1] %v2531
        %2564 = vst [vmem:[%s256 + $0x1e0] sm:$0x1] %v2532
        %2565 = vst [vmem:[%s256 + $0x210] sm:$0x1] %v2533
        %2566 = vst [vmem:[%s256 + $0x240] sm:$0x1] %v2534
        %2567 = vst [vmem:[%s256 + $0x270] sm:$0x1] %v2535
        %2568 = vst [vmem:[%s256 + $0x2a0] sm:$0x1] %v2536
        %2569 = vst [vmem:[%s256 + $0x2d0] sm:$0x1] %v2537
        %v2570 = vrot.slane %v2315, 1
        %v2571 = vsel %vm482, %v2522, %v2570
        %v2572 = vrot.slane %v2317, 1
        %v2573 = vsel %vm482, %v2523, %v2572
        %v2574 = vrot.slane %v2319, 1
        %v2575 = vsel %vm482, %v2524, %v2574
        %v2576 = vrot.slane %v2321, 1
        %v2577 = vsel %vm482, %v2525, %v2576
        %v2578 = vrot.slane %v2323, 1
        %v2579 = vsel %vm482, %v2526, %v2578
        %v2580 = vrot.slane %v2325, 1
        %v2581 = vsel %vm482, %v2527, %v2580
        %v2582 = vrot.slane %v2327, 1
        %v2583 = vsel %vm482, %v2528, %v2582
        %v2584 = vrot.slane %v2329, 1
        %v2585 = vsel %vm482, %v2529, %v2584
        %v2586 = vrot.slane %v2331, 1
        %v2587 = vsel %vm482, %v2530, %v2586
        %v2588 = vrot.slane %v2333, 1
        %v2589 = vsel %vm482, %v2531, %v2588
        %v2590 = vrot.slane %v2335, 1
        %v2591 = vsel %vm482, %v2532, %v2590
        %v2592 = vrot.slane %v2337, 1
        %v2593 = vsel %vm482, %v2533, %v2592
        %v2594 = vrot.slane %v2339, 1
        %v2595 = vsel %vm482, %v2534, %v2594
        %v2596 = vrot.slane %v2341, 1
        %v2597 = vsel %vm482, %v2535, %v2596
        %v2598 = vrot.slane %v2343, 1
        %v2599 = vsel %vm482, %v2536, %v2598
        %v2600 = vrot.slane %v2345, 1
        %v2601 = vsel %vm482, %v2537, %v2600
        %2634 = vst [vmem:[%s256 + $0x10] sm:$0xff] %v2571
        %2635 = vst [vmem:[%s256 + $0x28] sm:$0x7f] %v2570
        %2636 = vst [vmem:[%s256 + $0x40] sm:$0xff] %v2573
        %2637 = vst [vmem:[%s256 + $0x58] sm:$0x7f] %v2572
        %2638 = vst [vmem:[%s256 + $0x70] sm:$0xff] %v2575
        %2639 = vst [vmem:[%s256 + $0x88] sm:$0x7f] %v2574
        %2640 = vst [vmem:[%s256 + $0xa0] sm:$0xff] %v2577
        %2641 = vst [vmem:[%s256 + $0xb8] sm:$0x7f] %v2576
        %2642 = vst [vmem:[%s256 + $0xd0] sm:$0xff] %v2579
        %2643 = vst [vmem:[%s256 + $0xe8] sm:$0x7f] %v2578
        %2644 = vst [vmem:[%s256 + $0x100] sm:$0xff] %v2581
        %2645 = vst [vmem:[%s256 + $0x118] sm:$0x7f] %v2580
        %2646 = vst [vmem:[%s256 + $0x130] sm:$0xff] %v2583
        %2647 = vst [vmem:[%s256 + $0x148] sm:$0x7f] %v2582
        %2648 = vst [vmem:[%s256 + $0x160] sm:$0xff] %v2585
        %2649 = vst [vmem:[%s256 + $0x178] sm:$0x7f] %v2584
        %2650 = vst [vmem:[%s256 + $0x190] sm:$0xff] %v2587
        %2651 = vst [vmem:[%s256 + $0x1a8] sm:$0x7f] %v2586
        %2652 = vst [vmem:[%s256 + $0x1c0] sm:$0xff] %v2589
        %2653 = vst [vmem:[%s256 + $0x1d8] sm:$0x7f] %v2588
        %2654 = vst [vmem:[%s256 + $0x1f0] sm:$0xff] %v2591
        %2655 = vst [vmem:[%s256 + $0x208] sm:$0x7f] %v2590
        %2656 = vst [vmem:[%s256 + $0x220] sm:$0xff] %v2593
        %2657 = vst [vmem:[%s256 + $0x238] sm:$0x7f] %v2592
        %2658 = vst [vmem:[%s256 + $0x250] sm:$0xff] %v2595
        %2659 = vst [vmem:[%s256 + $0x268] sm:$0x7f] %v2594
        %2660 = vst [vmem:[%s256 + $0x280] sm:$0xff] %v2597
        %2661 = vst [vmem:[%s256 + $0x298] sm:$0x7f] %v2596
        %2662 = vst [vmem:[%s256 + $0x2b0] sm:$0xff] %v2599
        %2663 = vst [vmem:[%s256 + $0x2c8] sm:$0x7f] %v2598
        %2664 = vst [vmem:[%s256 + $0x2e0] sm:$0xff] %v2601
        %2665 = vst [vmem:[%s256 + $0x2f8] sm:$0x7f] %v2600
        %v2666 = vrot.slane %v2315, 6
        %v2667 = vrot.slane %v2317, 6
        %v2668 = vrot.slane %v2319, 6
        %v2669 = vrot.slane %v2321, 6
        %v2670 = vrot.slane %v2323, 6
        %v2671 = vrot.slane %v2325, 6
        %v2672 = vrot.slane %v2327, 6
        %v2673 = vrot.slane %v2329, 6
        %v2674 = vrot.slane %v2331, 6
        %v2675 = vrot.slane %v2333, 6
        %v2676 = vrot.slane %v2335, 6
        %v2677 = vrot.slane %v2337, 6
        %v2678 = vrot.slane %v2339, 6
        %v2679 = vrot.slane %v2341, 6
        %v2680 = vrot.slane %v2343, 6
        %v2681 = vrot.slane %v2345, 6
        %2698 = vst [vmem:[%s256 + $0x2f] sm:$0x1] %v2666
        %2699 = vst [vmem:[%s256 + $0x5f] sm:$0x1] %v2667
        %2700 = vst [vmem:[%s256 + $0x8f] sm:$0x1] %v2668
        %2701 = vst [vmem:[%s256 + $0xbf] sm:$0x1] %v2669
        %2702 = vst [vmem:[%s256 + $0xef] sm:$0x1] %v2670
        %2703 = vst [vmem:[%s256 + $0x11f] sm:$0x1] %v2671
        %2704 = vst [vmem:[%s256 + $0x14f] sm:$0x1] %v2672
        %2705 = vst [vmem:[%s256 + $0x17f] sm:$0x1] %v2673
        %2706 = vst [vmem:[%s256 + $0x1af] sm:$0x1] %v2674
        %2707 = vst [vmem:[%s256 + $0x1df] sm:$0x1] %v2675
        %2708 = vst [vmem:[%s256 + $0x20f] sm:$0x1] %v2676
        %2709 = vst [vmem:[%s256 + $0x23f] sm:$0x1] %v2677
        %2710 = vst [vmem:[%s256 + $0x26f] sm:$0x1] %v2678
        %2711 = vst [vmem:[%s256 + $0x29f] sm:$0x1] %v2679
        %2712 = vst [vmem:[%s256 + $0x2cf] sm:$0x1] %v2680
        %2713 = vst [vmem:[%s256 + $0x2ff] sm:$0x1] %v2681
        %2714 = vst [vmem:[#allocation2 + $0x8] sm:$0xff] %v2316
        %2715 = vst [vmem:[#allocation2 + $0x20] sm:$0xff] %v2317
        %2716 = vst [vmem:[#allocation2] sm:$0xfe] %v2413
        %2717 = vst [vmem:[#allocation2 + $0x18] sm:$0xff] %v2415
        %2718 = vst [vmem:[#allocation2] sm:$0x1] %v2523
        %2719 = vst [vmem:[#allocation2 + $0x10] sm:$0xff] %v2573
        %2720 = vst [vmem:[#allocation2 + $0x28] sm:$0x7f] %v2572
        %2721 = vst [vmem:[#allocation2 + $0x2f] sm:$0x1] %v2667
        %2722 = vst [vmem:[%s635 + $0x8] sm:$0xff] %v2342
        %2723 = vst [vmem:[%s635 + $0x20] sm:$0xff] %v2343
        %2724 = vst [vmem:[%s635] sm:$0xfe] %v2452
        %2725 = vst [vmem:[%s635 + $0x18] sm:$0xff] %v2454
        %2726 = vst [vmem:[%s635] sm:$0x1] %v2536
        %2727 = vst [vmem:[%s635 + $0x10] sm:$0xff] %v2599
        %2728 = vst [vmem:[%s635 + $0x28] sm:$0x7f] %v2598
        %2729 = vst [vmem:[%s635 + $0x2f] sm:$0x1] %v2680
        %v2730 = vld [vmem:[#allocation2] sm:$0xff]
        %v2731 = vld [vmem:[#allocation2 + $0x8] sm:$0xff]
        %v2732 = vld [vmem:[#allocation2 + $0x10] sm:$0xff]
        %v2733 = vld [vmem:[#allocation2 + $0x18] sm:$0xff]
        %v2734 = vld [vmem:[#allocation2 + $0x20] sm:$0xff]
        %v2735 = vld [vmem:[#allocation2 + $0x28] sm:$0xff]
        %v2736 = vld [vmem:[#allocation2 + $0x30] sm:$0xff]
        %v2737 = vld [vmem:[#allocation2 + $0x38] sm:$0xff]
        %v2738 = vld [vmem:[#allocation2 + $0x40] sm:$0xff]
        %v2739 = vld [vmem:[#allocation2 + $0x48] sm:$0xff]
        %v2740 = vld [vmem:[#allocation2 + $0x50] sm:$0xff]
        %v2741 = vld [vmem:[#allocation2 + $0x58] sm:$0xff]
        %v2742 = vld [vmem:[#allocation2 + $0x60] sm:$0xff]
        %v2743 = vld [vmem:[#allocation2 + $0x68] sm:$0xff]
        %v2744 = vld [vmem:[#allocation2 + $0x70] sm:$0xff]
        %v2745 = vld [vmem:[#allocation2 + $0x78] sm:$0xff]
        %v2746 = vld [vmem:[#allocation2 + $0x80] sm:$0xff]
        %v2747 = vld [vmem:[#allocation2 + $0x88] sm:$0xff]
        %v2748 = vld [vmem:[#allocation2 + $0x90] sm:$0xff]
        %v2749 = vld [vmem:[#allocation2 + $0x98] sm:$0xff]
        %v2750 = vld [vmem:[#allocation2 + $0xa0] sm:$0xff]
        %v2751 = vld [vmem:[#allocation2 + $0xa8] sm:$0xff]
        %v2752 = vld [vmem:[#allocation2 + $0xb0] sm:$0xff]
        %v2753 = vld [vmem:[#allocation2 + $0xb8] sm:$0xff]
        %v2754 = vld [vmem:[#allocation2 + $0xc0] sm:$0xff]
        %v2755 = vld [vmem:[#allocation2 + $0xc8] sm:$0xff]
        %v2756 = vld [vmem:[#allocation2 + $0xd0] sm:$0xff]
        %v2757 = vld [vmem:[#allocation2 + $0xd8] sm:$0xff]
        %v2758 = vld [vmem:[#allocation2 + $0xe0] sm:$0xff]
        %v2759 = vld [vmem:[#allocation2 + $0xe8] sm:$0xff]
        %v2760 = vld [vmem:[#allocation2 + $0xf0] sm:$0xff]
        %v2761 = vld [vmem:[#allocation2 + $0xf8] sm:$0xff]
        %v2762 = vld [vmem:[#allocation2 + $0x100] sm:$0xff]
        %v2763 = vld [vmem:[#allocation2 + $0x108] sm:$0xff]
        %v2764 = vld [vmem:[#allocation2 + $0x110] sm:$0xff]
        %v2765 = vld [vmem:[#allocation2 + $0x118] sm:$0xff]
        %v2766 = vld [vmem:[#allocation2 + $0x120] sm:$0xff]
        %v2767 = vld [vmem:[#allocation2 + $0x128] sm:$0xff]
        %v2768 = vld [vmem:[#allocation2 + $0x130] sm:$0xff]
        %v2769 = vld [vmem:[#allocation2 + $0x138] sm:$0xff]
        %v2770 = vld [vmem:[#allocation2 + $0x140] sm:$0xff]
        %v2771 = vld [vmem:[#allocation2 + $0x148] sm:$0xff]
        %v2772 = vld [vmem:[#allocation2 + $0x150] sm:$0xff]
        %v2773 = vld [vmem:[#allocation2 + $0x158] sm:$0xff]
        %v2774 = vld [vmem:[#allocation2 + $0x160] sm:$0xff]
        %v2775 = vld [vmem:[#allocation2 + $0x168] sm:$0xff]
        %v2776 = vld [vmem:[#allocation2 + $0x170] sm:$0xff]
        %v2777 = vld [vmem:[#allocation2 + $0x178] sm:$0xff]
        %v2778 = vld [vmem:[#allocation2 + $0x180] sm:$0xff]
        %v2779 = vld [vmem:[#allocation2 + $0x188] sm:$0xff]
        %v2780 = vld [vmem:[#allocation2 + $0x190] sm:$0xff]
        %v2781 = vld [vmem:[#allocation2 + $0x198] sm:$0xff]
        %v2782 = vld [vmem:[#allocation2 + $0x1a0] sm:$0xff]
        %v2783 = vld [vmem:[#allocation2 + $0x1a8] sm:$0xff]
        %v2784 = vld [vmem:[#allocation2 + $0x1b0] sm:$0xff]
        %v2785 = vld [vmem:[#allocation2 + $0x1b8] sm:$0xff]
        %v2786 = vld [vmem:[#allocation2 + $0x1c0] sm:$0xff]
        %v2787 = vld [vmem:[#allocation2 + $0x1c8] sm:$0xff]
        %v2788 = vld [vmem:[#allocation2 + $0x1d0] sm:$0xff]
        %v2789 = vld [vmem:[#allocation2 + $0x1d8] sm:$0xff]
        %v2790 = vld [vmem:[#allocation2 + $0x1e0] sm:$0xff]
        %v2791 = vld [vmem:[#allocation2 + $0x1e8] sm:$0xff]
        %v2792 = vld [vmem:[#allocation2 + $0x1f0] sm:$0xff]
        %v2793 = vld [vmem:[#allocation2 + $0x1f8] sm:$0xff]
        %v2794 = vld [vmem:[#allocation2 + $0x200] sm:$0xff]
        %v2795 = vld [vmem:[#allocation2 + $0x208] sm:$0xff]
        %v2796 = vld [vmem:[#allocation2 + $0x210] sm:$0xff]
        %v2797 = vld [vmem:[#allocation2 + $0x218] sm:$0xff]
        %v2798 = vld [vmem:[#allocation2 + $0x220] sm:$0xff]
        %v2799 = vld [vmem:[#allocation2 + $0x228] sm:$0xff]
        %v2800 = vld [vmem:[#allocation2 + $0x230] sm:$0xff]
        %v2801 = vld [vmem:[#allocation2 + $0x238] sm:$0xff]
        %v2802 = vld [vmem:[#allocation2 + $0x240] sm:$0xff]
        %v2803 = vld [vmem:[#allocation2 + $0x248] sm:$0xff]
        %v2804 = vld [vmem:[#allocation2 + $0x250] sm:$0xff]
        %v2805 = vld [vmem:[#allocation2 + $0x258] sm:$0xff]
        %v2806 = vld [vmem:[#allocation2 + $0x260] sm:$0xff]
        %v2807 = vld [vmem:[#allocation2 + $0x268] sm:$0xff]
        %v2808 = vld [vmem:[#allocation2 + $0x270] sm:$0xff]
        %v2809 = vld [vmem:[#allocation2 + $0x278] sm:$0xff]
        %v2810 = vld [vmem:[#allocation2 + $0x280] sm:$0xff]
        %v2811 = vld [vmem:[#allocation2 + $0x288] sm:$0xff]
        %v2812 = vld [vmem:[#allocation2 + $0x290] sm:$0xff]
        %v2813 = vld [vmem:[#allocation2 + $0x298] sm:$0xff]
        %v2814 = vld [vmem:[#allocation2 + $0x2a0] sm:$0xff]
        %v2815 = vld [vmem:[#allocation2 + $0x2a8] sm:$0xff]
        %v2816 = vld [vmem:[#allocation2 + $0x2b0] sm:$0xff]
        %v2817 = vld [vmem:[#allocation2 + $0x2b8] sm:$0xff]
        %v2818 = vld [vmem:[#allocation2 + $0x2c0] sm:$0xff]
        %v2819 = vld [vmem:[#allocation2 + $0x2c8] sm:$0xff]
        %v2820 = vld [vmem:[#allocation2 + $0x2d0] sm:$0xff]
        %v2821 = vld [vmem:[#allocation2 + $0x2d8] sm:$0xff]
        %v2822 = vld [vmem:[#allocation2 + $0x2e0] sm:$0xff]
        %v2823 = vld [vmem:[#allocation2 + $0x2e8] sm:$0xff]
        %v2824 = vld [vmem:[#allocation2 + $0x2f0] sm:$0xff]
        %v2825 = vld [vmem:[#allocation2 + $0x2f8] sm:$0xff]
        %v2826 = vld [vmem:[#allocation8] sm:$0xff]
        %v2827 = vld [vmem:[#allocation8 + $0x8] sm:$0xff]
        %v2828 = vld [vmem:[#allocation8 + $0x10] sm:$0xff]
        %v2829 = vld [vmem:[#allocation8 + $0x18] sm:$0xff]
        %v2830 = vld [vmem:[#allocation8 + $0x20] sm:$0xff]
        %v2831 = vld [vmem:[#allocation8 + $0x28] sm:$0xff]
        %v2832 = vld [vmem:[#allocation8 + $0x30] sm:$0xff]
        %v2833 = vld [vmem:[#allocation8 + $0x38] sm:$0xff]
        %v2834 = vld [vmem:[#allocation8 + $0x40] sm:$0xff]
        %v2835 = vld [vmem:[#allocation8 + $0x48] sm:$0xff]
        %v2836 = vld [vmem:[#allocation8 + $0x50] sm:$0xff]
        %v2837 = vld [vmem:[#allocation8 + $0x58] sm:$0xff]
        %v2838 = vld [vmem:[#allocation8 + $0x60] sm:$0xff]
        %v2839 = vld [vmem:[#allocation8 + $0x68] sm:$0xff]
        %v2840 = vld [vmem:[#allocation8 + $0x70] sm:$0xff]
        %v2841 = vld [vmem:[#allocation8 + $0x78] sm:$0xff]
        %v2842 = vld [vmem:[#allocation8 + $0x80] sm:$0xff]
        %v2843 = vld [vmem:[#allocation8 + $0x88] sm:$0xff]
        %v2844 = vld [vmem:[#allocation8 + $0x90] sm:$0xff]
        %v2845 = vld [vmem:[#allocation8 + $0x98] sm:$0xff]
        %v2846 = vld [vmem:[#allocation8 + $0xa0] sm:$0xff]
        %v2847 = vld [vmem:[#allocation8 + $0xa8] sm:$0xff]
        %v2848 = vld [vmem:[#allocation8 + $0xb0] sm:$0xff]
        %v2849 = vld [vmem:[#allocation8 + $0xb8] sm:$0xff]
        %v2850 = vld [vmem:[#allocation8 + $0xc0] sm:$0xff]
        %v2851 = vld [vmem:[#allocation8 + $0xc8] sm:$0xff]
        %v2852 = vld [vmem:[#allocation8 + $0xd0] sm:$0xff]
        %v2853 = vld [vmem:[#allocation8 + $0xd8] sm:$0xff]
        %v2854 = vld [vmem:[#allocation8 + $0xe0] sm:$0xff]
        %v2855 = vld [vmem:[#allocation8 + $0xe8] sm:$0xff]
        %v2856 = vld [vmem:[#allocation8 + $0xf0] sm:$0xff]
        %v2857 = vld [vmem:[#allocation8 + $0xf8] sm:$0xff]
        %v2858 = vld [vmem:[#allocation8 + $0x100] sm:$0xff]
        %v2859 = vld [vmem:[#allocation8 + $0x108] sm:$0xff]
        %v2860 = vld [vmem:[#allocation8 + $0x110] sm:$0xff]
        %v2861 = vld [vmem:[#allocation8 + $0x118] sm:$0xff]
        %v2862 = vld [vmem:[#allocation8 + $0x120] sm:$0xff]
        %v2863 = vld [vmem:[#allocation8 + $0x128] sm:$0xff]
        %v2864 = vld [vmem:[#allocation8 + $0x130] sm:$0xff]
        %v2865 = vld [vmem:[#allocation8 + $0x138] sm:$0xff]
        %v2866 = vld [vmem:[#allocation8 + $0x140] sm:$0xff]
        %v2867 = vld [vmem:[#allocation8 + $0x148] sm:$0xff]
        %v2868 = vld [vmem:[#allocation8 + $0x150] sm:$0xff]
        %v2869 = vld [vmem:[#allocation8 + $0x158] sm:$0xff]
        %v2870 = vld [vmem:[#allocation8 + $0x160] sm:$0xff]
        %v2871 = vld [vmem:[#allocation8 + $0x168] sm:$0xff]
        %v2872 = vld [vmem:[#allocation8 + $0x170] sm:$0xff]
        %v2873 = vld [vmem:[#allocation8 + $0x178] sm:$0xff]
        %v2874 = vld [vmem:[%s256] sm:$0xff]
        %v2875 = vld [vmem:[%s256 + $0x8] sm:$0xff]
        %v2876 = vld [vmem:[%s256 + $0x10] sm:$0xff]
        %v2877 = vld [vmem:[%s256 + $0x18] sm:$0xff]
        %v2878 = vld [vmem:[%s256 + $0x20] sm:$0xff]
        %v2879 = vld [vmem:[%s256 + $0x28] sm:$0xff]
        %v2880 = vld [vmem:[%s256 + $0x30] sm:$0xff]
        %v2881 = vld [vmem:[%s256 + $0x38] sm:$0xff]
        %v2882 = vld [vmem:[%s256 + $0x40] sm:$0xff]
        %v2883 = vld [vmem:[%s256 + $0x48] sm:$0xff]
        %v2884 = vld [vmem:[%s256 + $0x50] sm:$0xff]
        %v2885 = vld [vmem:[%s256 + $0x58] sm:$0xff]
        %v2886 = vld [vmem:[%s256 + $0x60] sm:$0xff]
        %v2887 = vld [vmem:[%s256 + $0x68] sm:$0xff]
        %v2888 = vld [vmem:[%s256 + $0x70] sm:$0xff]
        %v2889 = vld [vmem:[%s256 + $0x78] sm:$0xff]
        %v2890 = vld [vmem:[%s256 + $0x80] sm:$0xff]
        %v2891 = vld [vmem:[%s256 + $0x88] sm:$0xff]
        %v2892 = vld [vmem:[%s256 + $0x90] sm:$0xff]
        %v2893 = vld [vmem:[%s256 + $0x98] sm:$0xff]
        %v2894 = vld [vmem:[%s256 + $0xa0] sm:$0xff]
        %v2895 = vld [vmem:[%s256 + $0xa8] sm:$0xff]
        %v2896 = vld [vmem:[%s256 + $0xb0] sm:$0xff]
        %v2897 = vld [vmem:[%s256 + $0xb8] sm:$0xff]
        %v2898 = vld [vmem:[%s256 + $0xc0] sm:$0xff]
        %v2899 = vld [vmem:[%s256 + $0xc8] sm:$0xff]
        %v2900 = vld [vmem:[%s256 + $0xd0] sm:$0xff]
        %v2901 = vld [vmem:[%s256 + $0xd8] sm:$0xff]
        %v2902 = vld [vmem:[%s256 + $0xe0] sm:$0xff]
        %v2903 = vld [vmem:[%s256 + $0xe8] sm:$0xff]
        %v2904 = vld [vmem:[%s256 + $0xf0] sm:$0xff]
        %v2905 = vld [vmem:[%s256 + $0xf8] sm:$0xff]
        %v2906 = vld [vmem:[%s256 + $0x100] sm:$0xff]
        %v2907 = vld [vmem:[%s256 + $0x108] sm:$0xff]
        %v2908 = vld [vmem:[%s256 + $0x110] sm:$0xff]
        %v2909 = vld [vmem:[%s256 + $0x118] sm:$0xff]
        %v2910 = vld [vmem:[%s256 + $0x120] sm:$0xff]
        %v2911 = vld [vmem:[%s256 + $0x128] sm:$0xff]
        %v2912 = vld [vmem:[%s256 + $0x130] sm:$0xff]
        %v2913 = vld [vmem:[%s256 + $0x138] sm:$0xff]
        %v2914 = vld [vmem:[%s256 + $0x140] sm:$0xff]
        %v2915 = vld [vmem:[%s256 + $0x148] sm:$0xff]
        %v2916 = vld [vmem:[%s256 + $0x150] sm:$0xff]
        %v2917 = vld [vmem:[%s256 + $0x158] sm:$0xff]
        %v2918 = vld [vmem:[%s256 + $0x160] sm:$0xff]
        %v2919 = vld [vmem:[%s256 + $0x168] sm:$0xff]
        %v2920 = vld [vmem:[%s256 + $0x170] sm:$0xff]
        %v2921 = vld [vmem:[%s256 + $0x178] sm:$0xff]
        %v2922 = vld [vmem:[%s256 + $0x180] sm:$0xff]
        %v2923 = vld [vmem:[%s256 + $0x188] sm:$0xff]
        %v2924 = vld [vmem:[%s256 + $0x190] sm:$0xff]
        %v2925 = vld [vmem:[%s256 + $0x198] sm:$0xff]
        %v2926 = vld [vmem:[%s256 + $0x1a0] sm:$0xff]
        %v2927 = vld [vmem:[%s256 + $0x1a8] sm:$0xff]
        %v2928 = vld [vmem:[%s256 + $0x1b0] sm:$0xff]
        %v2929 = vld [vmem:[%s256 + $0x1b8] sm:$0xff]
        %v2930 = vld [vmem:[%s256 + $0x1c0] sm:$0xff]
        %v2931 = vld [vmem:[%s256 + $0x1c8] sm:$0xff]
        %v2932 = vld [vmem:[%s256 + $0x1d0] sm:$0xff]
        %v2933 = vld [vmem:[%s256 + $0x1d8] sm:$0xff]
        %v2934 = vld [vmem:[%s256 + $0x1e0] sm:$0xff]
        %v2935 = vld [vmem:[%s256 + $0x1e8] sm:$0xff]
        %v2936 = vld [vmem:[%s256 + $0x1f0] sm:$0xff]
        %v2937 = vld [vmem:[%s256 + $0x1f8] sm:$0xff]
        %v2938 = vld [vmem:[%s256 + $0x200] sm:$0xff]
        %v2939 = vld [vmem:[%s256 + $0x208] sm:$0xff]
        %v2940 = vld [vmem:[%s256 + $0x210] sm:$0xff]
        %v2941 = vld [vmem:[%s256 + $0x218] sm:$0xff]
        %v2942 = vld [vmem:[%s256 + $0x220] sm:$0xff]
        %v2943 = vld [vmem:[%s256 + $0x228] sm:$0xff]
        %v2944 = vld [vmem:[%s256 + $0x230] sm:$0xff]
        %v2945 = vld [vmem:[%s256 + $0x238] sm:$0xff]
        %v2946 = vld [vmem:[%s256 + $0x240] sm:$0xff]
        %v2947 = vld [vmem:[%s256 + $0x248] sm:$0xff]
        %v2948 = vld [vmem:[%s256 + $0x250] sm:$0xff]
        %v2949 = vld [vmem:[%s256 + $0x258] sm:$0xff]
        %v2950 = vld [vmem:[%s256 + $0x260] sm:$0xff]
        %v2951 = vld [vmem:[%s256 + $0x268] sm:$0xff]
        %v2952 = vld [vmem:[%s256 + $0x270] sm:$0xff]
        %v2953 = vld [vmem:[%s256 + $0x278] sm:$0xff]
        %v2954 = vld [vmem:[%s256 + $0x280] sm:$0xff]
        %v2955 = vld [vmem:[%s256 + $0x288] sm:$0xff]
        %v2956 = vld [vmem:[%s256 + $0x290] sm:$0xff]
        %v2957 = vld [vmem:[%s256 + $0x298] sm:$0xff]
        %v2958 = vld [vmem:[%s256 + $0x2a0] sm:$0xff]
        %v2959 = vld [vmem:[%s256 + $0x2a8] sm:$0xff]
        %v2960 = vld [vmem:[%s256 + $0x2b0] sm:$0xff]
        %v2961 = vld [vmem:[%s256 + $0x2b8] sm:$0xff]
        %v2962 = vld [vmem:[%s256 + $0x2c0] sm:$0xff]
        %v2963 = vld [vmem:[%s256 + $0x2c8] sm:$0xff]
        %v2964 = vld [vmem:[%s256 + $0x2d0] sm:$0xff]
        %v2965 = vld [vmem:[%s256 + $0x2d8] sm:$0xff]
        %v2966 = vld [vmem:[%s256 + $0x2e0] sm:$0xff]
        %v2967 = vld [vmem:[%s256 + $0x2e8] sm:$0xff]
        %v2968 = vld [vmem:[%s256 + $0x2f0] sm:$0xff]
        %v2969 = vld [vmem:[%s256 + $0x2f8] sm:$0xff]
        %s2970 = scalar_lea.vmem [#allocation8], 384
        %v2971 = vld [vmem:[%s2970] sm:$0xff]
        %v2972 = vld [vmem:[%s2970 + $0x8] sm:$0xff]
        %v2973 = vld [vmem:[%s2970 + $0x10] sm:$0xff]
        %v2974 = vld [vmem:[%s2970 + $0x18] sm:$0xff]
        %v2975 = vld [vmem:[%s2970 + $0x20] sm:$0xff]
        %v2976 = vld [vmem:[%s2970 + $0x28] sm:$0xff]
        %v2977 = vld [vmem:[%s2970 + $0x30] sm:$0xff]
        %v2978 = vld [vmem:[%s2970 + $0x38] sm:$0xff]
        %v2979 = vld [vmem:[%s2970 + $0x40] sm:$0xff]
        %v2980 = vld [vmem:[%s2970 + $0x48] sm:$0xff]
        %v2981 = vld [vmem:[%s2970 + $0x50] sm:$0xff]
        %v2982 = vld [vmem:[%s2970 + $0x58] sm:$0xff]
        %v2983 = vld [vmem:[%s2970 + $0x60] sm:$0xff]
        %v2984 = vld [vmem:[%s2970 + $0x68] sm:$0xff]
        %v2985 = vld [vmem:[%s2970 + $0x70] sm:$0xff]
        %v2986 = vld [vmem:[%s2970 + $0x78] sm:$0xff]
        %v2987 = vld [vmem:[%s2970 + $0x80] sm:$0xff]
        %v2988 = vld [vmem:[%s2970 + $0x88] sm:$0xff]
        %v2989 = vld [vmem:[%s2970 + $0x90] sm:$0xff]
        %v2990 = vld [vmem:[%s2970 + $0x98] sm:$0xff]
        %v2991 = vld [vmem:[%s2970 + $0xa0] sm:$0xff]
        %v2992 = vld [vmem:[%s2970 + $0xa8] sm:$0xff]
        %v2993 = vld [vmem:[%s2970 + $0xb0] sm:$0xff]
        %v2994 = vld [vmem:[%s2970 + $0xb8] sm:$0xff]
        %v2995 = vld [vmem:[%s2970 + $0xc0] sm:$0xff]
        %v2996 = vld [vmem:[%s2970 + $0xc8] sm:$0xff]
        %v2997 = vld [vmem:[%s2970 + $0xd0] sm:$0xff]
        %v2998 = vld [vmem:[%s2970 + $0xd8] sm:$0xff]
        %v2999 = vld [vmem:[%s2970 + $0xe0] sm:$0xff]
        %v3000 = vld [vmem:[%s2970 + $0xe8] sm:$0xff]
        %v3001 = vld [vmem:[%s2970 + $0xf0] sm:$0xff]
        %v3002 = vld [vmem:[%s2970 + $0xf8] sm:$0xff]
        %v3003 = vld [vmem:[%s2970 + $0x100] sm:$0xff]
        %v3004 = vld [vmem:[%s2970 + $0x108] sm:$0xff]
        %v3005 = vld [vmem:[%s2970 + $0x110] sm:$0xff]
        %v3006 = vld [vmem:[%s2970 + $0x118] sm:$0xff]
        %v3007 = vld [vmem:[%s2970 + $0x120] sm:$0xff]
        %v3008 = vld [vmem:[%s2970 + $0x128] sm:$0xff]
        %v3009 = vld [vmem:[%s2970 + $0x130] sm:$0xff]
        %v3010 = vld [vmem:[%s2970 + $0x138] sm:$0xff]
        %v3011 = vld [vmem:[%s2970 + $0x140] sm:$0xff]
        %v3012 = vld [vmem:[%s2970 + $0x148] sm:$0xff]
        %v3013 = vld [vmem:[%s2970 + $0x150] sm:$0xff]
        %v3014 = vld [vmem:[%s2970 + $0x158] sm:$0xff]
        %v3015 = vld [vmem:[%s2970 + $0x160] sm:$0xff]
        %v3016 = vld [vmem:[%s2970 + $0x168] sm:$0xff]
        %v3017 = vld [vmem:[%s2970 + $0x170] sm:$0xff]
        %v3018 = vld [vmem:[%s2970 + $0x178] sm:$0xff]
        %3019 = vmatpush.msra.mxu0 %v2986
        %3020 = vmatpush.msra.mxu0 %v2985
        %3021 = vmatpush.msra.mxu0 %v2984
        %3022 = vmatpush.msra.mxu0 %v2983
        %3023 = vmatpush.msra.mxu0 %v2982
        %3024 = vmatpush.msra.mxu0 %v2981
        %3025 = vmatpush.msra.mxu0 %v2980
        %3026 = vmatpush.msra.mxu0 %v2979
        %3027 = vmatpush.msra.mxu0 %v2978
        %3028 = vmatpush.msra.mxu0 %v2977
        %3029 = vmatpush.msra.mxu0 %v2976
        %3030 = vmatpush.msra.mxu0 %v2975
        %3031 = vmatpush.msra.mxu0 %v2974
        %3032 = vmatpush.msra.mxu0 %v2973
        %3033 = vmatpush.msra.mxu0 %v2972
        %3034 = vmatpush.msra.mxu0 %v2971
        %3035 = vmatmul.f32.gmra.mxu0 %v2874
        %v3036 = vpop.f32.mrf.mxu0
        %v3037 = vadd.f32 0.0, %v3036
        %3038 = vmatmul.f32.gmra.mxu0 %v2877
        %v3039 = vpop.f32.mrf.mxu0
        %v3040 = vadd.f32 0.0, %v3039
        %3041 = vmatmul.f32.gmra.mxu0 %v2880
        %v3042 = vpop.f32.mrf.mxu0
        %v3043 = vadd.f32 0.0, %v3042
        %3044 = vmatmul.f32.gmra.mxu0 %v2883
        %v3045 = vpop.f32.mrf.mxu0
        %v3046 = vadd.f32 0.0, %v3045
        %3047 = vmatmul.f32.gmra.mxu0 %v2886
        %v3048 = vpop.f32.mrf.mxu0
        %v3049 = vadd.f32 0.0, %v3048
        %3050 = vmatmul.f32.gmra.mxu0 %v2889
        %v3051 = vpop.f32.mrf.mxu0
        %v3052 = vadd.f32 0.0, %v3051
        %3053 = vmatmul.f32.gmra.mxu0 %v2892
        %v3054 = vpop.f32.mrf.mxu0
        %v3055 = vadd.f32 0.0, %v3054
        %3056 = vmatmul.f32.gmra.mxu0 %v2895
        %v3057 = vpop.f32.mrf.mxu0
        %v3058 = vadd.f32 0.0, %v3057
        %3059 = vmatmul.f32.gmra.mxu0 %v2898
        %v3060 = vpop.f32.mrf.mxu0
        %v3061 = vadd.f32 0.0, %v3060
        %3062 = vmatmul.f32.gmra.mxu0 %v2901
        %v3063 = vpop.f32.mrf.mxu0
        %v3064 = vadd.f32 0.0, %v3063
        %3065 = vmatmul.f32.gmra.mxu0 %v2904
        %v3066 = vpop.f32.mrf.mxu0
        %v3067 = vadd.f32 0.0, %v3066
        %3068 = vmatmul.f32.gmra.mxu0 %v2907
        %v3069 = vpop.f32.mrf.mxu0
        %v3070 = vadd.f32 0.0, %v3069
        %3071 = vmatmul.f32.gmra.mxu0 %v2910
        %v3072 = vpop.f32.mrf.mxu0
        %v3073 = vadd.f32 0.0, %v3072
        %3074 = vmatmul.f32.gmra.mxu0 %v2913
        %v3075 = vpop.f32.mrf.mxu0
        %v3076 = vadd.f32 0.0, %v3075
        %3077 = vmatmul.f32.gmra.mxu0 %v2916
        %v3078 = vpop.f32.mrf.mxu0
        %v3079 = vadd.f32 0.0, %v3078
        %3080 = vmatmul.f32.gmra.mxu0 %v2919
        %v3081 = vpop.f32.mrf.mxu0
        %v3082 = vadd.f32 0.0, %v3081
        %3083 = vmatmul.f32.gmra.mxu0 %v2922
        %v3084 = vpop.f32.mrf.mxu0
        %v3085 = vadd.f32 0.0, %v3084
        %3086 = vmatmul.f32.gmra.mxu0 %v2925
        %v3087 = vpop.f32.mrf.mxu0
        %v3088 = vadd.f32 0.0, %v3087
        %3089 = vmatmul.f32.gmra.mxu0 %v2928
        %v3090 = vpop.f32.mrf.mxu0
        %v3091 = vadd.f32 0.0, %v3090
        %3092 = vmatmul.f32.gmra.mxu0 %v2931
        %v3093 = vpop.f32.mrf.mxu0
        %v3094 = vadd.f32 0.0, %v3093
        %3095 = vmatmul.f32.gmra.mxu0 %v2934
        %v3096 = vpop.f32.mrf.mxu0
        %v3097 = vadd.f32 0.0, %v3096
        %3098 = vmatmul.f32.gmra.mxu0 %v2937
        %v3099 = vpop.f32.mrf.mxu0
        %v3100 = vadd.f32 0.0, %v3099
        %3101 = vmatmul.f32.gmra.mxu0 %v2940
        %v3102 = vpop.f32.mrf.mxu0
        %v3103 = vadd.f32 0.0, %v3102
        %3104 = vmatmul.f32.gmra.mxu0 %v2943
        %v3105 = vpop.f32.mrf.mxu0
        %v3106 = vadd.f32 0.0, %v3105
        %3107 = vmatmul.f32.gmra.mxu0 %v2946
        %v3108 = vpop.f32.mrf.mxu0
        %v3109 = vadd.f32 0.0, %v3108
        %3110 = vmatmul.f32.gmra.mxu0 %v2949
        %v3111 = vpop.f32.mrf.mxu0
        %v3112 = vadd.f32 0.0, %v3111
        %3113 = vmatmul.f32.gmra.mxu0 %v2952
        %v3114 = vpop.f32.mrf.mxu0
        %v3115 = vadd.f32 0.0, %v3114
        %3116 = vmatmul.f32.gmra.mxu0 %v2955
        %v3117 = vpop.f32.mrf.mxu0
        %v3118 = vadd.f32 0.0, %v3117
        %3119 = vmatmul.f32.gmra.mxu0 %v2958
        %v3120 = vpop.f32.mrf.mxu0
        %v3121 = vadd.f32 0.0, %v3120
        %3122 = vmatmul.f32.gmra.mxu0 %v2961
        %v3123 = vpop.f32.mrf.mxu0
        %v3124 = vadd.f32 0.0, %v3123
        %3125 = vmatmul.f32.gmra.mxu0 %v2964
        %v3126 = vpop.f32.mrf.mxu0
        %v3127 = vadd.f32 0.0, %v3126
        %3128 = vmatmul.f32.gmra.mxu0 %v2967
        %v3129 = vpop.f32.mrf.mxu0
        %v3130 = vadd.f32 0.0, %v3129
        %3131 = vdwg.mxu0
        %3132 = vmatpush.msra.mxu0 %v3002
        %3133 = vmatpush.msra.mxu0 %v3001
        %3134 = vmatpush.msra.mxu0 %v3000
        %3135 = vmatpush.msra.mxu0 %v2999
        %3136 = vmatpush.msra.mxu0 %v2998
        %3137 = vmatpush.msra.mxu0 %v2997
        %3138 = vmatpush.msra.mxu0 %v2996
        %3139 = vmatpush.msra.mxu0 %v2995
        %3140 = vmatpush.msra.mxu0 %v2994
        %3141 = vmatpush.msra.mxu0 %v2993
        %3142 = vmatpush.msra.mxu0 %v2992
        %3143 = vmatpush.msra.mxu0 %v2991
        %3144 = vmatpush.msra.mxu0 %v2990
        %3145 = vmatpush.msra.mxu0 %v2989
        %3146 = vmatpush.msra.mxu0 %v2988
        %3147 = vmatpush.msra.mxu0 %v2987
        %3148 = vmatmul.f32.gmra.mxu0 %v2875
        %v3149 = vpop.f32.mrf.mxu0
        %v3150 = vadd.f32 %v3037, %v3149
        %3151 = vmatmul.f32.gmra.mxu0 %v2878
        %v3152 = vpop.f32.mrf.mxu0
        %v3153 = vadd.f32 %v3040, %v3152
        %3154 = vmatmul.f32.gmra.mxu0 %v2881
        %v3155 = vpop.f32.mrf.mxu0
        %v3156 = vadd.f32 %v3043, %v3155
        %3157 = vmatmul.f32.gmra.mxu0 %v2884
        %v3158 = vpop.f32.mrf.mxu0
        %v3159 = vadd.f32 %v3046, %v3158
        %3160 = vmatmul.f32.gmra.mxu0 %v2887
        %v3161 = vpop.f32.mrf.mxu0
        %v3162 = vadd.f32 %v3049, %v3161
        %3163 = vmatmul.f32.gmra.mxu0 %v2890
        %v3164 = vpop.f32.mrf.mxu0
        %v3165 = vadd.f32 %v3052, %v3164
        %3166 = vmatmul.f32.gmra.mxu0 %v2893
        %v3167 = vpop.f32.mrf.mxu0
        %v3168 = vadd.f32 %v3055, %v3167
        %3169 = vmatmul.f32.gmra.mxu0 %v2896
        %v3170 = vpop.f32.mrf.mxu0
        %v3171 = vadd.f32 %v3058, %v3170
        %3172 = vmatmul.f32.gmra.mxu0 %v2899
        %v3173 = vpop.f32.mrf.mxu0
        %v3174 = vadd.f32 %v3061, %v3173
        %3175 = vmatmul.f32.gmra.mxu0 %v2902
        %v3176 = vpop.f32.mrf.mxu0
        %v3177 = vadd.f32 %v3064, %v3176
        %3178 = vmatmul.f32.gmra.mxu0 %v2905
        %v3179 = vpop.f32.mrf.mxu0
        %v3180 = vadd.f32 %v3067, %v3179
        %3181 = vmatmul.f32.gmra.mxu0 %v2908
        %v3182 = vpop.f32.mrf.mxu0
        %v3183 = vadd.f32 %v3070, %v3182
        %3184 = vmatmul.f32.gmra.mxu0 %v2911
        %v3185 = vpop.f32.mrf.mxu0
        %v3186 = vadd.f32 %v3073, %v3185
        %3187 = vmatmul.f32.gmra.mxu0 %v2914
        %v3188 = vpop.f32.mrf.mxu0
        %v3189 = vadd.f32 %v3076, %v3188
        %3190 = vmatmul.f32.gmra.mxu0 %v2917
        %v3191 = vpop.f32.mrf.mxu0
        %v3192 = vadd.f32 %v3079, %v3191
        %3193 = vmatmul.f32.gmra.mxu0 %v2920
        %v3194 = vpop.f32.mrf.mxu0
        %v3195 = vadd.f32 %v3082, %v3194
        %3196 = vmatmul.f32.gmra.mxu0 %v2923
        %v3197 = vpop.f32.mrf.mxu0
        %v3198 = vadd.f32 %v3085, %v3197
        %3199 = vmatmul.f32.gmra.mxu0 %v2926
        %v3200 = vpop.f32.mrf.mxu0
        %v3201 = vadd.f32 %v3088, %v3200
        %3202 = vmatmul.f32.gmra.mxu0 %v2929
        %v3203 = vpop.f32.mrf.mxu0
        %v3204 = vadd.f32 %v3091, %v3203
        %3205 = vmatmul.f32.gmra.mxu0 %v2932
        %v3206 = vpop.f32.mrf.mxu0
        %v3207 = vadd.f32 %v3094, %v3206
        %3208 = vmatmul.f32.gmra.mxu0 %v2935
        %v3209 = vpop.f32.mrf.mxu0
        %v3210 = vadd.f32 %v3097, %v3209
        %3211 = vmatmul.f32.gmra.mxu0 %v2938
        %v3212 = vpop.f32.mrf.mxu0
        %v3213 = vadd.f32 %v3100, %v3212
        %3214 = vmatmul.f32.gmra.mxu0 %v2941
        %v3215 = vpop.f32.mrf.mxu0
        %v3216 = vadd.f32 %v3103, %v3215
        %3217 = vmatmul.f32.gmra.mxu0 %v2944
        %v3218 = vpop.f32.mrf.mxu0
        %v3219 = vadd.f32 %v3106, %v3218
        %3220 = vmatmul.f32.gmra.mxu0 %v2947
        %v3221 = vpop.f32.mrf.mxu0
        %v3222 = vadd.f32 %v3109, %v3221
        %3223 = vmatmul.f32.gmra.mxu0 %v2950
        %v3224 = vpop.f32.mrf.mxu0
        %v3225 = vadd.f32 %v3112, %v3224
        %3226 = vmatmul.f32.gmra.mxu0 %v2953
        %v3227 = vpop.f32.mrf.mxu0
        %v3228 = vadd.f32 %v3115, %v3227
        %3229 = vmatmul.f32.gmra.mxu0 %v2956
        %v3230 = vpop.f32.mrf.mxu0
        %v3231 = vadd.f32 %v3118, %v3230
        %3232 = vmatmul.f32.gmra.mxu0 %v2959
        %v3233 = vpop.f32.mrf.mxu0
        %v3234 = vadd.f32 %v3121, %v3233
        %3235 = vmatmul.f32.gmra.mxu0 %v2962
        %v3236 = vpop.f32.mrf.mxu0
        %v3237 = vadd.f32 %v3124, %v3236
        %3238 = vmatmul.f32.gmra.mxu0 %v2965
        %v3239 = vpop.f32.mrf.mxu0
        %v3240 = vadd.f32 %v3127, %v3239
        %3241 = vmatmul.f32.gmra.mxu0 %v2968
        %v3242 = vpop.f32.mrf.mxu0
        %v3243 = vadd.f32 %v3130, %v3242
        %3244 = vdwg.mxu0
        %3245 = vmatpush.msra.mxu0 %v3018
        %3246 = vmatpush.msra.mxu0 %v3017
        %3247 = vmatpush.msra.mxu0 %v3016
        %3248 = vmatpush.msra.mxu0 %v3015
        %3249 = vmatpush.msra.mxu0 %v3014
        %3250 = vmatpush.msra.mxu0 %v3013
        %3251 = vmatpush.msra.mxu0 %v3012
        %3252 = vmatpush.msra.mxu0 %v3011
        %3253 = vmatpush.msra.mxu0 %v3010
        %3254 = vmatpush.msra.mxu0 %v3009
        %3255 = vmatpush.msra.mxu0 %v3008
        %3256 = vmatpush.msra.mxu0 %v3007
        %3257 = vmatpush.msra.mxu0 %v3006
        %3258 = vmatpush.msra.mxu0 %v3005
        %3259 = vmatpush.msra.mxu0 %v3004
        %3260 = vmatpush.msra.mxu0 %v3003
        %3261 = vmatmul.f32.gmra.mxu0 %v2876
        %v3262 = vpop.f32.mrf.mxu0
        %v3263 = vadd.f32 %v3150, %v3262
        %3264 = vmatmul.f32.gmra.mxu0 %v2879
        %v3265 = vpop.f32.mrf.mxu0
        %v3266 = vadd.f32 %v3153, %v3265
        %3267 = vmatmul.f32.gmra.mxu0 %v2882
        %v3268 = vpop.f32.mrf.mxu0
        %v3269 = vadd.f32 %v3156, %v3268
        %3270 = vmatmul.f32.gmra.mxu0 %v2885
        %v3271 = vpop.f32.mrf.mxu0
        %v3272 = vadd.f32 %v3159, %v3271
        %3273 = vmatmul.f32.gmra.mxu0 %v2888
        %v3274 = vpop.f32.mrf.mxu0
        %v3275 = vadd.f32 %v3162, %v3274
        %3276 = vmatmul.f32.gmra.mxu0 %v2891
        %v3277 = vpop.f32.mrf.mxu0
        %v3278 = vadd.f32 %v3165, %v3277
        %3279 = vmatmul.f32.gmra.mxu0 %v2894
        %v3280 = vpop.f32.mrf.mxu0
        %v3281 = vadd.f32 %v3168, %v3280
        %3282 = vmatmul.f32.gmra.mxu0 %v2897
        %v3283 = vpop.f32.mrf.mxu0
        %v3284 = vadd.f32 %v3171, %v3283
        %3285 = vmatmul.f32.gmra.mxu0 %v2900
        %v3286 = vpop.f32.mrf.mxu0
        %v3287 = vadd.f32 %v3174, %v3286
        %3288 = vmatmul.f32.gmra.mxu0 %v2903
        %v3289 = vpop.f32.mrf.mxu0
        %v3290 = vadd.f32 %v3177, %v3289
        %3291 = vmatmul.f32.gmra.mxu0 %v2906
        %v3292 = vpop.f32.mrf.mxu0
        %v3293 = vadd.f32 %v3180, %v3292
        %3294 = vmatmul.f32.gmra.mxu0 %v2909
        %v3295 = vpop.f32.mrf.mxu0
        %v3296 = vadd.f32 %v3183, %v3295
        %3297 = vmatmul.f32.gmra.mxu0 %v2912
        %v3298 = vpop.f32.mrf.mxu0
        %v3299 = vadd.f32 %v3186, %v3298
        %3300 = vmatmul.f32.gmra.mxu0 %v2915
        %v3301 = vpop.f32.mrf.mxu0
        %v3302 = vadd.f32 %v3189, %v3301
        %3303 = vmatmul.f32.gmra.mxu0 %v2918
        %v3304 = vpop.f32.mrf.mxu0
        %v3305 = vadd.f32 %v3192, %v3304
        %3306 = vmatmul.f32.gmra.mxu0 %v2921
        %v3307 = vpop.f32.mrf.mxu0
        %v3308 = vadd.f32 %v3195, %v3307
        %3309 = vmatmul.f32.gmra.mxu0 %v2924
        %v3310 = vpop.f32.mrf.mxu0
        %v3311 = vadd.f32 %v3198, %v3310
        %3312 = vmatmul.f32.gmra.mxu0 %v2927
        %v3313 = vpop.f32.mrf.mxu0
        %v3314 = vadd.f32 %v3201, %v3313
        %3315 = vmatmul.f32.gmra.mxu0 %v2930
        %v3316 = vpop.f32.mrf.mxu0
        %v3317 = vadd.f32 %v3204, %v3316
        %3318 = vmatmul.f32.gmra.mxu0 %v2933
        %v3319 = vpop.f32.mrf.mxu0
        %v3320 = vadd.f32 %v3207, %v3319
        %3321 = vmatmul.f32.gmra.mxu0 %v2936
        %v3322 = vpop.f32.mrf.mxu0
        %v3323 = vadd.f32 %v3210, %v3322
        %3324 = vmatmul.f32.gmra.mxu0 %v2939
        %v3325 = vpop.f32.mrf.mxu0
        %v3326 = vadd.f32 %v3213, %v3325
        %3327 = vmatmul.f32.gmra.mxu0 %v2942
        %v3328 = vpop.f32.mrf.mxu0
        %v3329 = vadd.f32 %v3216, %v3328
        %3330 = vmatmul.f32.gmra.mxu0 %v2945
        %v3331 = vpop.f32.mrf.mxu0
        %v3332 = vadd.f32 %v3219, %v3331
        %3333 = vmatmul.f32.gmra.mxu0 %v2948
        %v3334 = vpop.f32.mrf.mxu0
        %v3335 = vadd.f32 %v3222, %v3334
        %3336 = vmatmul.f32.gmra.mxu0 %v2951
        %v3337 = vpop.f32.mrf.mxu0
        %v3338 = vadd.f32 %v3225, %v3337
        %3339 = vmatmul.f32.gmra.mxu0 %v2954
        %v3340 = vpop.f32.mrf.mxu0
        %v3341 = vadd.f32 %v3228, %v3340
        %3342 = vmatmul.f32.gmra.mxu0 %v2957
        %v3343 = vpop.f32.mrf.mxu0
        %v3344 = vadd.f32 %v3231, %v3343
        %3345 = vmatmul.f32.gmra.mxu0 %v2960
        %v3346 = vpop.f32.mrf.mxu0
        %v3347 = vadd.f32 %v3234, %v3346
        %3348 = vmatmul.f32.gmra.mxu0 %v2963
        %v3349 = vpop.f32.mrf.mxu0
        %v3350 = vadd.f32 %v3237, %v3349
        %3351 = vmatmul.f32.gmra.mxu0 %v2966
        %v3352 = vpop.f32.mrf.mxu0
        %v3353 = vadd.f32 %v3240, %v3352
        %3354 = vmatmul.f32.gmra.mxu0 %v2969
        %v3355 = vpop.f32.mrf.mxu0
        %v3356 = vadd.f32 %v3243, %v3355
        %3357 = vdwg.mxu0
        %3358 = vmatpush.msra.mxu0 %v2841
        %3359 = vmatpush.msra.mxu0 %v2840
        %3360 = vmatpush.msra.mxu0 %v2839
        %3361 = vmatpush.msra.mxu0 %v2838
        %3362 = vmatpush.msra.mxu0 %v2837
        %3363 = vmatpush.msra.mxu0 %v2836
        %3364 = vmatpush.msra.mxu0 %v2835
        %3365 = vmatpush.msra.mxu0 %v2834
        %3366 = vmatpush.msra.mxu0 %v2833
        %3367 = vmatpush.msra.mxu0 %v2832
        %3368 = vmatpush.msra.mxu0 %v2831
        %3369 = vmatpush.msra.mxu0 %v2830
        %3370 = vmatpush.msra.mxu0 %v2829
        %3371 = vmatpush.msra.mxu0 %v2828
        %3372 = vmatpush.msra.mxu0 %v2827
        %3373 = vmatpush.msra.mxu0 %v2826
        %3374 = vmatmul.f32.gmra.mxu0 %v2730
        %v3375 = vpop.f32.mrf.mxu0
        %v3376 = vadd.f32 %v3263, %v3375
        %3377 = vmatmul.f32.gmra.mxu0 %v2733
        %v3378 = vpop.f32.mrf.mxu0
        %v3379 = vadd.f32 %v3266, %v3378
        %3380 = vmatmul.f32.gmra.mxu0 %v2736
        %v3381 = vpop.f32.mrf.mxu0
        %v3382 = vadd.f32 %v3269, %v3381
        %3383 = vmatmul.f32.gmra.mxu0 %v2739
        %v3384 = vpop.f32.mrf.mxu0
        %v3385 = vadd.f32 %v3272, %v3384
        %3386 = vmatmul.f32.gmra.mxu0 %v2742
        %v3387 = vpop.f32.mrf.mxu0
        %v3388 = vadd.f32 %v3275, %v3387
        %3389 = vmatmul.f32.gmra.mxu0 %v2745
        %v3390 = vpop.f32.mrf.mxu0
        %v3391 = vadd.f32 %v3278, %v3390
        %3392 = vmatmul.f32.gmra.mxu0 %v2748
        %v3393 = vpop.f32.mrf.mxu0
        %v3394 = vadd.f32 %v3281, %v3393
        %3395 = vmatmul.f32.gmra.mxu0 %v2751
        %v3396 = vpop.f32.mrf.mxu0
        %v3397 = vadd.f32 %v3284, %v3396
        %3398 = vmatmul.f32.gmra.mxu0 %v2754
        %v3399 = vpop.f32.mrf.mxu0
        %v3400 = vadd.f32 %v3287, %v3399
        %3401 = vmatmul.f32.gmra.mxu0 %v2757
        %v3402 = vpop.f32.mrf.mxu0
        %v3403 = vadd.f32 %v3290, %v3402
        %3404 = vmatmul.f32.gmra.mxu0 %v2760
        %v3405 = vpop.f32.mrf.mxu0
        %v3406 = vadd.f32 %v3293, %v3405
        %3407 = vmatmul.f32.gmra.mxu0 %v2763
        %v3408 = vpop.f32.mrf.mxu0
        %v3409 = vadd.f32 %v3296, %v3408
        %3410 = vmatmul.f32.gmra.mxu0 %v2766
        %v3411 = vpop.f32.mrf.mxu0
        %v3412 = vadd.f32 %v3299, %v3411
        %3413 = vmatmul.f32.gmra.mxu0 %v2769
        %v3414 = vpop.f32.mrf.mxu0
        %v3415 = vadd.f32 %v3302, %v3414
        %3416 = vmatmul.f32.gmra.mxu0 %v2772
        %v3417 = vpop.f32.mrf.mxu0
        %v3418 = vadd.f32 %v3305, %v3417
        %3419 = vmatmul.f32.gmra.mxu0 %v2775
        %v3420 = vpop.f32.mrf.mxu0
        %v3421 = vadd.f32 %v3308, %v3420
        %3422 = vmatmul.f32.gmra.mxu0 %v2778
        %v3423 = vpop.f32.mrf.mxu0
        %v3424 = vadd.f32 %v3311, %v3423
        %3425 = vmatmul.f32.gmra.mxu0 %v2781
        %v3426 = vpop.f32.mrf.mxu0
        %v3427 = vadd.f32 %v3314, %v3426
        %3428 = vmatmul.f32.gmra.mxu0 %v2784
        %v3429 = vpop.f32.mrf.mxu0
        %v3430 = vadd.f32 %v3317, %v3429
        %3431 = vmatmul.f32.gmra.mxu0 %v2787
        %v3432 = vpop.f32.mrf.mxu0
        %v3433 = vadd.f32 %v3320, %v3432
        %3434 = vmatmul.f32.gmra.mxu0 %v2790
        %v3435 = vpop.f32.mrf.mxu0
        %v3436 = vadd.f32 %v3323, %v3435
        %3437 = vmatmul.f32.gmra.mxu0 %v2793
        %v3438 = vpop.f32.mrf.mxu0
        %v3439 = vadd.f32 %v3326, %v3438
        %3440 = vmatmul.f32.gmra.mxu0 %v2796
        %v3441 = vpop.f32.mrf.mxu0
        %v3442 = vadd.f32 %v3329, %v3441
        %3443 = vmatmul.f32.gmra.mxu0 %v2799
        %v3444 = vpop.f32.mrf.mxu0
        %v3445 = vadd.f32 %v3332, %v3444
        %3446 = vmatmul.f32.gmra.mxu0 %v2802
        %v3447 = vpop.f32.mrf.mxu0
        %v3448 = vadd.f32 %v3335, %v3447
        %3449 = vmatmul.f32.gmra.mxu0 %v2805
        %v3450 = vpop.f32.mrf.mxu0
        %v3451 = vadd.f32 %v3338, %v3450
        %3452 = vmatmul.f32.gmra.mxu0 %v2808
        %v3453 = vpop.f32.mrf.mxu0
        %v3454 = vadd.f32 %v3341, %v3453
        %3455 = vmatmul.f32.gmra.mxu0 %v2811
        %v3456 = vpop.f32.mrf.mxu0
        %v3457 = vadd.f32 %v3344, %v3456
        %3458 = vmatmul.f32.gmra.mxu0 %v2814
        %v3459 = vpop.f32.mrf.mxu0
        %v3460 = vadd.f32 %v3347, %v3459
        %3461 = vmatmul.f32.gmra.mxu0 %v2817
        %v3462 = vpop.f32.mrf.mxu0
        %v3463 = vadd.f32 %v3350, %v3462
        %3464 = vmatmul.f32.gmra.mxu0 %v2820
        %v3465 = vpop.f32.mrf.mxu0
        %v3466 = vadd.f32 %v3353, %v3465
        %3467 = vmatmul.f32.gmra.mxu0 %v2823
        %v3468 = vpop.f32.mrf.mxu0
        %v3469 = vadd.f32 %v3356, %v3468
        %3470 = vdwg.mxu0
        %3471 = vmatpush.msra.mxu0 %v2857
        %3472 = vmatpush.msra.mxu0 %v2856
        %3473 = vmatpush.msra.mxu0 %v2855
        %3474 = vmatpush.msra.mxu0 %v2854
        %3475 = vmatpush.msra.mxu0 %v2853
        %3476 = vmatpush.msra.mxu0 %v2852
        %3477 = vmatpush.msra.mxu0 %v2851
        %3478 = vmatpush.msra.mxu0 %v2850
        %3479 = vmatpush.msra.mxu0 %v2849
        %3480 = vmatpush.msra.mxu0 %v2848
        %3481 = vmatpush.msra.mxu0 %v2847
        %3482 = vmatpush.msra.mxu0 %v2846
        %3483 = vmatpush.msra.mxu0 %v2845
        %3484 = vmatpush.msra.mxu0 %v2844
        %3485 = vmatpush.msra.mxu0 %v2843
        %3486 = vmatpush.msra.mxu0 %v2842
        %3487 = vmatmul.f32.gmra.mxu0 %v2731
        %v3488 = vpop.f32.mrf.mxu0
        %v3489 = vadd.f32 %v3376, %v3488
        %3490 = vmatmul.f32.gmra.mxu0 %v2734
        %v3491 = vpop.f32.mrf.mxu0
        %v3492 = vadd.f32 %v3379, %v3491
        %3493 = vmatmul.f32.gmra.mxu0 %v2737
        %v3494 = vpop.f32.mrf.mxu0
        %v3495 = vadd.f32 %v3382, %v3494
        %3496 = vmatmul.f32.gmra.mxu0 %v2740
        %v3497 = vpop.f32.mrf.mxu0
        %v3498 = vadd.f32 %v3385, %v3497
        %3499 = vmatmul.f32.gmra.mxu0 %v2743
        %v3500 = vpop.f32.mrf.mxu0
        %v3501 = vadd.f32 %v3388, %v3500
        %3502 = vmatmul.f32.gmra.mxu0 %v2746
        %v3503 = vpop.f32.mrf.mxu0
        %v3504 = vadd.f32 %v3391, %v3503
        %3505 = vmatmul.f32.gmra.mxu0 %v2749
        %v3506 = vpop.f32.mrf.mxu0
        %v3507 = vadd.f32 %v3394, %v3506
        %3508 = vmatmul.f32.gmra.mxu0 %v2752
        %v3509 = vpop.f32.mrf.mxu0
        %v3510 = vadd.f32 %v3397, %v3509
        %3511 = vmatmul.f32.gmra.mxu0 %v2755
        %v3512 = vpop.f32.mrf.mxu0
        %v3513 = vadd.f32 %v3400, %v3512
        %3514 = vmatmul.f32.gmra.mxu0 %v2758
        %v3515 = vpop.f32.mrf.mxu0
        %v3516 = vadd.f32 %v3403, %v3515
        %3517 = vmatmul.f32.gmra.mxu0 %v2761
        %v3518 = vpop.f32.mrf.mxu0
        %v3519 = vadd.f32 %v3406, %v3518
        %3520 = vmatmul.f32.gmra.mxu0 %v2764
        %v3521 = vpop.f32.mrf.mxu0
        %v3522 = vadd.f32 %v3409, %v3521
        %3523 = vmatmul.f32.gmra.mxu0 %v2767
        %v3524 = vpop.f32.mrf.mxu0
        %v3525 = vadd.f32 %v3412, %v3524
        %3526 = vmatmul.f32.gmra.mxu0 %v2770
        %v3527 = vpop.f32.mrf.mxu0
        %v3528 = vadd.f32 %v3415, %v3527
        %3529 = vmatmul.f32.gmra.mxu0 %v2773
        %v3530 = vpop.f32.mrf.mxu0
        %v3531 = vadd.f32 %v3418, %v3530
        %3532 = vmatmul.f32.gmra.mxu0 %v2776
        %v3533 = vpop.f32.mrf.mxu0
        %v3534 = vadd.f32 %v3421, %v3533
        %3535 = vmatmul.f32.gmra.mxu0 %v2779
        %v3536 = vpop.f32.mrf.mxu0
        %v3537 = vadd.f32 %v3424, %v3536
        %3538 = vmatmul.f32.gmra.mxu0 %v2782
        %v3539 = vpop.f32.mrf.mxu0
        %v3540 = vadd.f32 %v3427, %v3539
        %3541 = vmatmul.f32.gmra.mxu0 %v2785
        %v3542 = vpop.f32.mrf.mxu0
        %v3543 = vadd.f32 %v3430, %v3542
        %3544 = vmatmul.f32.gmra.mxu0 %v2788
        %v3545 = vpop.f32.mrf.mxu0
        %v3546 = vadd.f32 %v3433, %v3545
        %3547 = vmatmul.f32.gmra.mxu0 %v2791
        %v3548 = vpop.f32.mrf.mxu0
        %v3549 = vadd.f32 %v3436, %v3548
        %3550 = vmatmul.f32.gmra.mxu0 %v2794
        %v3551 = vpop.f32.mrf.mxu0
        %v3552 = vadd.f32 %v3439, %v3551
        %3553 = vmatmul.f32.gmra.mxu0 %v2797
        %v3554 = vpop.f32.mrf.mxu0
        %v3555 = vadd.f32 %v3442, %v3554
        %3556 = vmatmul.f32.gmra.mxu0 %v2800
        %v3557 = vpop.f32.mrf.mxu0
        %v3558 = vadd.f32 %v3445, %v3557
        %3559 = vmatmul.f32.gmra.mxu0 %v2803
        %v3560 = vpop.f32.mrf.mxu0
        %v3561 = vadd.f32 %v3448, %v3560
        %3562 = vmatmul.f32.gmra.mxu0 %v2806
        %v3563 = vpop.f32.mrf.mxu0
        %v3564 = vadd.f32 %v3451, %v3563
        %3565 = vmatmul.f32.gmra.mxu0 %v2809
        %v3566 = vpop.f32.mrf.mxu0
        %v3567 = vadd.f32 %v3454, %v3566
        %3568 = vmatmul.f32.gmra.mxu0 %v2812
        %v3569 = vpop.f32.mrf.mxu0
        %v3570 = vadd.f32 %v3457, %v3569
        %3571 = vmatmul.f32.gmra.mxu0 %v2815
        %v3572 = vpop.f32.mrf.mxu0
        %v3573 = vadd.f32 %v3460, %v3572
        %3574 = vmatmul.f32.gmra.mxu0 %v2818
        %v3575 = vpop.f32.mrf.mxu0
        %v3576 = vadd.f32 %v3463, %v3575
        %3577 = vmatmul.f32.gmra.mxu0 %v2821
        %v3578 = vpop.f32.mrf.mxu0
        %v3579 = vadd.f32 %v3466, %v3578
        %3580 = vmatmul.f32.gmra.mxu0 %v2824
        %v3581 = vpop.f32.mrf.mxu0
        %v3582 = vadd.f32 %v3469, %v3581
        %3583 = vdwg.mxu0
        %3584 = vmatpush.msra.mxu0 %v2873
        %3585 = vmatpush.msra.mxu0 %v2872
        %3586 = vmatpush.msra.mxu0 %v2871
        %3587 = vmatpush.msra.mxu0 %v2870
        %3588 = vmatpush.msra.mxu0 %v2869
        %3589 = vmatpush.msra.mxu0 %v2868
        %3590 = vmatpush.msra.mxu0 %v2867
        %3591 = vmatpush.msra.mxu0 %v2866
        %3592 = vmatpush.msra.mxu0 %v2865
        %3593 = vmatpush.msra.mxu0 %v2864
        %3594 = vmatpush.msra.mxu0 %v2863
        %3595 = vmatpush.msra.mxu0 %v2862
        %3596 = vmatpush.msra.mxu0 %v2861
        %3597 = vmatpush.msra.mxu0 %v2860
        %3598 = vmatpush.msra.mxu0 %v2859
        %3599 = vmatpush.msra.mxu0 %v2858
        %3600 = vmatmul.f32.gmra.mxu0 %v2732
        %v3601 = vpop.f32.mrf.mxu0
        %v3602 = vadd.f32 %v3489, %v3601
        %3603 = vmatmul.f32.gmra.mxu0 %v2735
        %v3604 = vpop.f32.mrf.mxu0
        %v3605 = vadd.f32 %v3492, %v3604
        %3606 = vmatmul.f32.gmra.mxu0 %v2738
        %v3607 = vpop.f32.mrf.mxu0
        %v3608 = vadd.f32 %v3495, %v3607
        %3609 = vmatmul.f32.gmra.mxu0 %v2741
        %v3610 = vpop.f32.mrf.mxu0
        %v3611 = vadd.f32 %v3498, %v3610
        %3612 = vmatmul.f32.gmra.mxu0 %v2744
        %v3613 = vpop.f32.mrf.mxu0
        %v3614 = vadd.f32 %v3501, %v3613
        %3615 = vmatmul.f32.gmra.mxu0 %v2747
        %v3616 = vpop.f32.mrf.mxu0
        %v3617 = vadd.f32 %v3504, %v3616
        %3618 = vmatmul.f32.gmra.mxu0 %v2750
        %v3619 = vpop.f32.mrf.mxu0
        %v3620 = vadd.f32 %v3507, %v3619
        %3621 = vmatmul.f32.gmra.mxu0 %v2753
        %v3622 = vpop.f32.mrf.mxu0
        %v3623 = vadd.f32 %v3510, %v3622
        %3624 = vmatmul.f32.gmra.mxu0 %v2756
        %v3625 = vpop.f32.mrf.mxu0
        %v3626 = vadd.f32 %v3513, %v3625
        %3627 = vmatmul.f32.gmra.mxu0 %v2759
        %v3628 = vpop.f32.mrf.mxu0
        %v3629 = vadd.f32 %v3516, %v3628
        %3630 = vmatmul.f32.gmra.mxu0 %v2762
        %v3631 = vpop.f32.mrf.mxu0
        %v3632 = vadd.f32 %v3519, %v3631
        %3633 = vmatmul.f32.gmra.mxu0 %v2765
        %v3634 = vpop.f32.mrf.mxu0
        %v3635 = vadd.f32 %v3522, %v3634
        %3636 = vmatmul.f32.gmra.mxu0 %v2768
        %v3637 = vpop.f32.mrf.mxu0
        %v3638 = vadd.f32 %v3525, %v3637
        %3639 = vmatmul.f32.gmra.mxu0 %v2771
        %v3640 = vpop.f32.mrf.mxu0
        %v3641 = vadd.f32 %v3528, %v3640
        %3642 = vmatmul.f32.gmra.mxu0 %v2774
        %v3643 = vpop.f32.mrf.mxu0
        %v3644 = vadd.f32 %v3531, %v3643
        %3645 = vmatmul.f32.gmra.mxu0 %v2777
        %v3646 = vpop.f32.mrf.mxu0
        %v3647 = vadd.f32 %v3534, %v3646
        %3648 = vmatmul.f32.gmra.mxu0 %v2780
        %v3649 = vpop.f32.mrf.mxu0
        %v3650 = vadd.f32 %v3537, %v3649
        %3651 = vmatmul.f32.gmra.mxu0 %v2783
        %v3652 = vpop.f32.mrf.mxu0
        %v3653 = vadd.f32 %v3540, %v3652
        %3654 = vmatmul.f32.gmra.mxu0 %v2786
        %v3655 = vpop.f32.mrf.mxu0
        %v3656 = vadd.f32 %v3543, %v3655
        %3657 = vmatmul.f32.gmra.mxu0 %v2789
        %v3658 = vpop.f32.mrf.mxu0
        %v3659 = vadd.f32 %v3546, %v3658
        %3660 = vmatmul.f32.gmra.mxu0 %v2792
        %v3661 = vpop.f32.mrf.mxu0
        %v3662 = vadd.f32 %v3549, %v3661
        %3663 = vmatmul.f32.gmra.mxu0 %v2795
        %v3664 = vpop.f32.mrf.mxu0
        %v3665 = vadd.f32 %v3552, %v3664
        %3666 = vmatmul.f32.gmra.mxu0 %v2798
        %v3667 = vpop.f32.mrf.mxu0
        %v3668 = vadd.f32 %v3555, %v3667
        %3669 = vmatmul.f32.gmra.mxu0 %v2801
        %v3670 = vpop.f32.mrf.mxu0
        %v3671 = vadd.f32 %v3558, %v3670
        %3672 = vmatmul.f32.gmra.mxu0 %v2804
        %v3673 = vpop.f32.mrf.mxu0
        %v3674 = vadd.f32 %v3561, %v3673
        %3675 = vmatmul.f32.gmra.mxu0 %v2807
        %v3676 = vpop.f32.mrf.mxu0
        %v3677 = vadd.f32 %v3564, %v3676
        %3678 = vmatmul.f32.gmra.mxu0 %v2810
        %v3679 = vpop.f32.mrf.mxu0
        %v3680 = vadd.f32 %v3567, %v3679
        %3681 = vmatmul.f32.gmra.mxu0 %v2813
        %v3682 = vpop.f32.mrf.mxu0
        %v3683 = vadd.f32 %v3570, %v3682
        %3684 = vmatmul.f32.gmra.mxu0 %v2816
        %v3685 = vpop.f32.mrf.mxu0
        %v3686 = vadd.f32 %v3573, %v3685
        %3687 = vmatmul.f32.gmra.mxu0 %v2819
        %v3688 = vpop.f32.mrf.mxu0
        %v3689 = vadd.f32 %v3576, %v3688
        %3690 = vmatmul.f32.gmra.mxu0 %v2822
        %v3691 = vpop.f32.mrf.mxu0
        %v3692 = vadd.f32 %v3579, %v3691
        %3693 = vmatmul.f32.gmra.mxu0 %v2825
        %v3694 = vpop.f32.mrf.mxu0
        %v3695 = vadd.f32 %v3582, %v3694
        %3696 = vdwg.mxu0
        %v3697 = vld [vmem:[%s1611] sm:$0xff]
        %v3698 = vld [vmem:[%s1611 + $0x8] sm:$0xff]
        %v3699 = vld [vmem:[%s1611 + $0x10] sm:$0xff]
        %v3700 = vld [vmem:[%s1611 + $0x18] sm:$0xff]
        %v3701 = vld [vmem:[%s1611 + $0x20] sm:$0xff]
        %v3702 = vld [vmem:[%s1611 + $0x28] sm:$0xff]
        %v3703 = vld [vmem:[%s1611 + $0x30] sm:$0xff]
        %v3704 = vld [vmem:[%s1611 + $0x38] sm:$0xff]
        %v3705 = vld [vmem:[%s1611 + $0x40] sm:$0xff]
        %v3706 = vld [vmem:[%s1611 + $0x48] sm:$0xff]
        %v3707 = vld [vmem:[%s1611 + $0x50] sm:$0xff]
        %v3708 = vld [vmem:[%s1611 + $0x58] sm:$0xff]
        %v3709 = vld [vmem:[%s1611 + $0x60] sm:$0xff]
        %v3710 = vld [vmem:[%s1611 + $0x68] sm:$0xff]
        %v3711 = vld [vmem:[%s1611 + $0x70] sm:$0xff]
        %v3712 = vld [vmem:[%s1611 + $0x78] sm:$0xff]
        %v3713 = vld [vmem:[%s1611 + $0x80] sm:$0xff]
        %v3714 = vld [vmem:[%s1611 + $0x88] sm:$0xff]
        %v3715 = vld [vmem:[%s1611 + $0x90] sm:$0xff]
        %v3716 = vld [vmem:[%s1611 + $0x98] sm:$0xff]
        %v3717 = vld [vmem:[%s1611 + $0xa0] sm:$0xff]
        %v3718 = vld [vmem:[%s1611 + $0xa8] sm:$0xff]
        %v3719 = vld [vmem:[%s1611 + $0xb0] sm:$0xff]
        %v3720 = vld [vmem:[%s1611 + $0xb8] sm:$0xff]
        %v3721 = vld [vmem:[%s1611 + $0xc0] sm:$0xff]
        %v3722 = vld [vmem:[%s1611 + $0xc8] sm:$0xff]
        %v3723 = vld [vmem:[%s1611 + $0xd0] sm:$0xff]
        %v3724 = vld [vmem:[%s1611 + $0xd8] sm:$0xff]
        %v3725 = vld [vmem:[%s1611 + $0xe0] sm:$0xff]
        %v3726 = vld [vmem:[%s1611 + $0xe8] sm:$0xff]
        %v3727 = vld [vmem:[%s1611 + $0xf0] sm:$0xff]
        %v3728 = vld [vmem:[%s1611 + $0xf8] sm:$0xff]
        %v3729 = vld [vmem:[%s1611 + $0x100] sm:$0xff]
        %v3730 = vld [vmem:[%s1611 + $0x108] sm:$0xff]
        %v3731 = vld [vmem:[%s1611 + $0x110] sm:$0xff]
        %v3732 = vld [vmem:[%s1611 + $0x118] sm:$0xff]
        %v3733 = vld [vmem:[%s1611 + $0x120] sm:$0xff]
        %v3734 = vld [vmem:[%s1611 + $0x128] sm:$0xff]
        %v3735 = vld [vmem:[%s1611 + $0x130] sm:$0xff]
        %v3736 = vld [vmem:[%s1611 + $0x138] sm:$0xff]
        %v3737 = vld [vmem:[%s1611 + $0x140] sm:$0xff]
        %v3738 = vld [vmem:[%s1611 + $0x148] sm:$0xff]
        %v3739 = vld [vmem:[%s1611 + $0x150] sm:$0xff]
        %v3740 = vld [vmem:[%s1611 + $0x158] sm:$0xff]
        %v3741 = vld [vmem:[%s1611 + $0x160] sm:$0xff]
        %v3742 = vld [vmem:[%s1611 + $0x168] sm:$0xff]
        %v3743 = vld [vmem:[%s1611 + $0x170] sm:$0xff]
        %v3744 = vld [vmem:[%s1611 + $0x178] sm:$0xff]
        %v3745 = vld [vmem:[%s1611 + $0x180] sm:$0xff]
        %v3746 = vld [vmem:[%s1611 + $0x188] sm:$0xff]
        %v3747 = vld [vmem:[%s1611 + $0x190] sm:$0xff]
        %v3748 = vld [vmem:[%s1611 + $0x198] sm:$0xff]
        %v3749 = vld [vmem:[%s1611 + $0x1a0] sm:$0xff]
        %v3750 = vld [vmem:[%s1611 + $0x1a8] sm:$0xff]
        %v3751 = vld [vmem:[%s1611 + $0x1b0] sm:$0xff]
        %v3752 = vld [vmem:[%s1611 + $0x1b8] sm:$0xff]
        %v3753 = vld [vmem:[%s1611 + $0x1c0] sm:$0xff]
        %v3754 = vld [vmem:[%s1611 + $0x1c8] sm:$0xff]
        %v3755 = vld [vmem:[%s1611 + $0x1d0] sm:$0xff]
        %v3756 = vld [vmem:[%s1611 + $0x1d8] sm:$0xff]
        %v3757 = vld [vmem:[%s1611 + $0x1e0] sm:$0xff]
        %v3758 = vld [vmem:[%s1611 + $0x1e8] sm:$0xff]
        %v3759 = vld [vmem:[%s1611 + $0x1f0] sm:$0xff]
        %v3760 = vld [vmem:[%s1611 + $0x1f8] sm:$0xff]
        %v3761 = vld [vmem:[%s1611 + $0x200] sm:$0xff]
        %v3762 = vld [vmem:[%s1611 + $0x208] sm:$0xff]
        %v3763 = vld [vmem:[%s1611 + $0x210] sm:$0xff]
        %v3764 = vld [vmem:[%s1611 + $0x218] sm:$0xff]
        %v3765 = vld [vmem:[%s1611 + $0x220] sm:$0xff]
        %v3766 = vld [vmem:[%s1611 + $0x228] sm:$0xff]
        %v3767 = vld [vmem:[%s1611 + $0x230] sm:$0xff]
        %v3768 = vld [vmem:[%s1611 + $0x238] sm:$0xff]
        %v3769 = vld [vmem:[%s1611 + $0x240] sm:$0xff]
        %v3770 = vld [vmem:[%s1611 + $0x248] sm:$0xff]
        %v3771 = vld [vmem:[%s1611 + $0x250] sm:$0xff]
        %v3772 = vld [vmem:[%s1611 + $0x258] sm:$0xff]
        %v3773 = vld [vmem:[%s1611 + $0x260] sm:$0xff]
        %v3774 = vld [vmem:[%s1611 + $0x268] sm:$0xff]
        %v3775 = vld [vmem:[%s1611 + $0x270] sm:$0xff]
        %v3776 = vld [vmem:[%s1611 + $0x278] sm:$0xff]
        %v3777 = vld [vmem:[%s1611 + $0x280] sm:$0xff]
        %v3778 = vld [vmem:[%s1611 + $0x288] sm:$0xff]
        %v3779 = vld [vmem:[%s1611 + $0x290] sm:$0xff]
        %v3780 = vld [vmem:[%s1611 + $0x298] sm:$0xff]
        %v3781 = vld [vmem:[%s1611 + $0x2a0] sm:$0xff]
        %v3782 = vld [vmem:[%s1611 + $0x2a8] sm:$0xff]
        %v3783 = vld [vmem:[%s1611 + $0x2b0] sm:$0xff]
        %v3784 = vld [vmem:[%s1611 + $0x2b8] sm:$0xff]
        %v3785 = vld [vmem:[%s1611 + $0x2c0] sm:$0xff]
        %v3786 = vld [vmem:[%s1611 + $0x2c8] sm:$0xff]
        %v3787 = vld [vmem:[%s1611 + $0x2d0] sm:$0xff]
        %v3788 = vld [vmem:[%s1611 + $0x2d8] sm:$0xff]
        %v3789 = vld [vmem:[%s1611 + $0x2e0] sm:$0xff]
        %v3790 = vld [vmem:[%s1611 + $0x2e8] sm:$0xff]
        %v3791 = vld [vmem:[%s1611 + $0x2f0] sm:$0xff]
        %v3792 = vld [vmem:[%s1611 + $0x2f8] sm:$0xff]
        %s3793 = scalar_lea.vmem [#allocation8], 768
        %v3794 = vld [vmem:[%s3793] sm:$0xff]
        %v3795 = vld [vmem:[%s3793 + $0x8] sm:$0xff]
        %v3796 = vld [vmem:[%s3793 + $0x10] sm:$0xff]
        %v3797 = vld [vmem:[%s3793 + $0x18] sm:$0xff]
        %v3798 = vld [vmem:[%s3793 + $0x20] sm:$0xff]
        %v3799 = vld [vmem:[%s3793 + $0x28] sm:$0xff]
        %v3800 = vld [vmem:[%s3793 + $0x30] sm:$0xff]
        %v3801 = vld [vmem:[%s3793 + $0x38] sm:$0xff]
        %v3802 = vld [vmem:[%s3793 + $0x40] sm:$0xff]
        %v3803 = vld [vmem:[%s3793 + $0x48] sm:$0xff]
        %v3804 = vld [vmem:[%s3793 + $0x50] sm:$0xff]
        %v3805 = vld [vmem:[%s3793 + $0x58] sm:$0xff]
        %v3806 = vld [vmem:[%s3793 + $0x60] sm:$0xff]
        %v3807 = vld [vmem:[%s3793 + $0x68] sm:$0xff]
        %v3808 = vld [vmem:[%s3793 + $0x70] sm:$0xff]
        %v3809 = vld [vmem:[%s3793 + $0x78] sm:$0xff]
        %v3810 = vld [vmem:[%s3793 + $0x80] sm:$0xff]
        %v3811 = vld [vmem:[%s3793 + $0x88] sm:$0xff]
        %v3812 = vld [vmem:[%s3793 + $0x90] sm:$0xff]
        %v3813 = vld [vmem:[%s3793 + $0x98] sm:$0xff]
        %v3814 = vld [vmem:[%s3793 + $0xa0] sm:$0xff]
        %v3815 = vld [vmem:[%s3793 + $0xa8] sm:$0xff]
        %v3816 = vld [vmem:[%s3793 + $0xb0] sm:$0xff]
        %v3817 = vld [vmem:[%s3793 + $0xb8] sm:$0xff]
        %v3818 = vld [vmem:[%s3793 + $0xc0] sm:$0xff]
        %v3819 = vld [vmem:[%s3793 + $0xc8] sm:$0xff]
        %v3820 = vld [vmem:[%s3793 + $0xd0] sm:$0xff]
        %v3821 = vld [vmem:[%s3793 + $0xd8] sm:$0xff]
        %v3822 = vld [vmem:[%s3793 + $0xe0] sm:$0xff]
        %v3823 = vld [vmem:[%s3793 + $0xe8] sm:$0xff]
        %v3824 = vld [vmem:[%s3793 + $0xf0] sm:$0xff]
        %v3825 = vld [vmem:[%s3793 + $0xf8] sm:$0xff]
        %v3826 = vld [vmem:[%s3793 + $0x100] sm:$0xff]
        %v3827 = vld [vmem:[%s3793 + $0x108] sm:$0xff]
        %v3828 = vld [vmem:[%s3793 + $0x110] sm:$0xff]
        %v3829 = vld [vmem:[%s3793 + $0x118] sm:$0xff]
        %v3830 = vld [vmem:[%s3793 + $0x120] sm:$0xff]
        %v3831 = vld [vmem:[%s3793 + $0x128] sm:$0xff]
        %v3832 = vld [vmem:[%s3793 + $0x130] sm:$0xff]
        %v3833 = vld [vmem:[%s3793 + $0x138] sm:$0xff]
        %v3834 = vld [vmem:[%s3793 + $0x140] sm:$0xff]
        %v3835 = vld [vmem:[%s3793 + $0x148] sm:$0xff]
        %v3836 = vld [vmem:[%s3793 + $0x150] sm:$0xff]
        %v3837 = vld [vmem:[%s3793 + $0x158] sm:$0xff]
        %v3838 = vld [vmem:[%s3793 + $0x160] sm:$0xff]
        %v3839 = vld [vmem:[%s3793 + $0x168] sm:$0xff]
        %v3840 = vld [vmem:[%s3793 + $0x170] sm:$0xff]
        %v3841 = vld [vmem:[%s3793 + $0x178] sm:$0xff]
        %3842 = vmatpush.msra.mxu0 %v3809
        %3843 = vmatpush.msra.mxu0 %v3808
        %3844 = vmatpush.msra.mxu0 %v3807
        %3845 = vmatpush.msra.mxu0 %v3806
        %3846 = vmatpush.msra.mxu0 %v3805
        %3847 = vmatpush.msra.mxu0 %v3804
        %3848 = vmatpush.msra.mxu0 %v3803
        %3849 = vmatpush.msra.mxu0 %v3802
        %3850 = vmatpush.msra.mxu0 %v3801
        %3851 = vmatpush.msra.mxu0 %v3800
        %3852 = vmatpush.msra.mxu0 %v3799
        %3853 = vmatpush.msra.mxu0 %v3798
        %3854 = vmatpush.msra.mxu0 %v3797
        %3855 = vmatpush.msra.mxu0 %v3796
        %3856 = vmatpush.msra.mxu0 %v3795
        %3857 = vmatpush.msra.mxu0 %v3794
        %3858 = vmatmul.f32.gmra.mxu0 %v3697
        %v3859 = vpop.f32.mrf.mxu0
        %v3860 = vadd.f32 0.0, %v3859
        %3861 = vmatmul.f32.gmra.mxu0 %v3700
        %v3862 = vpop.f32.mrf.mxu0
        %v3863 = vadd.f32 0.0, %v3862
        %3864 = vmatmul.f32.gmra.mxu0 %v3703
        %v3865 = vpop.f32.mrf.mxu0
        %v3866 = vadd.f32 0.0, %v3865
        %3867 = vmatmul.f32.gmra.mxu0 %v3706
        %v3868 = vpop.f32.mrf.mxu0
        %v3869 = vadd.f32 0.0, %v3868
        %3870 = vmatmul.f32.gmra.mxu0 %v3709
        %v3871 = vpop.f32.mrf.mxu0
        %v3872 = vadd.f32 0.0, %v3871
        %3873 = vmatmul.f32.gmra.mxu0 %v3712
        %v3874 = vpop.f32.mrf.mxu0
        %v3875 = vadd.f32 0.0, %v3874
        %3876 = vmatmul.f32.gmra.mxu0 %v3715
        %v3877 = vpop.f32.mrf.mxu0
        %v3878 = vadd.f32 0.0, %v3877
        %3879 = vmatmul.f32.gmra.mxu0 %v3718
        %v3880 = vpop.f32.mrf.mxu0
        %v3881 = vadd.f32 0.0, %v3880
        %3882 = vmatmul.f32.gmra.mxu0 %v3721
        %v3883 = vpop.f32.mrf.mxu0
        %v3884 = vadd.f32 0.0, %v3883
        %3885 = vmatmul.f32.gmra.mxu0 %v3724
        %v3886 = vpop.f32.mrf.mxu0
        %v3887 = vadd.f32 0.0, %v3886
        %3888 = vmatmul.f32.gmra.mxu0 %v3727
        %v3889 = vpop.f32.mrf.mxu0
        %v3890 = vadd.f32 0.0, %v3889
        %3891 = vmatmul.f32.gmra.mxu0 %v3730
        %v3892 = vpop.f32.mrf.mxu0
        %v3893 = vadd.f32 0.0, %v3892
        %3894 = vmatmul.f32.gmra.mxu0 %v3733
        %v3895 = vpop.f32.mrf.mxu0
        %v3896 = vadd.f32 0.0, %v3895
        %3897 = vmatmul.f32.gmra.mxu0 %v3736
        %v3898 = vpop.f32.mrf.mxu0
        %v3899 = vadd.f32 0.0, %v3898
        %3900 = vmatmul.f32.gmra.mxu0 %v3739
        %v3901 = vpop.f32.mrf.mxu0
        %v3902 = vadd.f32 0.0, %v3901
        %3903 = vmatmul.f32.gmra.mxu0 %v3742
        %v3904 = vpop.f32.mrf.mxu0
        %v3905 = vadd.f32 0.0, %v3904
        %3906 = vmatmul.f32.gmra.mxu0 %v3745
        %v3907 = vpop.f32.mrf.mxu0
        %v3908 = vadd.f32 0.0, %v3907
        %3909 = vmatmul.f32.gmra.mxu0 %v3748
        %v3910 = vpop.f32.mrf.mxu0
        %v3911 = vadd.f32 0.0, %v3910
        %3912 = vmatmul.f32.gmra.mxu0 %v3751
        %v3913 = vpop.f32.mrf.mxu0
        %v3914 = vadd.f32 0.0, %v3913
        %3915 = vmatmul.f32.gmra.mxu0 %v3754
        %v3916 = vpop.f32.mrf.mxu0
        %v3917 = vadd.f32 0.0, %v3916
        %3918 = vmatmul.f32.gmra.mxu0 %v3757
        %v3919 = vpop.f32.mrf.mxu0
        %v3920 = vadd.f32 0.0, %v3919
        %3921 = vmatmul.f32.gmra.mxu0 %v3760
        %v3922 = vpop.f32.mrf.mxu0
        %v3923 = vadd.f32 0.0, %v3922
        %3924 = vmatmul.f32.gmra.mxu0 %v3763
        %v3925 = vpop.f32.mrf.mxu0
        %v3926 = vadd.f32 0.0, %v3925
        %3927 = vmatmul.f32.gmra.mxu0 %v3766
        %v3928 = vpop.f32.mrf.mxu0
        %v3929 = vadd.f32 0.0, %v3928
        %3930 = vmatmul.f32.gmra.mxu0 %v3769
        %v3931 = vpop.f32.mrf.mxu0
        %v3932 = vadd.f32 0.0, %v3931
        %3933 = vmatmul.f32.gmra.mxu0 %v3772
        %v3934 = vpop.f32.mrf.mxu0
        %v3935 = vadd.f32 0.0, %v3934
        %3936 = vmatmul.f32.gmra.mxu0 %v3775
        %v3937 = vpop.f32.mrf.mxu0
        %v3938 = vadd.f32 0.0, %v3937
        %3939 = vmatmul.f32.gmra.mxu0 %v3778
        %v3940 = vpop.f32.mrf.mxu0
        %v3941 = vadd.f32 0.0, %v3940
        %3942 = vmatmul.f32.gmra.mxu0 %v3781
        %v3943 = vpop.f32.mrf.mxu0
        %v3944 = vadd.f32 0.0, %v3943
        %3945 = vmatmul.f32.gmra.mxu0 %v3784
        %v3946 = vpop.f32.mrf.mxu0
        %v3947 = vadd.f32 0.0, %v3946
        %3948 = vmatmul.f32.gmra.mxu0 %v3787
        %v3949 = vpop.f32.mrf.mxu0
        %v3950 = vadd.f32 0.0, %v3949
        %3951 = vmatmul.f32.gmra.mxu0 %v3790
        %v3952 = vpop.f32.mrf.mxu0
        %v3953 = vadd.f32 0.0, %v3952
        %3954 = vdwg.mxu0
        %3955 = vmatpush.msra.mxu0 %v3825
        %3956 = vmatpush.msra.mxu0 %v3824
        %3957 = vmatpush.msra.mxu0 %v3823
        %3958 = vmatpush.msra.mxu0 %v3822
        %3959 = vmatpush.msra.mxu0 %v3821
        %3960 = vmatpush.msra.mxu0 %v3820
        %3961 = vmatpush.msra.mxu0 %v3819
        %3962 = vmatpush.msra.mxu0 %v3818
        %3963 = vmatpush.msra.mxu0 %v3817
        %3964 = vmatpush.msra.mxu0 %v3816
        %3965 = vmatpush.msra.mxu0 %v3815
        %3966 = vmatpush.msra.mxu0 %v3814
        %3967 = vmatpush.msra.mxu0 %v3813
        %3968 = vmatpush.msra.mxu0 %v3812
        %3969 = vmatpush.msra.mxu0 %v3811
        %3970 = vmatpush.msra.mxu0 %v3810
        %3971 = vmatmul.f32.gmra.mxu0 %v3698
        %v3972 = vpop.f32.mrf.mxu0
        %v3973 = vadd.f32 %v3860, %v3972
        %3974 = vmatmul.f32.gmra.mxu0 %v3701
        %v3975 = vpop.f32.mrf.mxu0
        %v3976 = vadd.f32 %v3863, %v3975
        %3977 = vmatmul.f32.gmra.mxu0 %v3704
        %v3978 = vpop.f32.mrf.mxu0
        %v3979 = vadd.f32 %v3866, %v3978
        %3980 = vmatmul.f32.gmra.mxu0 %v3707
        %v3981 = vpop.f32.mrf.mxu0
        %v3982 = vadd.f32 %v3869, %v3981
        %3983 = vmatmul.f32.gmra.mxu0 %v3710
        %v3984 = vpop.f32.mrf.mxu0
        %v3985 = vadd.f32 %v3872, %v3984
        %3986 = vmatmul.f32.gmra.mxu0 %v3713
        %v3987 = vpop.f32.mrf.mxu0
        %v3988 = vadd.f32 %v3875, %v3987
        %3989 = vmatmul.f32.gmra.mxu0 %v3716
        %v3990 = vpop.f32.mrf.mxu0
        %v3991 = vadd.f32 %v3878, %v3990
        %3992 = vmatmul.f32.gmra.mxu0 %v3719
        %v3993 = vpop.f32.mrf.mxu0
        %v3994 = vadd.f32 %v3881, %v3993
        %3995 = vmatmul.f32.gmra.mxu0 %v3722
        %v3996 = vpop.f32.mrf.mxu0
        %v3997 = vadd.f32 %v3884, %v3996
        %3998 = vmatmul.f32.gmra.mxu0 %v3725
        %v3999 = vpop.f32.mrf.mxu0
        %v4000 = vadd.f32 %v3887, %v3999
        %4001 = vmatmul.f32.gmra.mxu0 %v3728
        %v4002 = vpop.f32.mrf.mxu0
        %v4003 = vadd.f32 %v3890, %v4002
        %4004 = vmatmul.f32.gmra.mxu0 %v3731
        %v4005 = vpop.f32.mrf.mxu0
        %v4006 = vadd.f32 %v3893, %v4005
        %4007 = vmatmul.f32.gmra.mxu0 %v3734
        %v4008 = vpop.f32.mrf.mxu0
        %v4009 = vadd.f32 %v3896, %v4008
        %4010 = vmatmul.f32.gmra.mxu0 %v3737
        %v4011 = vpop.f32.mrf.mxu0
        %v4012 = vadd.f32 %v3899, %v4011
        %4013 = vmatmul.f32.gmra.mxu0 %v3740
        %v4014 = vpop.f32.mrf.mxu0
        %v4015 = vadd.f32 %v3902, %v4014
        %4016 = vmatmul.f32.gmra.mxu0 %v3743
        %v4017 = vpop.f32.mrf.mxu0
        %v4018 = vadd.f32 %v3905, %v4017
        %4019 = vmatmul.f32.gmra.mxu0 %v3746
        %v4020 = vpop.f32.mrf.mxu0
        %v4021 = vadd.f32 %v3908, %v4020
        %4022 = vmatmul.f32.gmra.mxu0 %v3749
        %v4023 = vpop.f32.mrf.mxu0
        %v4024 = vadd.f32 %v3911, %v4023
        %4025 = vmatmul.f32.gmra.mxu0 %v3752
        %v4026 = vpop.f32.mrf.mxu0
        %v4027 = vadd.f32 %v3914, %v4026
        %4028 = vmatmul.f32.gmra.mxu0 %v3755
        %v4029 = vpop.f32.mrf.mxu0
        %v4030 = vadd.f32 %v3917, %v4029
        %4031 = vmatmul.f32.gmra.mxu0 %v3758
        %v4032 = vpop.f32.mrf.mxu0
        %v4033 = vadd.f32 %v3920, %v4032
        %4034 = vmatmul.f32.gmra.mxu0 %v3761
        %v4035 = vpop.f32.mrf.mxu0
        %v4036 = vadd.f32 %v3923, %v4035
        %4037 = vmatmul.f32.gmra.mxu0 %v3764
        %v4038 = vpop.f32.mrf.mxu0
        %v4039 = vadd.f32 %v3926, %v4038
        %4040 = vmatmul.f32.gmra.mxu0 %v3767
        %v4041 = vpop.f32.mrf.mxu0
        %v4042 = vadd.f32 %v3929, %v4041
        %4043 = vmatmul.f32.gmra.mxu0 %v3770
        %v4044 = vpop.f32.mrf.mxu0
        %v4045 = vadd.f32 %v3932, %v4044
        %4046 = vmatmul.f32.gmra.mxu0 %v3773
        %v4047 = vpop.f32.mrf.mxu0
        %v4048 = vadd.f32 %v3935, %v4047
        %4049 = vmatmul.f32.gmra.mxu0 %v3776
        %v4050 = vpop.f32.mrf.mxu0
        %v4051 = vadd.f32 %v3938, %v4050
        %4052 = vmatmul.f32.gmra.mxu0 %v3779
        %v4053 = vpop.f32.mrf.mxu0
        %v4054 = vadd.f32 %v3941, %v4053
        %4055 = vmatmul.f32.gmra.mxu0 %v3782
        %v4056 = vpop.f32.mrf.mxu0
        %v4057 = vadd.f32 %v3944, %v4056
        %4058 = vmatmul.f32.gmra.mxu0 %v3785
        %v4059 = vpop.f32.mrf.mxu0
        %v4060 = vadd.f32 %v3947, %v4059
        %4061 = vmatmul.f32.gmra.mxu0 %v3788
        %v4062 = vpop.f32.mrf.mxu0
        %v4063 = vadd.f32 %v3950, %v4062
        %4064 = vmatmul.f32.gmra.mxu0 %v3791
        %v4065 = vpop.f32.mrf.mxu0
        %v4066 = vadd.f32 %v3953, %v4065
        %4067 = vdwg.mxu0
        %4068 = vmatpush.msra.mxu0 %v3841
        %4069 = vmatpush.msra.mxu0 %v3840
        %4070 = vmatpush.msra.mxu0 %v3839
        %4071 = vmatpush.msra.mxu0 %v3838
        %4072 = vmatpush.msra.mxu0 %v3837
        %4073 = vmatpush.msra.mxu0 %v3836
        %4074 = vmatpush.msra.mxu0 %v3835
        %4075 = vmatpush.msra.mxu0 %v3834
        %4076 = vmatpush.msra.mxu0 %v3833
        %4077 = vmatpush.msra.mxu0 %v3832
        %4078 = vmatpush.msra.mxu0 %v3831
        %4079 = vmatpush.msra.mxu0 %v3830
        %4080 = vmatpush.msra.mxu0 %v3829
        %4081 = vmatpush.msra.mxu0 %v3828
        %4082 = vmatpush.msra.mxu0 %v3827
        %4083 = vmatpush.msra.mxu0 %v3826
        %4084 = vmatmul.f32.gmra.mxu0 %v3699
        %v4085 = vpop.f32.mrf.mxu0
        %v4086 = vadd.f32 %v3973, %v4085
        %4087 = vmatmul.f32.gmra.mxu0 %v3702
        %v4088 = vpop.f32.mrf.mxu0
        %v4089 = vadd.f32 %v3976, %v4088
        %4090 = vmatmul.f32.gmra.mxu0 %v3705
        %v4091 = vpop.f32.mrf.mxu0
        %v4092 = vadd.f32 %v3979, %v4091
        %4093 = vmatmul.f32.gmra.mxu0 %v3708
        %v4094 = vpop.f32.mrf.mxu0
        %v4095 = vadd.f32 %v3982, %v4094
        %4096 = vmatmul.f32.gmra.mxu0 %v3711
        %v4097 = vpop.f32.mrf.mxu0
        %v4098 = vadd.f32 %v3985, %v4097
        %4099 = vmatmul.f32.gmra.mxu0 %v3714
        %v4100 = vpop.f32.mrf.mxu0
        %v4101 = vadd.f32 %v3988, %v4100
        %4102 = vmatmul.f32.gmra.mxu0 %v3717
        %v4103 = vpop.f32.mrf.mxu0
        %v4104 = vadd.f32 %v3991, %v4103
        %4105 = vmatmul.f32.gmra.mxu0 %v3720
        %v4106 = vpop.f32.mrf.mxu0
        %v4107 = vadd.f32 %v3994, %v4106
        %4108 = vmatmul.f32.gmra.mxu0 %v3723
        %v4109 = vpop.f32.mrf.mxu0
        %v4110 = vadd.f32 %v3997, %v4109
        %4111 = vmatmul.f32.gmra.mxu0 %v3726
        %v4112 = vpop.f32.mrf.mxu0
        %v4113 = vadd.f32 %v4000, %v4112
        %4114 = vmatmul.f32.gmra.mxu0 %v3729
        %v4115 = vpop.f32.mrf.mxu0
        %v4116 = vadd.f32 %v4003, %v4115
        %4117 = vmatmul.f32.gmra.mxu0 %v3732
        %v4118 = vpop.f32.mrf.mxu0
        %v4119 = vadd.f32 %v4006, %v4118
        %4120 = vmatmul.f32.gmra.mxu0 %v3735
        %v4121 = vpop.f32.mrf.mxu0
        %v4122 = vadd.f32 %v4009, %v4121
        %4123 = vmatmul.f32.gmra.mxu0 %v3738
        %v4124 = vpop.f32.mrf.mxu0
        %v4125 = vadd.f32 %v4012, %v4124
        %4126 = vmatmul.f32.gmra.mxu0 %v3741
        %v4127 = vpop.f32.mrf.mxu0
        %v4128 = vadd.f32 %v4015, %v4127
        %4129 = vmatmul.f32.gmra.mxu0 %v3744
        %v4130 = vpop.f32.mrf.mxu0
        %v4131 = vadd.f32 %v4018, %v4130
        %4132 = vmatmul.f32.gmra.mxu0 %v3747
        %v4133 = vpop.f32.mrf.mxu0
        %v4134 = vadd.f32 %v4021, %v4133
        %4135 = vmatmul.f32.gmra.mxu0 %v3750
        %v4136 = vpop.f32.mrf.mxu0
        %v4137 = vadd.f32 %v4024, %v4136
        %4138 = vmatmul.f32.gmra.mxu0 %v3753
        %v4139 = vpop.f32.mrf.mxu0
        %v4140 = vadd.f32 %v4027, %v4139
        %4141 = vmatmul.f32.gmra.mxu0 %v3756
        %v4142 = vpop.f32.mrf.mxu0
        %v4143 = vadd.f32 %v4030, %v4142
        %4144 = vmatmul.f32.gmra.mxu0 %v3759
        %v4145 = vpop.f32.mrf.mxu0
        %v4146 = vadd.f32 %v4033, %v4145
        %4147 = vmatmul.f32.gmra.mxu0 %v3762
        %v4148 = vpop.f32.mrf.mxu0
        %v4149 = vadd.f32 %v4036, %v4148
        %4150 = vmatmul.f32.gmra.mxu0 %v3765
        %v4151 = vpop.f32.mrf.mxu0
        %v4152 = vadd.f32 %v4039, %v4151
        %4153 = vmatmul.f32.gmra.mxu0 %v3768
        %v4154 = vpop.f32.mrf.mxu0
        %v4155 = vadd.f32 %v4042, %v4154
        %4156 = vmatmul.f32.gmra.mxu0 %v3771
        %v4157 = vpop.f32.mrf.mxu0
        %v4158 = vadd.f32 %v4045, %v4157
        %4159 = vmatmul.f32.gmra.mxu0 %v3774
        %v4160 = vpop.f32.mrf.mxu0
        %v4161 = vadd.f32 %v4048, %v4160
        %4162 = vmatmul.f32.gmra.mxu0 %v3777
        %v4163 = vpop.f32.mrf.mxu0
        %v4164 = vadd.f32 %v4051, %v4163
        %4165 = vmatmul.f32.gmra.mxu0 %v3780
        %v4166 = vpop.f32.mrf.mxu0
        %v4167 = vadd.f32 %v4054, %v4166
        %4168 = vmatmul.f32.gmra.mxu0 %v3783
        %v4169 = vpop.f32.mrf.mxu0
        %v4170 = vadd.f32 %v4057, %v4169
        %4171 = vmatmul.f32.gmra.mxu0 %v3786
        %v4172 = vpop.f32.mrf.mxu0
        %v4173 = vadd.f32 %v4060, %v4172
        %4174 = vmatmul.f32.gmra.mxu0 %v3789
        %v4175 = vpop.f32.mrf.mxu0
        %v4176 = vadd.f32 %v4063, %v4175
        %4177 = vmatmul.f32.gmra.mxu0 %v3792
        %v4178 = vpop.f32.mrf.mxu0
        %v4179 = vadd.f32 %v4066, %v4178
        %4180 = vdwg.mxu0
        %v4181 = vadd.f32 %v3602, %v4086
        %v4182 = vadd.f32 %v3605, %v4089
        %v4183 = vadd.f32 %v3608, %v4092
        %v4184 = vadd.f32 %v3611, %v4095
        %v4185 = vadd.f32 %v3614, %v4098
        %v4186 = vadd.f32 %v3617, %v4101
        %v4187 = vadd.f32 %v3620, %v4104
        %v4188 = vadd.f32 %v3623, %v4107
        %v4189 = vadd.f32 %v3626, %v4110
        %v4190 = vadd.f32 %v3629, %v4113
        %v4191 = vadd.f32 %v3632, %v4116
        %v4192 = vadd.f32 %v3635, %v4119
        %v4193 = vadd.f32 %v3638, %v4122
        %v4194 = vadd.f32 %v3641, %v4125
        %v4195 = vadd.f32 %v3644, %v4128
        %v4196 = vadd.f32 %v3647, %v4131
        %v4197 = vadd.f32 %v3650, %v4134
        %v4198 = vadd.f32 %v3653, %v4137
        %v4199 = vadd.f32 %v3656, %v4140
        %v4200 = vadd.f32 %v3659, %v4143
        %v4201 = vadd.f32 %v3662, %v4146
        %v4202 = vadd.f32 %v3665, %v4149
        %v4203 = vadd.f32 %v3668, %v4152
        %v4204 = vadd.f32 %v3671, %v4155
        %v4205 = vadd.f32 %v3674, %v4158
        %v4206 = vadd.f32 %v3677, %v4161
        %v4207 = vadd.f32 %v3680, %v4164
        %v4208 = vadd.f32 %v3683, %v4167
        %v4209 = vadd.f32 %v3686, %v4170
        %v4210 = vadd.f32 %v3689, %v4173
        %v4211 = vadd.f32 %v3692, %v4176
        %v4212 = vadd.f32 %v3695, %v4179
        %v4213 = vadd.f32 %v4181, %v4182
        %v4214 = vadd.f32 %v4213, %v4183
        %v4215 = vadd.f32 %v4214, %v4184
        %v4216 = vadd.f32 %v4215, %v4185
        %v4217 = vadd.f32 %v4216, %v4186
        %v4218 = vadd.f32 %v4217, %v4187
        %v4219 = vadd.f32 %v4218, %v4188
        %v4220 = vadd.f32 %v4219, %v4189
        %v4221 = vadd.f32 %v4220, %v4190
        %v4222 = vadd.f32 %v4221, %v4191
        %v4223 = vadd.f32 %v4222, %v4192
        %v4224 = vadd.f32 %v4223, %v4193
        %v4225 = vadd.f32 %v4224, %v4194
        %v4226 = vadd.f32 %v4225, %v4195
        %v4227 = vadd.f32 %v4226, %v4196
        %v4228 = vadd.f32 %v4227, %v4197
        %v4229 = vadd.f32 %v4228, %v4198
        %v4230 = vadd.f32 %v4229, %v4199
        %v4231 = vadd.f32 %v4230, %v4200
        %v4232 = vadd.f32 %v4231, %v4201
        %v4233 = vadd.f32 %v4232, %v4202
        %v4234 = vadd.f32 %v4233, %v4203
        %v4235 = vadd.f32 %v4234, %v4204
        %v4236 = vadd.f32 %v4235, %v4205
        %v4237 = vadd.f32 %v4236, %v4206
        %v4238 = vadd.f32 %v4237, %v4207
        %v4239 = vadd.f32 %v4238, %v4208
        %v4240 = vadd.f32 %v4239, %v4209
        %v4241 = vadd.f32 %v4240, %v4210
        %v4242 = vadd.f32 %v4241, %v4211
        %v4243 = vadd.f32 %v4242, %v4212
        %v4244 = vrot.slane %v4243, 4
        %v4245 = vadd.f32 %v4243, %v4244
        %v4246 = vrot.slane %v4245, 2
        %v4247 = vadd.f32 %v4245, %v4246
        %v4248 = vrot.slane %v4247, 1
        %v4249 = vadd.f32 %v4247, %v4248
        %v4250 = vmul.f32 %v4181, %v4181
        %v4251 = vmul.f32 %v4182, %v4182
        %v4252 = vmul.f32 %v4183, %v4183
        %v4253 = vmul.f32 %v4184, %v4184
        %v4254 = vmul.f32 %v4185, %v4185
        %v4255 = vmul.f32 %v4186, %v4186
        %v4256 = vmul.f32 %v4187, %v4187
        %v4257 = vmul.f32 %v4188, %v4188
        %v4258 = vmul.f32 %v4189, %v4189
        %v4259 = vmul.f32 %v4190, %v4190
        %v4260 = vmul.f32 %v4191, %v4191
        %v4261 = vmul.f32 %v4192, %v4192
        %v4262 = vmul.f32 %v4193, %v4193
        %v4263 = vmul.f32 %v4194, %v4194
        %v4264 = vmul.f32 %v4195, %v4195
        %v4265 = vmul.f32 %v4196, %v4196
        %v4266 = vmul.f32 %v4197, %v4197
        %v4267 = vmul.f32 %v4198, %v4198
        %v4268 = vmul.f32 %v4199, %v4199
        %v4269 = vmul.f32 %v4200, %v4200
        %v4270 = vmul.f32 %v4201, %v4201
        %v4271 = vmul.f32 %v4202, %v4202
        %v4272 = vmul.f32 %v4203, %v4203
        %v4273 = vmul.f32 %v4204, %v4204
        %v4274 = vmul.f32 %v4205, %v4205
        %v4275 = vmul.f32 %v4206, %v4206
        %v4276 = vmul.f32 %v4207, %v4207
        %v4277 = vmul.f32 %v4208, %v4208
        %v4278 = vmul.f32 %v4209, %v4209
        %v4279 = vmul.f32 %v4210, %v4210
        %v4280 = vmul.f32 %v4211, %v4211
        %v4281 = vmul.f32 %v4212, %v4212
        %v4282 = vadd.f32 %v4250, %v4251
        %v4283 = vadd.f32 %v4282, %v4252
        %v4284 = vadd.f32 %v4283, %v4253
        %v4285 = vadd.f32 %v4284, %v4254
        %v4286 = vadd.f32 %v4285, %v4255
        %v4287 = vadd.f32 %v4286, %v4256
        %v4288 = vadd.f32 %v4287, %v4257
        %v4289 = vadd.f32 %v4288, %v4258
        %v4290 = vadd.f32 %v4289, %v4259
        %v4291 = vadd.f32 %v4290, %v4260
        %v4292 = vadd.f32 %v4291, %v4261
        %v4293 = vadd.f32 %v4292, %v4262
        %v4294 = vadd.f32 %v4293, %v4263
        %v4295 = vadd.f32 %v4294, %v4264
        %v4296 = vadd.f32 %v4295, %v4265
        %v4297 = vadd.f32 %v4296, %v4266
        %v4298 = vadd.f32 %v4297, %v4267
        %v4299 = vadd.f32 %v4298, %v4268
        %v4300 = vadd.f32 %v4299, %v4269
        %v4301 = vadd.f32 %v4300, %v4270
        %v4302 = vadd.f32 %v4301, %v4271
        %v4303 = vadd.f32 %v4302, %v4272
        %v4304 = vadd.f32 %v4303, %v4273
        %v4305 = vadd.f32 %v4304, %v4274
        %v4306 = vadd.f32 %v4305, %v4275
        %v4307 = vadd.f32 %v4306, %v4276
        %v4308 = vadd.f32 %v4307, %v4277
        %v4309 = vadd.f32 %v4308, %v4278
        %v4310 = vadd.f32 %v4309, %v4279
        %v4311 = vadd.f32 %v4310, %v4280
        %v4312 = vadd.f32 %v4311, %v4281
        %v4313 = vrot.slane %v4312, 4
        %v4314 = vadd.f32 %v4312, %v4313
        %v4315 = vrot.slane %v4314, 2
        %v4316 = vadd.f32 %v4314, %v4315
        %v4317 = vrot.slane %v4316, 1
        %v4318 = vadd.f32 %v4316, %v4317
        %v4319 = vmul.f32 %v4249, 0.00390625
        %v4320 = vmul.f32 %v4318, 0.00390625
        %v4321 = vmul.f32 %v4319, %v4319
        %v4322 = vsub.f32 %v4320, %v4321
        %v4323 = vmax.f32 %v4322, 0.0
        %v4324 = vsub.f32 %v4181, %v4319
        %v4325 = vsub.f32 %v4182, %v4319
        %v4326 = vsub.f32 %v4183, %v4319
        %v4327 = vsub.f32 %v4184, %v4319
        %v4328 = vsub.f32 %v4185, %v4319
        %v4329 = vsub.f32 %v4186, %v4319
        %v4330 = vsub.f32 %v4187, %v4319
        %v4331 = vsub.f32 %v4188, %v4319
        %v4332 = vsub.f32 %v4189, %v4319
        %v4333 = vsub.f32 %v4190, %v4319
        %v4334 = vsub.f32 %v4191, %v4319
        %v4335 = vsub.f32 %v4192, %v4319
        %v4336 = vsub.f32 %v4193, %v4319
        %v4337 = vsub.f32 %v4194, %v4319
        %v4338 = vsub.f32 %v4195, %v4319
        %v4339 = vsub.f32 %v4196, %v4319
        %v4340 = vsub.f32 %v4197, %v4319
        %v4341 = vsub.f32 %v4198, %v4319
        %v4342 = vsub.f32 %v4199, %v4319
        %v4343 = vsub.f32 %v4200, %v4319
        %v4344 = vsub.f32 %v4201, %v4319
        %v4345 = vsub.f32 %v4202, %v4319
        %v4346 = vsub.f32 %v4203, %v4319
        %v4347 = vsub.f32 %v4204, %v4319
        %v4348 = vsub.f32 %v4205, %v4319
        %v4349 = vsub.f32 %v4206, %v4319
        %v4350 = vsub.f32 %v4207, %v4319
        %v4351 = vsub.f32 %v4208, %v4319
        %v4352 = vsub.f32 %v4209, %v4319
        %v4353 = vsub.f32 %v4210, %v4319
        %v4354 = vsub.f32 %v4211, %v4319
        %v4355 = vsub.f32 %v4212, %v4319
        %v4356 = vadd.f32 %v4323, 1e-05
        %v4357 = vrsqrt.pop %v4356
        %v4358 = vmul.f32 %v4357, %v4356
        %v4359 = vmul.f32 %v4358, %v4357
        %v4360 = vmul.f32 0.5, %v4359
        %v4361 = vsub.f32 1.5, %v4360
        %v4362 = vmul.f32 %v4357, %v4361
        %vm4363 = vweird.f32 %v4356
        %vm4364 = vweird.f32 %v4357
        %vm4365 = vmor %vm4363, %vm4364
        %v4366 = vsel %vm4365, %v4357, %v4362
        %v4367 = vmul.f32 %v4324, %v4366
        %v4368 = vmul.f32 %v4325, %v4366
        %v4369 = vmul.f32 %v4326, %v4366
        %v4370 = vmul.f32 %v4327, %v4366
        %v4371 = vmul.f32 %v4328, %v4366
        %v4372 = vmul.f32 %v4329, %v4366
        %v4373 = vmul.f32 %v4330, %v4366
        %v4374 = vmul.f32 %v4331, %v4366
        %v4375 = vmul.f32 %v4332, %v4366
        %v4376 = vmul.f32 %v4333, %v4366
        %v4377 = vmul.f32 %v4334, %v4366
        %v4378 = vmul.f32 %v4335, %v4366
        %v4379 = vmul.f32 %v4336, %v4366
        %v4380 = vmul.f32 %v4337, %v4366
        %v4381 = vmul.f32 %v4338, %v4366
        %v4382 = vmul.f32 %v4339, %v4366
        %v4383 = vmul.f32 %v4340, %v4366
        %v4384 = vmul.f32 %v4341, %v4366
        %v4385 = vmul.f32 %v4342, %v4366
        %v4386 = vmul.f32 %v4343, %v4366
        %v4387 = vmul.f32 %v4344, %v4366
        %v4388 = vmul.f32 %v4345, %v4366
        %v4389 = vmul.f32 %v4346, %v4366
        %v4390 = vmul.f32 %v4347, %v4366
        %v4391 = vmul.f32 %v4348, %v4366
        %v4392 = vmul.f32 %v4349, %v4366
        %v4393 = vmul.f32 %v4350, %v4366
        %v4394 = vmul.f32 %v4351, %v4366
        %v4395 = vmul.f32 %v4352, %v4366
        %v4396 = vmul.f32 %v4353, %v4366
        %v4397 = vmul.f32 %v4354, %v4366
        %v4398 = vmul.f32 %v4355, %v4366
        %v4399 = vld [vmem:[%s190] sm:$0xff]
        %v4400 = vld [vmem:[%s190 + $0x8] sm:$0xff]
        %v4401 = vld [vmem:[%s190 + $0x10] sm:$0xff]
        %v4402 = vld [vmem:[%s190 + $0x18] sm:$0xff]
        %v4403 = vld [vmem:[%s190 + $0x20] sm:$0xff]
        %v4404 = vld [vmem:[%s190 + $0x28] sm:$0xff]
        %v4405 = vld [vmem:[%s190 + $0x30] sm:$0xff]
        %v4406 = vld [vmem:[%s190 + $0x38] sm:$0xff]
        %v4407 = vld [vmem:[%s190 + $0x40] sm:$0xff]
        %v4408 = vld [vmem:[%s190 + $0x48] sm:$0xff]
        %v4409 = vld [vmem:[%s190 + $0x50] sm:$0xff]
        %v4410 = vld [vmem:[%s190 + $0x58] sm:$0xff]
        %v4411 = vld [vmem:[%s190 + $0x60] sm:$0xff]
        %v4412 = vld [vmem:[%s190 + $0x68] sm:$0xff]
        %v4413 = vld [vmem:[%s190 + $0x70] sm:$0xff]
        %v4414 = vld [vmem:[%s190 + $0x78] sm:$0xff]
        %v4415 = vld [vmem:[%s190 + $0x80] sm:$0xff]
        %v4416 = vld [vmem:[%s190 + $0x88] sm:$0xff]
        %v4417 = vld [vmem:[%s190 + $0x90] sm:$0xff]
        %v4418 = vld [vmem:[%s190 + $0x98] sm:$0xff]
        %v4419 = vld [vmem:[%s190 + $0xa0] sm:$0xff]
        %v4420 = vld [vmem:[%s190 + $0xa8] sm:$0xff]
        %v4421 = vld [vmem:[%s190 + $0xb0] sm:$0xff]
        %v4422 = vld [vmem:[%s190 + $0xb8] sm:$0xff]
        %v4423 = vld [vmem:[%s190 + $0xc0] sm:$0xff]
        %v4424 = vld [vmem:[%s190 + $0xc8] sm:$0xff]
        %v4425 = vld [vmem:[%s190 + $0xd0] sm:$0xff]
        %v4426 = vld [vmem:[%s190 + $0xd8] sm:$0xff]
        %v4427 = vld [vmem:[%s190 + $0xe0] sm:$0xff]
        %v4428 = vld [vmem:[%s190 + $0xe8] sm:$0xff]
        %v4429 = vld [vmem:[%s190 + $0xf0] sm:$0xff]
        %v4430 = vld [vmem:[%s190 + $0xf8] sm:$0xff]
        %v4431 = vadd.f32 %v4367, %v4399
        %v4432 = vadd.f32 %v4368, %v4400
        %v4433 = vadd.f32 %v4369, %v4401
        %v4434 = vadd.f32 %v4370, %v4402
        %v4435 = vadd.f32 %v4371, %v4403
        %v4436 = vadd.f32 %v4372, %v4404
        %v4437 = vadd.f32 %v4373, %v4405
        %v4438 = vadd.f32 %v4374, %v4406
        %v4439 = vadd.f32 %v4375, %v4407
        %v4440 = vadd.f32 %v4376, %v4408
        %v4441 = vadd.f32 %v4377, %v4409
        %v4442 = vadd.f32 %v4378, %v4410
        %v4443 = vadd.f32 %v4379, %v4411
        %v4444 = vadd.f32 %v4380, %v4412
        %v4445 = vadd.f32 %v4381, %v4413
        %v4446 = vadd.f32 %v4382, %v4414
        %v4447 = vadd.f32 %v4383, %v4415
        %v4448 = vadd.f32 %v4384, %v4416
        %v4449 = vadd.f32 %v4385, %v4417
        %v4450 = vadd.f32 %v4386, %v4418
        %v4451 = vadd.f32 %v4387, %v4419
        %v4452 = vadd.f32 %v4388, %v4420
        %v4453 = vadd.f32 %v4389, %v4421
        %v4454 = vadd.f32 %v4390, %v4422
        %v4455 = vadd.f32 %v4391, %v4423
        %v4456 = vadd.f32 %v4392, %v4424
        %v4457 = vadd.f32 %v4393, %v4425
        %v4458 = vadd.f32 %v4394, %v4426
        %v4459 = vadd.f32 %v4395, %v4427
        %v4460 = vadd.f32 %v4396, %v4428
        %v4461 = vadd.f32 %v4397, %v4429
        %v4462 = vadd.f32 %v4398, %v4430
        %4463 = vst [vmem:[%s223] sm:$0xff] %v4431
        %4464 = vst [vmem:[%s223 + $0x8] sm:$0xff] %v4432
        %4465 = vst [vmem:[%s223 + $0x10] sm:$0xff] %v4433
        %4466 = vst [vmem:[%s223 + $0x18] sm:$0xff] %v4434
        %4467 = vst [vmem:[%s223 + $0x20] sm:$0xff] %v4435
        %4468 = vst [vmem:[%s223 + $0x28] sm:$0xff] %v4436
        %4469 = vst [vmem:[%s223 + $0x30] sm:$0xff] %v4437
        %4470 = vst [vmem:[%s223 + $0x38] sm:$0xff] %v4438
        %4471 = vst [vmem:[%s223 + $0x40] sm:$0xff] %v4439
        %4472 = vst [vmem:[%s223 + $0x48] sm:$0xff] %v4440
        %4473 = vst [vmem:[%s223 + $0x50] sm:$0xff] %v4441
        %4474 = vst [vmem:[%s223 + $0x58] sm:$0xff] %v4442
        %4475 = vst [vmem:[%s223 + $0x60] sm:$0xff] %v4443
        %4476 = vst [vmem:[%s223 + $0x68] sm:$0xff] %v4444
        %4477 = vst [vmem:[%s223 + $0x70] sm:$0xff] %v4445
        %4478 = vst [vmem:[%s223 + $0x78] sm:$0xff] %v4446
        %4479 = vst [vmem:[%s223 + $0x80] sm:$0xff] %v4447
        %4480 = vst [vmem:[%s223 + $0x88] sm:$0xff] %v4448
        %4481 = vst [vmem:[%s223 + $0x90] sm:$0xff] %v4449
        %4482 = vst [vmem:[%s223 + $0x98] sm:$0xff] %v4450
        %4483 = vst [vmem:[%s223 + $0xa0] sm:$0xff] %v4451
        %4484 = vst [vmem:[%s223 + $0xa8] sm:$0xff] %v4452
        %4485 = vst [vmem:[%s223 + $0xb0] sm:$0xff] %v4453
        %4486 = vst [vmem:[%s223 + $0xb8] sm:$0xff] %v4454
        %4487 = vst [vmem:[%s223 + $0xc0] sm:$0xff] %v4455
        %4488 = vst [vmem:[%s223 + $0xc8] sm:$0xff] %v4456
        %4489 = vst [vmem:[%s223 + $0xd0] sm:$0xff] %v4457
        %4490 = vst [vmem:[%s223 + $0xd8] sm:$0xff] %v4458
        %4491 = vst [vmem:[%s223 + $0xe0] sm:$0xff] %v4459
        %4492 = vst [vmem:[%s223 + $0xe8] sm:$0xff] %v4460
        %4493 = vst [vmem:[%s223 + $0xf0] sm:$0xff] %v4461
        %4494 = vst [vmem:[%s223 + $0xf8] sm:$0xff] %v4462
        %s4495 = sand.u32 %s97, 1
        %s4496 = scalar_lea.sflag [#allocation5], %s4495
        %s4497 = sand.u32 %s97, 1
        %s4498 = smul.addr %s4497, 256
        %s4499 = scalar_lea.vmem [#allocation9], %s4498
        // Predicated region
        $region45: #{tpu_custom_call.1} parent=31 // pred_check
          %p4500 = pneg %p107
        $region46: #{tpu_custom_call.1} parent=31 // pred_check_branch
          %4502 = sbr.rel (%p4500) target = $region48
        $region47: #{tpu_custom_call.1} parent=31 // pred_region
          %4504 = vsyncadd %s4496, 0
          %s4505 = smul.addr %s21, 32
          %s4506 = smul.addr %s4505, 8
          %s4507 = scalar_lea.hbm %s3, %s4506
          %s4508 = sshll.u32 %s4499, 4
          %s4509 = int_to_ptr.vmem [resolvable:$true] %s4508
          %s4510 = sshll.u32 %s4507, 4
          %s4511 = int_to_ptr.hbm [resolvable:$true] %s4510
          %4516 = dma.vmem_to_hbm [thread:$0]  %s4509, 4096, %s4511, %s4496, 128, 128, 8
        $region48: #{tpu_custom_call.1} parent=31 // pred_fallthru
          _
      $region32: #{tpu_custom_call.1} parent=5 // pred_fallthru
        _
      %p4517 = scmp.le.s32.totalorder 2, %s16
      // Predicated region
      $region49: #{tpu_custom_call.1} parent=5 // pred_check
        %p4518 = pneg %p4517
      $region50: #{tpu_custom_call.1} parent=5 // pred_check_branch
        %4520 = sbr.rel (%p4518) target = $region52
      $region51: #{tpu_custom_call.1} parent=5 // pred_region
        %s4521 = ssub.s32 %s16, 2
        // Predicated region
        $region53: #{tpu_custom_call.1} parent=51 // pred_check
          %p4522 = pneg %p113
        $region54: #{tpu_custom_call.1} parent=51 // pred_check_branch
          %4524 = sbr.rel (%p4522) target = $region56
        $region55: #{tpu_custom_call.1} parent=51 // pred_region
          %s4525 = sand.u32 %s98, 1
          %s4526 = scalar_lea.sflag [#allocation5], %s4525
          %s4527 = sand.u32 %s98, 1
          %s4528 = smul.addr %s4527, 256
          %s4529 = scalar_lea.vmem [#allocation9], %s4528
          %4531 = dma.done %s4526, 4096
        $region56: #{tpu_custom_call.1} parent=51 // pred_fallthru
          _
      $region52: #{tpu_custom_call.1} parent=5 // pred_fallthru
        _
    $region6: #{tpu_custom_call.1} parent=1 // loop_footer
      %s20 = sadd.s32 1, %s16
    $region7: #{tpu_custom_call.1} parent=1 // loop_footer_branch
      %15 = sbr.rel target = $region3
    $region8: #{tpu_custom_call.1} parent=1 // loop_exit
      _
    %4532 = vsyncpa [#allocation4], 1
    %s4533 = scalar_lea.sflag [#allocation4], 1
    %4534 = vsyncpa %s4533, 1
    %4535 = vsyncpa [#allocation7], 1
    %4536 = vsyncpa [#allocation5], 1
    %s4537 = scalar_lea.sflag [#allocation5], 1
    %4538 = vsyncpa %s4537, 1

</llo_original>
